<compile_context>
chip_gen: v7x
topology: tpu7x:2x2x1
jax: 0.10.0
libtpu: 0.0.40
codegen_flags: <defaults>
</compile_context>

<pallas_src>
import functools

import jax
import jax.numpy as jnp
from jax.experimental import pallas as pl
from jax.experimental.pallas import tpu as pltpu

INPUT_SIZE = 16
HIDDEN_SIZE = 32
LAYERS = 2
DROP_RATE = 0.0
SEQ_LEN = 8
BATCH = 2
OUT_SIZE = INPUT_SIZE // 2

NGATES = 4
GATE_PAD = 128  # each gate padded to its own 128-lane (vreg-width) block


# ----------------------------------------------------------------------------
# Fused kernel: [layer-0 LSTM over T steps] -> [layer-1 LSTM] -> [Linear head]
# ----------------------------------------------------------------------------
def _fused_lstm_kernel(x_ref, *refs, num_layers, seq_len, batch):
    """refs layout:
         inputs : (w_ih_pad, w_hh_pad, b_pad) * num_layers, w_lin_pad, b_lin
         outputs: out (T*B, OUT_SIZE)
         scratch: one (T*B, GATE_PAD) VMEM buffer per layer (per-layer h_t's)
    """
    w_lin_ref = refs[3 * num_layers]
    b_lin_ref = refs[3 * num_layers + 1]
    out_ref = refs[3 * num_layers + 2]
    h_all_refs = refs[3 * num_layers + 3:]

    layer_inp = x_ref[...]                       # (T*B, D_in) f32, VMEM resident
    for layer in range(num_layers):
        w_ih = refs[3 * layer][...]              # (D_pad, 4*GATE_PAD)
        w_hh = refs[3 * layer + 1][...]          # (GATE_PAD, 4*GATE_PAD)
        b = refs[3 * layer + 2][...]             # (1, 4*GATE_PAD)
        h_all = h_all_refs[layer]                # (T*B, GATE_PAD) VMEM scratch

        # Hoisted input projection: one batched MXU op for the whole sequence.
        gx = jnp.dot(layer_inp, w_ih, preferred_element_type=jnp.float32) + b

        h = jnp.zeros((batch, GATE_PAD), jnp.float32)
        c = jnp.zeros((batch, GATE_PAD), jnp.float32)
        # Time recurrence, fully unrolled at trace time (seq_len is static).
        for t in range(seq_len):
            gates = gx[t * batch:(t + 1) * batch, :] + jnp.dot(
                h, w_hh, preferred_element_type=jnp.float32)
            # vreg-aligned 128-lane gate slices; PyTorch gate order [i, f, g, o]
            i_g = jax.nn.sigmoid(gates[:, 0 * GATE_PAD:1 * GATE_PAD])
            f_g = jax.nn.sigmoid(gates[:, 1 * GATE_PAD:2 * GATE_PAD])
            g_g = jnp.tanh(gates[:, 2 * GATE_PAD:3 * GATE_PAD])
            o_g = jax.nn.sigmoid(gates[:, 3 * GATE_PAD:4 * GATE_PAD])
            c = f_g * c + i_g * g_g
            h = o_g * jnp.tanh(c)
            h_all[t * batch:(t + 1) * batch, :] = h
        layer_inp = h_all[...]                   # (T*B, GATE_PAD)
        # Eval-mode inter-layer dropout (DROP_RATE=0.0) is identity.

    # Fused output projection (nn.Linear) over all time steps at once.
    out_ref[...] = (
        jnp.dot(layer_inp, w_lin_ref[...], preferred_element_type=jnp.float32)
        + b_lin_ref[...]
    ).astype(out_ref.dtype)


@jax.jit
def lstm_forward(kernel_params, x):
    """x: (T, B, INPUT_SIZE) -> (T, B, INPUT_SIZE // 2)."""
    T, B, D = x.shape
    x2d = x.reshape(T * B, D)
    num_layers = len(kernel_params["lstm"])

    args = [x2d]
    for p in kernel_params["lstm"]:
        args += [p["w_ih_pad"], p["w_hh_pad"], p["b_pad"]]
    args += [kernel_params["linear"]["w_pad"], kernel_params["linear"]["b"]]

    kernel = functools.partial(
        _fused_lstm_kernel, num_layers=num_layers, seq_len=T, batch=B)

    out2d = pl.pallas_call(
        kernel,
        out_shape=jax.ShapeDtypeStruct((T * B, OUT_SIZE), x.dtype),
        # No grid: single invocation, every operand is a full-array VMEM block.
        in_specs=[pl.BlockSpec(a.shape, lambda: (0, 0)) for a in args],
        out_specs=pl.BlockSpec((T * B, OUT_SIZE), lambda: (0, 0)),
        scratch_shapes=[pltpu.VMEM((T * B, GATE_PAD), jnp.float32)
                        for _ in range(num_layers)],
    )(*args)
    return out2d.reshape(T, B, OUT_SIZE)


# ----------------------------------------------------------------------------
# Parameter init (PyTorch-style uniform(-1/sqrt(H), 1/sqrt(H))) + padded layout
# ----------------------------------------------------------------------------
def _pad_gate_cols(w_t, rows_pad):
    """(d_in, 4H) -> (rows_pad, 4*GATE_PAD): gate g's H real cols at g*GATE_PAD."""
    d_in = w_t.shape[0]
    out = jnp.zeros((rows_pad, NGATES * GATE_PAD), jnp.float32)
    for g in range(NGATES):
        out = out.at[:d_in, g * GATE_PAD:g * GATE_PAD + HIDDEN_SIZE].set(
            w_t[:, g * HIDDEN_SIZE:(g + 1) * HIDDEN_SIZE])
    return out


def _pad_gate_bias(b):
    """(4H,) -> (1, 4*GATE_PAD) with gate g's bias at offset g*GATE_PAD."""
    out = jnp.zeros((1, NGATES * GATE_PAD), jnp.float32)
    for g in range(NGATES):
        out = out.at[0, g * GATE_PAD:g * GATE_PAD + HIDDEN_SIZE].set(
            b[g * HIDDEN_SIZE:(g + 1) * HIDDEN_SIZE])
    return out


def _pad_rows(w, rows_pad):
    out = jnp.zeros((rows_pad, w.shape[1]), w.dtype)
    return out.at[:w.shape[0], :].set(w)


def init_params(key):
    canon = {"lstm": [], "linear": {}}
    kern = {"lstm": [], "linear": {}}
    bound = 1.0 / jnp.sqrt(jnp.float32(HIDDEN_SIZE))
    for layer in range(LAYERS):
        d_in = INPUT_SIZE if layer == 0 else HIDDEN_SIZE
        key, k1, k2, k3, k4 = jax.random.split(key, 5)
        w_ih = jax.random.uniform(k1, (4 * HIDDEN_SIZE, d_in), jnp.float32,
                                  -bound, bound)
        w_hh = jax.random.uniform(k2, (4 * HIDDEN_SIZE, HIDDEN_SIZE),
                                  jnp.float32, -bound, bound)
        b_ih = jax.random.uniform(k3, (4 * HIDDEN_SIZE,), jnp.float32,
                                  -bound, bound)
        b_hh = jax.random.uniform(k4, (4 * HIDDEN_SIZE,), jnp.float32,
                                  -bound, bound)
        b = b_ih + b_hh
        canon["lstm"].append({"w_ih": w_ih, "w_hh": w_hh, "b": b})
        d_in_rows = d_in if layer == 0 else GATE_PAD  # deeper layers eat padded h
        kern["lstm"].append({
            "w_ih_pad": _pad_gate_cols(w_ih.T, d_in_rows),     # (D_pad, 512)
            "w_hh_pad": _pad_gate_cols(w_hh.T, GATE_PAD),      # (128, 512)
            "b_pad": _pad_gate_bias(b),                        # (1, 512)
        })
    key, k1, k2 = jax.random.split(key, 3)
    w = jax.random.uniform(k1, (OUT_SIZE, HIDDEN_SIZE), jnp.float32,
                           -bound, bound)
    bl = jax.random.uniform(k2, (OUT_SIZE,), jnp.float32, -bound, bound)
    canon["linear"] = {"w": w, "b": bl}
    kern["linear"] = {"w_pad": _pad_rows(w.T, GATE_PAD),       # (128, OUT)
                      "b": bl[None, :]}                        # (1, OUT)
    return {"canon": canon, "kernel": kern}


# ----------------------------------------------------------------------------
# Pure-JAX reference (canonical PyTorch layout) for correctness check
# ----------------------------------------------------------------------------
def lstm_forward_ref(canon_params, x):
    T, B, _ = x.shape
    H = HIDDEN_SIZE
    h_seq = x
    for lp in canon_params["lstm"]:
        w_ih, w_hh, b = lp["w_ih"], lp["w_hh"], lp["b"]
        h = jnp.zeros((B, H), jnp.float32)
        c = jnp.zeros((B, H), jnp.float32)
        outs = []
        for t in range(T):
            gates = h_seq[t] @ w_ih.T + h @ w_hh.T + b
            i_g = jax.nn.sigmoid(gates[:, 0 * H:1 * H])
            f_g = jax.nn.sigmoid(gates[:, 1 * H:2 * H])
            g_g = jnp.tanh(gates[:, 2 * H:3 * H])
            o_g = jax.nn.sigmoid(gates[:, 3 * H:4 * H])
            c = f_g * c + i_g * g_g
            h = o_g * jnp.tanh(c)
            outs.append(h)
        h_seq = jnp.stack(outs)
    return h_seq @ canon_params["linear"]["w"].T + canon_params["linear"]["b"]


if __name__ == "__main__":
    key = jax.random.PRNGKey(0)
    key, xkey = jax.random.split(key)
    x = jax.random.normal(xkey, (SEQ_LEN, BATCH, INPUT_SIZE), jnp.float32)
    params = init_params(key)

    out = lstm_forward(params["kernel"], x)
    out = jax.block_until_ready(out)
    assert out.shape == (SEQ_LEN, BATCH, OUT_SIZE), out.shape

    ref = lstm_forward_ref(params["canon"], x)
    max_err = float(jnp.max(jnp.abs(out - ref)))
    assert max_err < 5e-2, f"numerical mismatch vs reference: {max_err}"
    print("KERNEL_OK")
</pallas_src>

<mosaic_0001>
module attributes {stable_mosaic.version = 11 : i64} {
  func.func @_fused_lstm_kernel(%arg0: memref<16x16xf32, #tpu.memory_space<vmem>>, %arg1: memref<16x512xf32, #tpu.memory_space<vmem>>, %arg2: memref<128x512xf32, #tpu.memory_space<vmem>>, %arg3: memref<1x512xf32, #tpu.memory_space<vmem>>, %arg4: memref<128x512xf32, #tpu.memory_space<vmem>>, %arg5: memref<128x512xf32, #tpu.memory_space<vmem>>, %arg6: memref<1x512xf32, #tpu.memory_space<vmem>>, %arg7: memref<128x8xf32, #tpu.memory_space<vmem>>, %arg8: memref<1x8xf32, #tpu.memory_space<vmem>>, %arg9: memref<16x8xf32, #tpu.memory_space<vmem>>, %arg10: memref<16x128xf32, #tpu.memory_space<vmem>>, %arg11: memref<16x128xf32, #tpu.memory_space<vmem>>) attributes {dimension_semantics = [], scalar_prefetch = 0 : i64, scratch_operands = 2 : i64, tpu.core_type = #tpu.core_type<tc>} {
    %c0 = arith.constant 0 : index
    %c0_0 = arith.constant 0 : index
    %0 = vector.load %arg0[%c0, %c0_0] : memref<16x16xf32, #tpu.memory_space<vmem>>, vector<16x16xf32>
    %c0_1 = arith.constant 0 : index
    %c0_2 = arith.constant 0 : index
    %1 = vector.load %arg1[%c0_1, %c0_2] : memref<16x512xf32, #tpu.memory_space<vmem>>, vector<16x512xf32>
    %c0_3 = arith.constant 0 : index
    %c0_4 = arith.constant 0 : index
    %2 = vector.load %arg2[%c0_3, %c0_4] : memref<128x512xf32, #tpu.memory_space<vmem>>, vector<128x512xf32>
    %c0_5 = arith.constant 0 : index
    %c0_6 = arith.constant 0 : index
    %3 = vector.load %arg3[%c0_5, %c0_6] : memref<1x512xf32, #tpu.memory_space<vmem>>, vector<1x512xf32>
    %cst = arith.constant dense<0.000000e+00> : vector<16x512xf32>
    %4 = tpu.matmul %0, %1, %cst {dimension_numbers = #tpu.dot_dimension_numbers<[1], [0], [0], [1], [0, 0, 1, 1], [], []>} : vector<16x16xf32>, vector<16x512xf32>, vector<16x512xf32> -> vector<16x512xf32>
    %5 = vector.broadcast %3 : vector<1x512xf32> to vector<16x512xf32>
    %6 = arith.addf %4, %5 : vector<16x512xf32>
    %cst_7 = arith.constant 0.000000e+00 : f32
    %7 = vector.broadcast %cst_7 : f32 to vector<2x128xf32>
    %cst_8 = arith.constant 0.000000e+00 : f32
    %8 = vector.broadcast %cst_8 : f32 to vector<2x128xf32>
    %9 = vector.extract_strided_slice %6 {offsets = [0, 0], sizes = [2, 512], strides = [1, 1]} : vector<16x512xf32> to vector<2x512xf32>
    %cst_9 = arith.constant dense<0.000000e+00> : vector<2x512xf32>
    %10 = tpu.matmul %7, %2, %cst_9 {dimension_numbers = #tpu.dot_dimension_numbers<[1], [0], [0], [1], [0, 0, 1, 1], [], []>} : vector<2x128xf32>, vector<128x512xf32>, vector<2x512xf32> -> vector<2x512xf32>
    %11 = arith.addf %9, %10 : vector<2x512xf32>
    %12 = vector.extract_strided_slice %11 {offsets = [0, 0], sizes = [2, 128], strides = [1, 1]} : vector<2x512xf32> to vector<2x128xf32>
    %13 = arith.negf %12 : vector<2x128xf32>
    %14 = math.exp %13 : vector<2x128xf32>
    %cst_10 = arith.constant 1.000000e+00 : f32
    %15 = vector.broadcast %cst_10 : f32 to vector<2x128xf32>
    %16 = arith.addf %15, %14 : vector<2x128xf32>
    %17 = arith.divf %15, %16 : vector<2x128xf32>
    %18 = vector.extract_strided_slice %11 {offsets = [0, 128], sizes = [2, 128], strides = [1, 1]} : vector<2x512xf32> to vector<2x128xf32>
    %19 = arith.negf %18 : vector<2x128xf32>
    %20 = math.exp %19 : vector<2x128xf32>
    %cst_11 = arith.constant 1.000000e+00 : f32
    %21 = vector.broadcast %cst_11 : f32 to vector<2x128xf32>
    %22 = arith.addf %21, %20 : vector<2x128xf32>
    %23 = arith.divf %21, %22 : vector<2x128xf32>
    %24 = vector.extract_strided_slice %11 {offsets = [0, 256], sizes = [2, 128], strides = [1, 1]} : vector<2x512xf32> to vector<2x128xf32>
    %25 = math.tanh %24 : vector<2x128xf32>
    %26 = vector.extract_strided_slice %11 {offsets = [0, 384], sizes = [2, 128], strides = [1, 1]} : vector<2x512xf32> to vector<2x128xf32>
    %27 = arith.negf %26 : vector<2x128xf32>
    %28 = math.exp %27 : vector<2x128xf32>
    %cst_12 = arith.constant 1.000000e+00 : f32
    %29 = vector.broadcast %cst_12 : f32 to vector<2x128xf32>
    %30 = arith.addf %29, %28 : vector<2x128xf32>
    %31 = arith.divf %29, %30 : vector<2x128xf32>
    %32 = arith.mulf %23, %8 : vector<2x128xf32>
    %33 = arith.mulf %17, %25 : vector<2x128xf32>
    %34 = arith.addf %32, %33 : vector<2x128xf32>
    %35 = math.tanh %34 : vector<2x128xf32>
    %36 = arith.mulf %31, %35 : vector<2x128xf32>
    %c0_13 = arith.constant 0 : index
    %c0_14 = arith.constant 0 : index
    %37 = vector.load %arg10[%c0_13, %c0_14] : memref<16x128xf32, #tpu.memory_space<vmem>>, vector<2x128xf32>
    tpu.vector_store %arg10[%c0_13, %c0_14], %36 {strides = array<i32>} : memref<16x128xf32, #tpu.memory_space<vmem>>, vector<2x128xf32>,
    %38 = vector.extract_strided_slice %6 {offsets = [2, 0], sizes = [2, 512], strides = [1, 1]} : vector<16x512xf32> to vector<2x512xf32>
    %cst_15 = arith.constant dense<0.000000e+00> : vector<2x512xf32>
    %39 = tpu.matmul %36, %2, %cst_15 {dimension_numbers = #tpu.dot_dimension_numbers<[1], [0], [0], [1], [0, 0, 1, 1], [], []>} : vector<2x128xf32>, vector<128x512xf32>, vector<2x512xf32> -> vector<2x512xf32>
    %40 = arith.addf %38, %39 : vector<2x512xf32>
    %41 = vector.extract_strided_slice %40 {offsets = [0, 0], sizes = [2, 128], strides = [1, 1]} : vector<2x512xf32> to vector<2x128xf32>
    %42 = arith.negf %41 : vector<2x128xf32>
    %43 = math.exp %42 : vector<2x128xf32>
    %cst_16 = arith.constant 1.000000e+00 : f32
    %44 = vector.broadcast %cst_16 : f32 to vector<2x128xf32>
    %45 = arith.addf %44, %43 : vector<2x128xf32>
    %46 = arith.divf %44, %45 : vector<2x128xf32>
    %47 = vector.extract_strided_slice %40 {offsets = [0, 128], sizes = [2, 128], strides = [1, 1]} : vector<2x512xf32> to vector<2x128xf32>
    %48 = arith.negf %47 : vector<2x128xf32>
    %49 = math.exp %48 : vector<2x128xf32>
    %cst_17 = arith.constant 1.000000e+00 : f32
    %50 = vector.broadcast %cst_17 : f32 to vector<2x128xf32>
    %51 = arith.addf %50, %49 : vector<2x128xf32>
    %52 = arith.divf %50, %51 : vector<2x128xf32>
    %53 = vector.extract_strided_slice %40 {offsets = [0, 256], sizes = [2, 128], strides = [1, 1]} : vector<2x512xf32> to vector<2x128xf32>
    %54 = math.tanh %53 : vector<2x128xf32>
    %55 = vector.extract_strided_slice %40 {offsets = [0, 384], sizes = [2, 128], strides = [1, 1]} : vector<2x512xf32> to vector<2x128xf32>
    %56 = arith.negf %55 : vector<2x128xf32>
    %57 = math.exp %56 : vector<2x128xf32>
    %cst_18 = arith.constant 1.000000e+00 : f32
    %58 = vector.broadcast %cst_18 : f32 to vector<2x128xf32>
    %59 = arith.addf %58, %57 : vector<2x128xf32>
    %60 = arith.divf %58, %59 : vector<2x128xf32>
    %61 = arith.mulf %52, %34 : vector<2x128xf32>
    %62 = arith.mulf %46, %54 : vector<2x128xf32>
    %63 = arith.addf %61, %62 : vector<2x128xf32>
    %64 = math.tanh %63 : vector<2x128xf32>
    %65 = arith.mulf %60, %64 : vector<2x128xf32>
    %c2 = arith.constant 2 : index
    %c0_19 = arith.constant 0 : index
    %66 = vector.load %arg10[%c2, %c0_19] : memref<16x128xf32, #tpu.memory_space<vmem>>, vector<2x128xf32>
    tpu.vector_store %arg10[%c2, %c0_19], %65 {strides = array<i32>} : memref<16x128xf32, #tpu.memory_space<vmem>>, vector<2x128xf32>,
    %67 = vector.extract_strided_slice %6 {offsets = [4, 0], sizes = [2, 512], strides = [1, 1]} : vector<16x512xf32> to vector<2x512xf32>
    %cst_20 = arith.constant dense<0.000000e+00> : vector<2x512xf32>
    %68 = tpu.matmul %65, %2, %cst_20 {dimension_numbers = #tpu.dot_dimension_numbers<[1], [0], [0], [1], [0, 0, 1, 1], [], []>} : vector<2x128xf32>, vector<128x512xf32>, vector<2x512xf32> -> vector<2x512xf32>
    %69 = arith.addf %67, %68 : vector<2x512xf32>
    %70 = vector.extract_strided_slice %69 {offsets = [0, 0], sizes = [2, 128], strides = [1, 1]} : vector<2x512xf32> to vector<2x128xf32>
    %71 = arith.negf %70 : vector<2x128xf32>
    %72 = math.exp %71 : vector<2x128xf32>
    %cst_21 = arith.constant 1.000000e+00 : f32
    %73 = vector.broadcast %cst_21 : f32 to vector<2x128xf32>
    %74 = arith.addf %73, %72 : vector<2x128xf32>
    %75 = arith.divf %73, %74 : vector<2x128xf32>
    %76 = vector.extract_strided_slice %69 {offsets = [0, 128], sizes = [2, 128], strides = [1, 1]} : vector<2x512xf32> to vector<2x128xf32>
    %77 = arith.negf %76 : vector<2x128xf32>
    %78 = math.exp %77 : vector<2x128xf32>
    %cst_22 = arith.constant 1.000000e+00 : f32
    %79 = vector.broadcast %cst_22 : f32 to vector<2x128xf32>
    %80 = arith.addf %79, %78 : vector<2x128xf32>
    %81 = arith.divf %79, %80 : vector<2x128xf32>
    %82 = vector.extract_strided_slice %69 {offsets = [0, 256], sizes = [2, 128], strides = [1, 1]} : vector<2x512xf32> to vector<2x128xf32>
    %83 = math.tanh %82 : vector<2x128xf32>
    %84 = vector.extract_strided_slice %69 {offsets = [0, 384], sizes = [2, 128], strides = [1, 1]} : vector<2x512xf32> to vector<2x128xf32>
    %85 = arith.negf %84 : vector<2x128xf32>
    %86 = math.exp %85 : vector<2x128xf32>
    %cst_23 = arith.constant 1.000000e+00 : f32
    %87 = vector.broadcast %cst_23 : f32 to vector<2x128xf32>
    %88 = arith.addf %87, %86 : vector<2x128xf32>
    %89 = arith.divf %87, %88 : vector<2x128xf32>
    %90 = arith.mulf %81, %63 : vector<2x128xf32>
    %91 = arith.mulf %75, %83 : vector<2x128xf32>
    %92 = arith.addf %90, %91 : vector<2x128xf32>
    %93 = math.tanh %92 : vector<2x128xf32>
    %94 = arith.mulf %89, %93 : vector<2x128xf32>
    %c4 = arith.constant 4 : index
    %c0_24 = arith.constant 0 : index
    %95 = vector.load %arg10[%c4, %c0_24] : memref<16x128xf32, #tpu.memory_space<vmem>>, vector<2x128xf32>
    tpu.vector_store %arg10[%c4, %c0_24], %94 {strides = array<i32>} : memref<16x128xf32, #tpu.memory_space<vmem>>, vector<2x128xf32>,
    %96 = vector.extract_strided_slice %6 {offsets = [6, 0], sizes = [2, 512], strides = [1, 1]} : vector<16x512xf32> to vector<2x512xf32>
    %cst_25 = arith.constant dense<0.000000e+00> : vector<2x512xf32>
    %97 = tpu.matmul %94, %2, %cst_25 {dimension_numbers = #tpu.dot_dimension_numbers<[1], [0], [0], [1], [0, 0, 1, 1], [], []>} : vector<2x128xf32>, vector<128x512xf32>, vector<2x512xf32> -> vector<2x512xf32>
    %98 = arith.addf %96, %97 : vector<2x512xf32>
    %99 = vector.extract_strided_slice %98 {offsets = [0, 0], sizes = [2, 128], strides = [1, 1]} : vector<2x512xf32> to vector<2x128xf32>
    %100 = arith.negf %99 : vector<2x128xf32>
    %101 = math.exp %100 : vector<2x128xf32>
    %cst_26 = arith.constant 1.000000e+00 : f32
    %102 = vector.broadcast %cst_26 : f32 to vector<2x128xf32>
    %103 = arith.addf %102, %101 : vector<2x128xf32>
    %104 = arith.divf %102, %103 : vector<2x128xf32>
    %105 = vector.extract_strided_slice %98 {offsets = [0, 128], sizes = [2, 128], strides = [1, 1]} : vector<2x512xf32> to vector<2x128xf32>
    %106 = arith.negf %105 : vector<2x128xf32>
    %107 = math.exp %106 : vector<2x128xf32>
    %cst_27 = arith.constant 1.000000e+00 : f32
    %108 = vector.broadcast %cst_27 : f32 to vector<2x128xf32>
    %109 = arith.addf %108, %107 : vector<2x128xf32>
    %110 = arith.divf %108, %109 : vector<2x128xf32>
    %111 = vector.extract_strided_slice %98 {offsets = [0, 256], sizes = [2, 128], strides = [1, 1]} : vector<2x512xf32> to vector<2x128xf32>
    %112 = math.tanh %111 : vector<2x128xf32>
    %113 = vector.extract_strided_slice %98 {offsets = [0, 384], sizes = [2, 128], strides = [1, 1]} : vector<2x512xf32> to vector<2x128xf32>
    %114 = arith.negf %113 : vector<2x128xf32>
    %115 = math.exp %114 : vector<2x128xf32>
    %cst_28 = arith.constant 1.000000e+00 : f32
    %116 = vector.broadcast %cst_28 : f32 to vector<2x128xf32>
    %117 = arith.addf %116, %115 : vector<2x128xf32>
    %118 = arith.divf %116, %117 : vector<2x128xf32>
    %119 = arith.mulf %110, %92 : vector<2x128xf32>
    %120 = arith.mulf %104, %112 : vector<2x128xf32>
    %121 = arith.addf %119, %120 : vector<2x128xf32>
    %122 = math.tanh %121 : vector<2x128xf32>
    %123 = arith.mulf %118, %122 : vector<2x128xf32>
    %c6 = arith.constant 6 : index
    %c0_29 = arith.constant 0 : index
    %124 = vector.load %arg10[%c6, %c0_29] : memref<16x128xf32, #tpu.memory_space<vmem>>, vector<2x128xf32>
    tpu.vector_store %arg10[%c6, %c0_29], %123 {strides = array<i32>} : memref<16x128xf32, #tpu.memory_space<vmem>>, vector<2x128xf32>,
    %125 = vector.extract_strided_slice %6 {offsets = [8, 0], sizes = [2, 512], strides = [1, 1]} : vector<16x512xf32> to vector<2x512xf32>
    %cst_30 = arith.constant dense<0.000000e+00> : vector<2x512xf32>
    %126 = tpu.matmul %123, %2, %cst_30 {dimension_numbers = #tpu.dot_dimension_numbers<[1], [0], [0], [1], [0, 0, 1, 1], [], []>} : vector<2x128xf32>, vector<128x512xf32>, vector<2x512xf32> -> vector<2x512xf32>
    %127 = arith.addf %125, %126 : vector<2x512xf32>
    %128 = vector.extract_strided_slice %127 {offsets = [0, 0], sizes = [2, 128], strides = [1, 1]} : vector<2x512xf32> to vector<2x128xf32>
    %129 = arith.negf %128 : vector<2x128xf32>
    %130 = math.exp %129 : vector<2x128xf32>
    %cst_31 = arith.constant 1.000000e+00 : f32
    %131 = vector.broadcast %cst_31 : f32 to vector<2x128xf32>
    %132 = arith.addf %131, %130 : vector<2x128xf32>
    %133 = arith.divf %131, %132 : vector<2x128xf32>
    %134 = vector.extract_strided_slice %127 {offsets = [0, 128], sizes = [2, 128], strides = [1, 1]} : vector<2x512xf32> to vector<2x128xf32>
    %135 = arith.negf %134 : vector<2x128xf32>
    %136 = math.exp %135 : vector<2x128xf32>
    %cst_32 = arith.constant 1.000000e+00 : f32
    %137 = vector.broadcast %cst_32 : f32 to vector<2x128xf32>
    %138 = arith.addf %137, %136 : vector<2x128xf32>
    %139 = arith.divf %137, %138 : vector<2x128xf32>
    %140 = vector.extract_strided_slice %127 {offsets = [0, 256], sizes = [2, 128], strides = [1, 1]} : vector<2x512xf32> to vector<2x128xf32>
    %141 = math.tanh %140 : vector<2x128xf32>
    %142 = vector.extract_strided_slice %127 {offsets = [0, 384], sizes = [2, 128], strides = [1, 1]} : vector<2x512xf32> to vector<2x128xf32>
    %143 = arith.negf %142 : vector<2x128xf32>
    %144 = math.exp %143 : vector<2x128xf32>
    %cst_33 = arith.constant 1.000000e+00 : f32
    %145 = vector.broadcast %cst_33 : f32 to vector<2x128xf32>
    %146 = arith.addf %145, %144 : vector<2x128xf32>
    %147 = arith.divf %145, %146 : vector<2x128xf32>
    %148 = arith.mulf %139, %121 : vector<2x128xf32>
    %149 = arith.mulf %133, %141 : vector<2x128xf32>
    %150 = arith.addf %148, %149 : vector<2x128xf32>
    %151 = math.tanh %150 : vector<2x128xf32>
    %152 = arith.mulf %147, %151 : vector<2x128xf32>
    %c8 = arith.constant 8 : index
    %c0_34 = arith.constant 0 : index
    %153 = vector.load %arg10[%c8, %c0_34] : memref<16x128xf32, #tpu.memory_space<vmem>>, vector<2x128xf32>
    tpu.vector_store %arg10[%c8, %c0_34], %152 {strides = array<i32>} : memref<16x128xf32, #tpu.memory_space<vmem>>, vector<2x128xf32>,
    %154 = vector.extract_strided_slice %6 {offsets = [10, 0], sizes = [2, 512], strides = [1, 1]} : vector<16x512xf32> to vector<2x512xf32>
    %cst_35 = arith.constant dense<0.000000e+00> : vector<2x512xf32>
    %155 = tpu.matmul %152, %2, %cst_35 {dimension_numbers = #tpu.dot_dimension_numbers<[1], [0], [0], [1], [0, 0, 1, 1], [], []>} : vector<2x128xf32>, vector<128x512xf32>, vector<2x512xf32> -> vector<2x512xf32>
    %156 = arith.addf %154, %155 : vector<2x512xf32>
    %157 = vector.extract_strided_slice %156 {offsets = [0, 0], sizes = [2, 128], strides = [1, 1]} : vector<2x512xf32> to vector<2x128xf32>
    %158 = arith.negf %157 : vector<2x128xf32>
    %159 = math.exp %158 : vector<2x128xf32>
    %cst_36 = arith.constant 1.000000e+00 : f32
    %160 = vector.broadcast %cst_36 : f32 to vector<2x128xf32>
    %161 = arith.addf %160, %159 : vector<2x128xf32>
    %162 = arith.divf %160, %161 : vector<2x128xf32>
    %163 = vector.extract_strided_slice %156 {offsets = [0, 128], sizes = [2, 128], strides = [1, 1]} : vector<2x512xf32> to vector<2x128xf32>
    %164 = arith.negf %163 : vector<2x128xf32>
    %165 = math.exp %164 : vector<2x128xf32>
    %cst_37 = arith.constant 1.000000e+00 : f32
    %166 = vector.broadcast %cst_37 : f32 to vector<2x128xf32>
    %167 = arith.addf %166, %165 : vector<2x128xf32>
    %168 = arith.divf %166, %167 : vector<2x128xf32>
    %169 = vector.extract_strided_slice %156 {offsets = [0, 256], sizes = [2, 128], strides = [1, 1]} : vector<2x512xf32> to vector<2x128xf32>
    %170 = math.tanh %169 : vector<2x128xf32>
    %171 = vector.extract_strided_slice %156 {offsets = [0, 384], sizes = [2, 128], strides = [1, 1]} : vector<2x512xf32> to vector<2x128xf32>
    %172 = arith.negf %171 : vector<2x128xf32>
    %173 = math.exp %172 : vector<2x128xf32>
    %cst_38 = arith.constant 1.000000e+00 : f32
    %174 = vector.broadcast %cst_38 : f32 to vector<2x128xf32>
    %175 = arith.addf %174, %173 : vector<2x128xf32>
    %176 = arith.divf %174, %175 : vector<2x128xf32>
    %177 = arith.mulf %168, %150 : vector<2x128xf32>
    %178 = arith.mulf %162, %170 : vector<2x128xf32>
    %179 = arith.addf %177, %178 : vector<2x128xf32>
    %180 = math.tanh %179 : vector<2x128xf32>
    %181 = arith.mulf %176, %180 : vector<2x128xf32>
    %c10 = arith.constant 10 : index
    %c0_39 = arith.constant 0 : index
    %182 = vector.load %arg10[%c10, %c0_39] : memref<16x128xf32, #tpu.memory_space<vmem>>, vector<2x128xf32>
    tpu.vector_store %arg10[%c10, %c0_39], %181 {strides = array<i32>} : memref<16x128xf32, #tpu.memory_space<vmem>>, vector<2x128xf32>,
    %183 = vector.extract_strided_slice %6 {offsets = [12, 0], sizes = [2, 512], strides = [1, 1]} : vector<16x512xf32> to vector<2x512xf32>
    %cst_40 = arith.constant dense<0.000000e+00> : vector<2x512xf32>
    %184 = tpu.matmul %181, %2, %cst_40 {dimension_numbers = #tpu.dot_dimension_numbers<[1], [0], [0], [1], [0, 0, 1, 1], [], []>} : vector<2x128xf32>, vector<128x512xf32>, vector<2x512xf32> -> vector<2x512xf32>
    %185 = arith.addf %183, %184 : vector<2x512xf32>
    %186 = vector.extract_strided_slice %185 {offsets = [0, 0], sizes = [2, 128], strides = [1, 1]} : vector<2x512xf32> to vector<2x128xf32>
    %187 = arith.negf %186 : vector<2x128xf32>
    %188 = math.exp %187 : vector<2x128xf32>
    %cst_41 = arith.constant 1.000000e+00 : f32
    %189 = vector.broadcast %cst_41 : f32 to vector<2x128xf32>
    %190 = arith.addf %189, %188 : vector<2x128xf32>
    %191 = arith.divf %189, %190 : vector<2x128xf32>
    %192 = vector.extract_strided_slice %185 {offsets = [0, 128], sizes = [2, 128], strides = [1, 1]} : vector<2x512xf32> to vector<2x128xf32>
    %193 = arith.negf %192 : vector<2x128xf32>
    %194 = math.exp %193 : vector<2x128xf32>
    %cst_42 = arith.constant 1.000000e+00 : f32
    %195 = vector.broadcast %cst_42 : f32 to vector<2x128xf32>
    %196 = arith.addf %195, %194 : vector<2x128xf32>
    %197 = arith.divf %195, %196 : vector<2x128xf32>
    %198 = vector.extract_strided_slice %185 {offsets = [0, 256], sizes = [2, 128], strides = [1, 1]} : vector<2x512xf32> to vector<2x128xf32>
    %199 = math.tanh %198 : vector<2x128xf32>
    %200 = vector.extract_strided_slice %185 {offsets = [0, 384], sizes = [2, 128], strides = [1, 1]} : vector<2x512xf32> to vector<2x128xf32>
    %201 = arith.negf %200 : vector<2x128xf32>
    %202 = math.exp %201 : vector<2x128xf32>
    %cst_43 = arith.constant 1.000000e+00 : f32
    %203 = vector.broadcast %cst_43 : f32 to vector<2x128xf32>
    %204 = arith.addf %203, %202 : vector<2x128xf32>
    %205 = arith.divf %203, %204 : vector<2x128xf32>
    %206 = arith.mulf %197, %179 : vector<2x128xf32>
    %207 = arith.mulf %191, %199 : vector<2x128xf32>
    %208 = arith.addf %206, %207 : vector<2x128xf32>
    %209 = math.tanh %208 : vector<2x128xf32>
    %210 = arith.mulf %205, %209 : vector<2x128xf32>
    %c12 = arith.constant 12 : index
    %c0_44 = arith.constant 0 : index
    %211 = vector.load %arg10[%c12, %c0_44] : memref<16x128xf32, #tpu.memory_space<vmem>>, vector<2x128xf32>
    tpu.vector_store %arg10[%c12, %c0_44], %210 {strides = array<i32>} : memref<16x128xf32, #tpu.memory_space<vmem>>, vector<2x128xf32>,
    %212 = vector.extract_strided_slice %6 {offsets = [14, 0], sizes = [2, 512], strides = [1, 1]} : vector<16x512xf32> to vector<2x512xf32>
    %cst_45 = arith.constant dense<0.000000e+00> : vector<2x512xf32>
    %213 = tpu.matmul %210, %2, %cst_45 {dimension_numbers = #tpu.dot_dimension_numbers<[1], [0], [0], [1], [0, 0, 1, 1], [], []>} : vector<2x128xf32>, vector<128x512xf32>, vector<2x512xf32> -> vector<2x512xf32>
    %214 = arith.addf %212, %213 : vector<2x512xf32>
    %215 = vector.extract_strided_slice %214 {offsets = [0, 0], sizes = [2, 128], strides = [1, 1]} : vector<2x512xf32> to vector<2x128xf32>
    %216 = arith.negf %215 : vector<2x128xf32>
    %217 = math.exp %216 : vector<2x128xf32>
    %cst_46 = arith.constant 1.000000e+00 : f32
    %218 = vector.broadcast %cst_46 : f32 to vector<2x128xf32>
    %219 = arith.addf %218, %217 : vector<2x128xf32>
    %220 = arith.divf %218, %219 : vector<2x128xf32>
    %221 = vector.extract_strided_slice %214 {offsets = [0, 128], sizes = [2, 128], strides = [1, 1]} : vector<2x512xf32> to vector<2x128xf32>
    %222 = arith.negf %221 : vector<2x128xf32>
    %223 = math.exp %222 : vector<2x128xf32>
    %cst_47 = arith.constant 1.000000e+00 : f32
    %224 = vector.broadcast %cst_47 : f32 to vector<2x128xf32>
    %225 = arith.addf %224, %223 : vector<2x128xf32>
    %226 = arith.divf %224, %225 : vector<2x128xf32>
    %227 = vector.extract_strided_slice %214 {offsets = [0, 256], sizes = [2, 128], strides = [1, 1]} : vector<2x512xf32> to vector<2x128xf32>
    %228 = math.tanh %227 : vector<2x128xf32>
    %229 = vector.extract_strided_slice %214 {offsets = [0, 384], sizes = [2, 128], strides = [1, 1]} : vector<2x512xf32> to vector<2x128xf32>
    %230 = arith.negf %229 : vector<2x128xf32>
    %231 = math.exp %230 : vector<2x128xf32>
    %cst_48 = arith.constant 1.000000e+00 : f32
    %232 = vector.broadcast %cst_48 : f32 to vector<2x128xf32>
    %233 = arith.addf %232, %231 : vector<2x128xf32>
    %234 = arith.divf %232, %233 : vector<2x128xf32>
    %235 = arith.mulf %226, %208 : vector<2x128xf32>
    %236 = arith.mulf %220, %228 : vector<2x128xf32>
    %237 = arith.addf %235, %236 : vector<2x128xf32>
    %238 = math.tanh %237 : vector<2x128xf32>
    %239 = arith.mulf %234, %238 : vector<2x128xf32>
    %c14 = arith.constant 14 : index
    %c0_49 = arith.constant 0 : index
    %240 = vector.load %arg10[%c14, %c0_49] : memref<16x128xf32, #tpu.memory_space<vmem>>, vector<2x128xf32>
    tpu.vector_store %arg10[%c14, %c0_49], %239 {strides = array<i32>} : memref<16x128xf32, #tpu.memory_space<vmem>>, vector<2x128xf32>,
    %c0_50 = arith.constant 0 : index
    %c0_51 = arith.constant 0 : index
    %241 = vector.load %arg10[%c0_50, %c0_51] : memref<16x128xf32, #tpu.memory_space<vmem>>, vector<16x128xf32>
    %c0_52 = arith.constant 0 : index
    %c0_53 = arith.constant 0 : index
    %242 = vector.load %arg4[%c0_52, %c0_53] : memref<128x512xf32, #tpu.memory_space<vmem>>, vector<128x512xf32>
    %c0_54 = arith.constant 0 : index
    %c0_55 = arith.constant 0 : index
    %243 = vector.load %arg5[%c0_54, %c0_55] : memref<128x512xf32, #tpu.memory_space<vmem>>, vector<128x512xf32>
    %c0_56 = arith.constant 0 : index
    %c0_57 = arith.constant 0 : index
    %244 = vector.load %arg6[%c0_56, %c0_57] : memref<1x512xf32, #tpu.memory_space<vmem>>, vector<1x512xf32>
    %cst_58 = arith.constant dense<0.000000e+00> : vector<16x512xf32>
    %245 = tpu.matmul %241, %242, %cst_58 {dimension_numbers = #tpu.dot_dimension_numbers<[1], [0], [0], [1], [0, 0, 1, 1], [], []>} : vector<16x128xf32>, vector<128x512xf32>, vector<16x512xf32> -> vector<16x512xf32>
    %246 = vector.broadcast %244 : vector<1x512xf32> to vector<16x512xf32>
    %247 = arith.addf %245, %246 : vector<16x512xf32>
    %cst_59 = arith.constant 0.000000e+00 : f32
    %248 = vector.broadcast %cst_59 : f32 to vector<2x128xf32>
    %cst_60 = arith.constant 0.000000e+00 : f32
    %249 = vector.broadcast %cst_60 : f32 to vector<2x128xf32>
    %250 = vector.extract_strided_slice %247 {offsets = [0, 0], sizes = [2, 512], strides = [1, 1]} : vector<16x512xf32> to vector<2x512xf32>
    %cst_61 = arith.constant dense<0.000000e+00> : vector<2x512xf32>
    %251 = tpu.matmul %248, %243, %cst_61 {dimension_numbers = #tpu.dot_dimension_numbers<[1], [0], [0], [1], [0, 0, 1, 1], [], []>} : vector<2x128xf32>, vector<128x512xf32>, vector<2x512xf32> -> vector<2x512xf32>
    %252 = arith.addf %250, %251 : vector<2x512xf32>
    %253 = vector.extract_strided_slice %252 {offsets = [0, 0], sizes = [2, 128], strides = [1, 1]} : vector<2x512xf32> to vector<2x128xf32>
    %254 = arith.negf %253 : vector<2x128xf32>
    %255 = math.exp %254 : vector<2x128xf32>
    %cst_62 = arith.constant 1.000000e+00 : f32
    %256 = vector.broadcast %cst_62 : f32 to vector<2x128xf32>
    %257 = arith.addf %256, %255 : vector<2x128xf32>
    %258 = arith.divf %256, %257 : vector<2x128xf32>
    %259 = vector.extract_strided_slice %252 {offsets = [0, 128], sizes = [2, 128], strides = [1, 1]} : vector<2x512xf32> to vector<2x128xf32>
    %260 = arith.negf %259 : vector<2x128xf32>
    %261 = math.exp %260 : vector<2x128xf32>
    %cst_63 = arith.constant 1.000000e+00 : f32
    %262 = vector.broadcast %cst_63 : f32 to vector<2x128xf32>
    %263 = arith.addf %262, %261 : vector<2x128xf32>
    %264 = arith.divf %262, %263 : vector<2x128xf32>
    %265 = vector.extract_strided_slice %252 {offsets = [0, 256], sizes = [2, 128], strides = [1, 1]} : vector<2x512xf32> to vector<2x128xf32>
    %266 = math.tanh %265 : vector<2x128xf32>
    %267 = vector.extract_strided_slice %252 {offsets = [0, 384], sizes = [2, 128], strides = [1, 1]} : vector<2x512xf32> to vector<2x128xf32>
    %268 = arith.negf %267 : vector<2x128xf32>
    %269 = math.exp %268 : vector<2x128xf32>
    %cst_64 = arith.constant 1.000000e+00 : f32
    %270 = vector.broadcast %cst_64 : f32 to vector<2x128xf32>
    %271 = arith.addf %270, %269 : vector<2x128xf32>
    %272 = arith.divf %270, %271 : vector<2x128xf32>
    %273 = arith.mulf %264, %249 : vector<2x128xf32>
    %274 = arith.mulf %258, %266 : vector<2x128xf32>
    %275 = arith.addf %273, %274 : vector<2x128xf32>
    %276 = math.tanh %275 : vector<2x128xf32>
    %277 = arith.mulf %272, %276 : vector<2x128xf32>
    %c0_65 = arith.constant 0 : index
    %c0_66 = arith.constant 0 : index
    %278 = vector.load %arg11[%c0_65, %c0_66] : memref<16x128xf32, #tpu.memory_space<vmem>>, vector<2x128xf32>
    tpu.vector_store %arg11[%c0_65, %c0_66], %277 {strides = array<i32>} : memref<16x128xf32, #tpu.memory_space<vmem>>, vector<2x128xf32>,
    %279 = vector.extract_strided_slice %247 {offsets = [2, 0], sizes = [2, 512], strides = [1, 1]} : vector<16x512xf32> to vector<2x512xf32>
    %cst_67 = arith.constant dense<0.000000e+00> : vector<2x512xf32>
    %280 = tpu.matmul %277, %243, %cst_67 {dimension_numbers = #tpu.dot_dimension_numbers<[1], [0], [0], [1], [0, 0, 1, 1], [], []>} : vector<2x128xf32>, vector<128x512xf32>, vector<2x512xf32> -> vector<2x512xf32>
    %281 = arith.addf %279, %280 : vector<2x512xf32>
    %282 = vector.extract_strided_slice %281 {offsets = [0, 0], sizes = [2, 128], strides = [1, 1]} : vector<2x512xf32> to vector<2x128xf32>
    %283 = arith.negf %282 : vector<2x128xf32>
    %284 = math.exp %283 : vector<2x128xf32>
    %cst_68 = arith.constant 1.000000e+00 : f32
    %285 = vector.broadcast %cst_68 : f32 to vector<2x128xf32>
    %286 = arith.addf %285, %284 : vector<2x128xf32>
    %287 = arith.divf %285, %286 : vector<2x128xf32>
    %288 = vector.extract_strided_slice %281 {offsets = [0, 128], sizes = [2, 128], strides = [1, 1]} : vector<2x512xf32> to vector<2x128xf32>
    %289 = arith.negf %288 : vector<2x128xf32>
    %290 = math.exp %289 : vector<2x128xf32>
    %cst_69 = arith.constant 1.000000e+00 : f32
    %291 = vector.broadcast %cst_69 : f32 to vector<2x128xf32>
    %292 = arith.addf %291, %290 : vector<2x128xf32>
    %293 = arith.divf %291, %292 : vector<2x128xf32>
    %294 = vector.extract_strided_slice %281 {offsets = [0, 256], sizes = [2, 128], strides = [1, 1]} : vector<2x512xf32> to vector<2x128xf32>
    %295 = math.tanh %294 : vector<2x128xf32>
    %296 = vector.extract_strided_slice %281 {offsets = [0, 384], sizes = [2, 128], strides = [1, 1]} : vector<2x512xf32> to vector<2x128xf32>
    %297 = arith.negf %296 : vector<2x128xf32>
    %298 = math.exp %297 : vector<2x128xf32>
    %cst_70 = arith.constant 1.000000e+00 : f32
    %299 = vector.broadcast %cst_70 : f32 to vector<2x128xf32>
    %300 = arith.addf %299, %298 : vector<2x128xf32>
    %301 = arith.divf %299, %300 : vector<2x128xf32>
    %302 = arith.mulf %293, %275 : vector<2x128xf32>
    %303 = arith.mulf %287, %295 : vector<2x128xf32>
    %304 = arith.addf %302, %303 : vector<2x128xf32>
    %305 = math.tanh %304 : vector<2x128xf32>
    %306 = arith.mulf %301, %305 : vector<2x128xf32>
    %c2_71 = arith.constant 2 : index
    %c0_72 = arith.constant 0 : index
    %307 = vector.load %arg11[%c2_71, %c0_72] : memref<16x128xf32, #tpu.memory_space<vmem>>, vector<2x128xf32>
    tpu.vector_store %arg11[%c2_71, %c0_72], %306 {strides = array<i32>} : memref<16x128xf32, #tpu.memory_space<vmem>>, vector<2x128xf32>,
    %308 = vector.extract_strided_slice %247 {offsets = [4, 0], sizes = [2, 512], strides = [1, 1]} : vector<16x512xf32> to vector<2x512xf32>
    %cst_73 = arith.constant dense<0.000000e+00> : vector<2x512xf32>
    %309 = tpu.matmul %306, %243, %cst_73 {dimension_numbers = #tpu.dot_dimension_numbers<[1], [0], [0], [1], [0, 0, 1, 1], [], []>} : vector<2x128xf32>, vector<128x512xf32>, vector<2x512xf32> -> vector<2x512xf32>
    %310 = arith.addf %308, %309 : vector<2x512xf32>
    %311 = vector.extract_strided_slice %310 {offsets = [0, 0], sizes = [2, 128], strides = [1, 1]} : vector<2x512xf32> to vector<2x128xf32>
    %312 = arith.negf %311 : vector<2x128xf32>
    %313 = math.exp %312 : vector<2x128xf32>
    %cst_74 = arith.constant 1.000000e+00 : f32
    %314 = vector.broadcast %cst_74 : f32 to vector<2x128xf32>
    %315 = arith.addf %314, %313 : vector<2x128xf32>
    %316 = arith.divf %314, %315 : vector<2x128xf32>
    %317 = vector.extract_strided_slice %310 {offsets = [0, 128], sizes = [2, 128], strides = [1, 1]} : vector<2x512xf32> to vector<2x128xf32>
    %318 = arith.negf %317 : vector<2x128xf32>
    %319 = math.exp %318 : vector<2x128xf32>
    %cst_75 = arith.constant 1.000000e+00 : f32
    %320 = vector.broadcast %cst_75 : f32 to vector<2x128xf32>
    %321 = arith.addf %320, %319 : vector<2x128xf32>
    %322 = arith.divf %320, %321 : vector<2x128xf32>
    %323 = vector.extract_strided_slice %310 {offsets = [0, 256], sizes = [2, 128], strides = [1, 1]} : vector<2x512xf32> to vector<2x128xf32>
    %324 = math.tanh %323 : vector<2x128xf32>
    %325 = vector.extract_strided_slice %310 {offsets = [0, 384], sizes = [2, 128], strides = [1, 1]} : vector<2x512xf32> to vector<2x128xf32>
    %326 = arith.negf %325 : vector<2x128xf32>
    %327 = math.exp %326 : vector<2x128xf32>
    %cst_76 = arith.constant 1.000000e+00 : f32
    %328 = vector.broadcast %cst_76 : f32 to vector<2x128xf32>
    %329 = arith.addf %328, %327 : vector<2x128xf32>
    %330 = arith.divf %328, %329 : vector<2x128xf32>
    %331 = arith.mulf %322, %304 : vector<2x128xf32>
    %332 = arith.mulf %316, %324 : vector<2x128xf32>
    %333 = arith.addf %331, %332 : vector<2x128xf32>
    %334 = math.tanh %333 : vector<2x128xf32>
    %335 = arith.mulf %330, %334 : vector<2x128xf32>
    %c4_77 = arith.constant 4 : index
    %c0_78 = arith.constant 0 : index
    %336 = vector.load %arg11[%c4_77, %c0_78] : memref<16x128xf32, #tpu.memory_space<vmem>>, vector<2x128xf32>
    tpu.vector_store %arg11[%c4_77, %c0_78], %335 {strides = array<i32>} : memref<16x128xf32, #tpu.memory_space<vmem>>, vector<2x128xf32>,
    %337 = vector.extract_strided_slice %247 {offsets = [6, 0], sizes = [2, 512], strides = [1, 1]} : vector<16x512xf32> to vector<2x512xf32>
    %cst_79 = arith.constant dense<0.000000e+00> : vector<2x512xf32>
    %338 = tpu.matmul %335, %243, %cst_79 {dimension_numbers = #tpu.dot_dimension_numbers<[1], [0], [0], [1], [0, 0, 1, 1], [], []>} : vector<2x128xf32>, vector<128x512xf32>, vector<2x512xf32> -> vector<2x512xf32>
    %339 = arith.addf %337, %338 : vector<2x512xf32>
    %340 = vector.extract_strided_slice %339 {offsets = [0, 0], sizes = [2, 128], strides = [1, 1]} : vector<2x512xf32> to vector<2x128xf32>
    %341 = arith.negf %340 : vector<2x128xf32>
    %342 = math.exp %341 : vector<2x128xf32>
    %cst_80 = arith.constant 1.000000e+00 : f32
    %343 = vector.broadcast %cst_80 : f32 to vector<2x128xf32>
    %344 = arith.addf %343, %342 : vector<2x128xf32>
    %345 = arith.divf %343, %344 : vector<2x128xf32>
    %346 = vector.extract_strided_slice %339 {offsets = [0, 128], sizes = [2, 128], strides = [1, 1]} : vector<2x512xf32> to vector<2x128xf32>
    %347 = arith.negf %346 : vector<2x128xf32>
    %348 = math.exp %347 : vector<2x128xf32>
    %cst_81 = arith.constant 1.000000e+00 : f32
    %349 = vector.broadcast %cst_81 : f32 to vector<2x128xf32>
    %350 = arith.addf %349, %348 : vector<2x128xf32>
    %351 = arith.divf %349, %350 : vector<2x128xf32>
    %352 = vector.extract_strided_slice %339 {offsets = [0, 256], sizes = [2, 128], strides = [1, 1]} : vector<2x512xf32> to vector<2x128xf32>
    %353 = math.tanh %352 : vector<2x128xf32>
    %354 = vector.extract_strided_slice %339 {offsets = [0, 384], sizes = [2, 128], strides = [1, 1]} : vector<2x512xf32> to vector<2x128xf32>
    %355 = arith.negf %354 : vector<2x128xf32>
    %356 = math.exp %355 : vector<2x128xf32>
    %cst_82 = arith.constant 1.000000e+00 : f32
    %357 = vector.broadcast %cst_82 : f32 to vector<2x128xf32>
    %358 = arith.addf %357, %356 : vector<2x128xf32>
    %359 = arith.divf %357, %358 : vector<2x128xf32>
    %360 = arith.mulf %351, %333 : vector<2x128xf32>
    %361 = arith.mulf %345, %353 : vector<2x128xf32>
    %362 = arith.addf %360, %361 : vector<2x128xf32>
    %363 = math.tanh %362 : vector<2x128xf32>
    %364 = arith.mulf %359, %363 : vector<2x128xf32>
    %c6_83 = arith.constant 6 : index
    %c0_84 = arith.constant 0 : index
    %365 = vector.load %arg11[%c6_83, %c0_84] : memref<16x128xf32, #tpu.memory_space<vmem>>, vector<2x128xf32>
    tpu.vector_store %arg11[%c6_83, %c0_84], %364 {strides = array<i32>} : memref<16x128xf32, #tpu.memory_space<vmem>>, vector<2x128xf32>,
    %366 = vector.extract_strided_slice %247 {offsets = [8, 0], sizes = [2, 512], strides = [1, 1]} : vector<16x512xf32> to vector<2x512xf32>
    %cst_85 = arith.constant dense<0.000000e+00> : vector<2x512xf32>
    %367 = tpu.matmul %364, %243, %cst_85 {dimension_numbers = #tpu.dot_dimension_numbers<[1], [0], [0], [1], [0, 0, 1, 1], [], []>} : vector<2x128xf32>, vector<128x512xf32>, vector<2x512xf32> -> vector<2x512xf32>
    %368 = arith.addf %366, %367 : vector<2x512xf32>
    %369 = vector.extract_strided_slice %368 {offsets = [0, 0], sizes = [2, 128], strides = [1, 1]} : vector<2x512xf32> to vector<2x128xf32>
    %370 = arith.negf %369 : vector<2x128xf32>
    %371 = math.exp %370 : vector<2x128xf32>
    %cst_86 = arith.constant 1.000000e+00 : f32
    %372 = vector.broadcast %cst_86 : f32 to vector<2x128xf32>
    %373 = arith.addf %372, %371 : vector<2x128xf32>
    %374 = arith.divf %372, %373 : vector<2x128xf32>
    %375 = vector.extract_strided_slice %368 {offsets = [0, 128], sizes = [2, 128], strides = [1, 1]} : vector<2x512xf32> to vector<2x128xf32>
    %376 = arith.negf %375 : vector<2x128xf32>
    %377 = math.exp %376 : vector<2x128xf32>
    %cst_87 = arith.constant 1.000000e+00 : f32
    %378 = vector.broadcast %cst_87 : f32 to vector<2x128xf32>
    %379 = arith.addf %378, %377 : vector<2x128xf32>
    %380 = arith.divf %378, %379 : vector<2x128xf32>
    %381 = vector.extract_strided_slice %368 {offsets = [0, 256], sizes = [2, 128], strides = [1, 1]} : vector<2x512xf32> to vector<2x128xf32>
    %382 = math.tanh %381 : vector<2x128xf32>
    %383 = vector.extract_strided_slice %368 {offsets = [0, 384], sizes = [2, 128], strides = [1, 1]} : vector<2x512xf32> to vector<2x128xf32>
    %384 = arith.negf %383 : vector<2x128xf32>
    %385 = math.exp %384 : vector<2x128xf32>
    %cst_88 = arith.constant 1.000000e+00 : f32
    %386 = vector.broadcast %cst_88 : f32 to vector<2x128xf32>
    %387 = arith.addf %386, %385 : vector<2x128xf32>
    %388 = arith.divf %386, %387 : vector<2x128xf32>
    %389 = arith.mulf %380, %362 : vector<2x128xf32>
    %390 = arith.mulf %374, %382 : vector<2x128xf32>
    %391 = arith.addf %389, %390 : vector<2x128xf32>
    %392 = math.tanh %391 : vector<2x128xf32>
    %393 = arith.mulf %388, %392 : vector<2x128xf32>
    %c8_89 = arith.constant 8 : index
    %c0_90 = arith.constant 0 : index
    %394 = vector.load %arg11[%c8_89, %c0_90] : memref<16x128xf32, #tpu.memory_space<vmem>>, vector<2x128xf32>
    tpu.vector_store %arg11[%c8_89, %c0_90], %393 {strides = array<i32>} : memref<16x128xf32, #tpu.memory_space<vmem>>, vector<2x128xf32>,
    %395 = vector.extract_strided_slice %247 {offsets = [10, 0], sizes = [2, 512], strides = [1, 1]} : vector<16x512xf32> to vector<2x512xf32>
    %cst_91 = arith.constant dense<0.000000e+00> : vector<2x512xf32>
    %396 = tpu.matmul %393, %243, %cst_91 {dimension_numbers = #tpu.dot_dimension_numbers<[1], [0], [0], [1], [0, 0, 1, 1], [], []>} : vector<2x128xf32>, vector<128x512xf32>, vector<2x512xf32> -> vector<2x512xf32>
    %397 = arith.addf %395, %396 : vector<2x512xf32>
    %398 = vector.extract_strided_slice %397 {offsets = [0, 0], sizes = [2, 128], strides = [1, 1]} : vector<2x512xf32> to vector<2x128xf32>
    %399 = arith.negf %398 : vector<2x128xf32>
    %400 = math.exp %399 : vector<2x128xf32>
    %cst_92 = arith.constant 1.000000e+00 : f32
    %401 = vector.broadcast %cst_92 : f32 to vector<2x128xf32>
    %402 = arith.addf %401, %400 : vector<2x128xf32>
    %403 = arith.divf %401, %402 : vector<2x128xf32>
    %404 = vector.extract_strided_slice %397 {offsets = [0, 128], sizes = [2, 128], strides = [1, 1]} : vector<2x512xf32> to vector<2x128xf32>
    %405 = arith.negf %404 : vector<2x128xf32>
    %406 = math.exp %405 : vector<2x128xf32>
    %cst_93 = arith.constant 1.000000e+00 : f32
    %407 = vector.broadcast %cst_93 : f32 to vector<2x128xf32>
    %408 = arith.addf %407, %406 : vector<2x128xf32>
    %409 = arith.divf %407, %408 : vector<2x128xf32>
    %410 = vector.extract_strided_slice %397 {offsets = [0, 256], sizes = [2, 128], strides = [1, 1]} : vector<2x512xf32> to vector<2x128xf32>
    %411 = math.tanh %410 : vector<2x128xf32>
    %412 = vector.extract_strided_slice %397 {offsets = [0, 384], sizes = [2, 128], strides = [1, 1]} : vector<2x512xf32> to vector<2x128xf32>
    %413 = arith.negf %412 : vector<2x128xf32>
    %414 = math.exp %413 : vector<2x128xf32>
    %cst_94 = arith.constant 1.000000e+00 : f32
    %415 = vector.broadcast %cst_94 : f32 to vector<2x128xf32>
    %416 = arith.addf %415, %414 : vector<2x128xf32>
    %417 = arith.divf %415, %416 : vector<2x128xf32>
    %418 = arith.mulf %409, %391 : vector<2x128xf32>
    %419 = arith.mulf %403, %411 : vector<2x128xf32>
    %420 = arith.addf %418, %419 : vector<2x128xf32>
    %421 = math.tanh %420 : vector<2x128xf32>
    %422 = arith.mulf %417, %421 : vector<2x128xf32>
    %c10_95 = arith.constant 10 : index
    %c0_96 = arith.constant 0 : index
    %423 = vector.load %arg11[%c10_95, %c0_96] : memref<16x128xf32, #tpu.memory_space<vmem>>, vector<2x128xf32>
    tpu.vector_store %arg11[%c10_95, %c0_96], %422 {strides = array<i32>} : memref<16x128xf32, #tpu.memory_space<vmem>>, vector<2x128xf32>,
    %424 = vector.extract_strided_slice %247 {offsets = [12, 0], sizes = [2, 512], strides = [1, 1]} : vector<16x512xf32> to vector<2x512xf32>
    %cst_97 = arith.constant dense<0.000000e+00> : vector<2x512xf32>
    %425 = tpu.matmul %422, %243, %cst_97 {dimension_numbers = #tpu.dot_dimension_numbers<[1], [0], [0], [1], [0, 0, 1, 1], [], []>} : vector<2x128xf32>, vector<128x512xf32>, vector<2x512xf32> -> vector<2x512xf32>
    %426 = arith.addf %424, %425 : vector<2x512xf32>
    %427 = vector.extract_strided_slice %426 {offsets = [0, 0], sizes = [2, 128], strides = [1, 1]} : vector<2x512xf32> to vector<2x128xf32>
    %428 = arith.negf %427 : vector<2x128xf32>
    %429 = math.exp %428 : vector<2x128xf32>
    %cst_98 = arith.constant 1.000000e+00 : f32
    %430 = vector.broadcast %cst_98 : f32 to vector<2x128xf32>
    %431 = arith.addf %430, %429 : vector<2x128xf32>
    %432 = arith.divf %430, %431 : vector<2x128xf32>
    %433 = vector.extract_strided_slice %426 {offsets = [0, 128], sizes = [2, 128], strides = [1, 1]} : vector<2x512xf32> to vector<2x128xf32>
    %434 = arith.negf %433 : vector<2x128xf32>
    %435 = math.exp %434 : vector<2x128xf32>
    %cst_99 = arith.constant 1.000000e+00 : f32
    %436 = vector.broadcast %cst_99 : f32 to vector<2x128xf32>
    %437 = arith.addf %436, %435 : vector<2x128xf32>
    %438 = arith.divf %436, %437 : vector<2x128xf32>
    %439 = vector.extract_strided_slice %426 {offsets = [0, 256], sizes = [2, 128], strides = [1, 1]} : vector<2x512xf32> to vector<2x128xf32>
    %440 = math.tanh %439 : vector<2x128xf32>
    %441 = vector.extract_strided_slice %426 {offsets = [0, 384], sizes = [2, 128], strides = [1, 1]} : vector<2x512xf32> to vector<2x128xf32>
    %442 = arith.negf %441 : vector<2x128xf32>
    %443 = math.exp %442 : vector<2x128xf32>
    %cst_100 = arith.constant 1.000000e+00 : f32
    %444 = vector.broadcast %cst_100 : f32 to vector<2x128xf32>
    %445 = arith.addf %444, %443 : vector<2x128xf32>
    %446 = arith.divf %444, %445 : vector<2x128xf32>
    %447 = arith.mulf %438, %420 : vector<2x128xf32>
    %448 = arith.mulf %432, %440 : vector<2x128xf32>
    %449 = arith.addf %447, %448 : vector<2x128xf32>
    %450 = math.tanh %449 : vector<2x128xf32>
    %451 = arith.mulf %446, %450 : vector<2x128xf32>
    %c12_101 = arith.constant 12 : index
    %c0_102 = arith.constant 0 : index
    %452 = vector.load %arg11[%c12_101, %c0_102] : memref<16x128xf32, #tpu.memory_space<vmem>>, vector<2x128xf32>
    tpu.vector_store %arg11[%c12_101, %c0_102], %451 {strides = array<i32>} : memref<16x128xf32, #tpu.memory_space<vmem>>, vector<2x128xf32>,
    %453 = vector.extract_strided_slice %247 {offsets = [14, 0], sizes = [2, 512], strides = [1, 1]} : vector<16x512xf32> to vector<2x512xf32>
    %cst_103 = arith.constant dense<0.000000e+00> : vector<2x512xf32>
    %454 = tpu.matmul %451, %243, %cst_103 {dimension_numbers = #tpu.dot_dimension_numbers<[1], [0], [0], [1], [0, 0, 1, 1], [], []>} : vector<2x128xf32>, vector<128x512xf32>, vector<2x512xf32> -> vector<2x512xf32>
    %455 = arith.addf %453, %454 : vector<2x512xf32>
    %456 = vector.extract_strided_slice %455 {offsets = [0, 0], sizes = [2, 128], strides = [1, 1]} : vector<2x512xf32> to vector<2x128xf32>
    %457 = arith.negf %456 : vector<2x128xf32>
    %458 = math.exp %457 : vector<2x128xf32>
    %cst_104 = arith.constant 1.000000e+00 : f32
    %459 = vector.broadcast %cst_104 : f32 to vector<2x128xf32>
    %460 = arith.addf %459, %458 : vector<2x128xf32>
    %461 = arith.divf %459, %460 : vector<2x128xf32>
    %462 = vector.extract_strided_slice %455 {offsets = [0, 128], sizes = [2, 128], strides = [1, 1]} : vector<2x512xf32> to vector<2x128xf32>
    %463 = arith.negf %462 : vector<2x128xf32>
    %464 = math.exp %463 : vector<2x128xf32>
    %cst_105 = arith.constant 1.000000e+00 : f32
    %465 = vector.broadcast %cst_105 : f32 to vector<2x128xf32>
    %466 = arith.addf %465, %464 : vector<2x128xf32>
    %467 = arith.divf %465, %466 : vector<2x128xf32>
    %468 = vector.extract_strided_slice %455 {offsets = [0, 256], sizes = [2, 128], strides = [1, 1]} : vector<2x512xf32> to vector<2x128xf32>
    %469 = math.tanh %468 : vector<2x128xf32>
    %470 = vector.extract_strided_slice %455 {offsets = [0, 384], sizes = [2, 128], strides = [1, 1]} : vector<2x512xf32> to vector<2x128xf32>
    %471 = arith.negf %470 : vector<2x128xf32>
    %472 = math.exp %471 : vector<2x128xf32>
    %cst_106 = arith.constant 1.000000e+00 : f32
    %473 = vector.broadcast %cst_106 : f32 to vector<2x128xf32>
    %474 = arith.addf %473, %472 : vector<2x128xf32>
    %475 = arith.divf %473, %474 : vector<2x128xf32>
    %476 = arith.mulf %467, %449 : vector<2x128xf32>
    %477 = arith.mulf %461, %469 : vector<2x128xf32>
    %478 = arith.addf %476, %477 : vector<2x128xf32>
    %479 = math.tanh %478 : vector<2x128xf32>
    %480 = arith.mulf %475, %479 : vector<2x128xf32>
    %c14_107 = arith.constant 14 : index
    %c0_108 = arith.constant 0 : index
    %481 = vector.load %arg11[%c14_107, %c0_108] : memref<16x128xf32, #tpu.memory_space<vmem>>, vector<2x128xf32>
    tpu.vector_store %arg11[%c14_107, %c0_108], %480 {strides = array<i32>} : memref<16x128xf32, #tpu.memory_space<vmem>>, vector<2x128xf32>,
    %c0_109 = arith.constant 0 : index
    %c0_110 = arith.constant 0 : index
    %482 = vector.load %arg11[%c0_109, %c0_110] : memref<16x128xf32, #tpu.memory_space<vmem>>, vector<16x128xf32>
    %c0_111 = arith.constant 0 : index
    %c0_112 = arith.constant 0 : index
    %483 = vector.load %arg7[%c0_111, %c0_112] : memref<128x8xf32, #tpu.memory_space<vmem>>, vector<128x8xf32>
    %cst_113 = arith.constant dense<0.000000e+00> : vector<16x8xf32>
    %484 = tpu.matmul %482, %483, %cst_113 {dimension_numbers = #tpu.dot_dimension_numbers<[1], [0], [0], [1], [0, 0, 1, 1], [], []>} : vector<16x128xf32>, vector<128x8xf32>, vector<16x8xf32> -> vector<16x8xf32>
    %c0_114 = arith.constant 0 : index
    %c0_115 = arith.constant 0 : index
    %485 = vector.load %arg8[%c0_114, %c0_115] : memref<1x8xf32, #tpu.memory_space<vmem>>, vector<1x8xf32>
    %486 = vector.broadcast %485 : vector<1x8xf32> to vector<16x8xf32>
    %487 = arith.addf %484, %486 : vector<16x8xf32>
    %c0_116 = arith.constant 0 : index
    %c0_117 = arith.constant 0 : index
    %488 = vector.load %arg9[%c0_116, %c0_117] : memref<16x8xf32, #tpu.memory_space<vmem>>, vector<16x8xf32>
    tpu.vector_store %arg9[%c0_116, %c0_117], %487 {strides = array<i32>} : memref<16x8xf32, #tpu.memory_space<vmem>>, vector<16x8xf32>,
    return
  }
}

</mosaic_0001>

<llo_original>
// kernel: lstm_forward.1
$region0: #{lstm_forward.1}
  #allocation0 [shape = 'u32[]', space=smem, size = 0x4, offset = 0x4, fixed_abs, tag = 'smem constant byte address 0x4 - core index']
  #allocation1 [shape = 'u32[144,128]{1,0:T(1,128)}', space=vmem, size = 0x12000, scoped, tag = 'internal scratch']
  #allocation2 [shape = 'f32[16,128]{1,0:T(8,128)}', space=vmem, size = 0x2000, scoped, tag = 'scratch operand']
  #allocation3 [shape = 'f32[16,128]{1,0:T(8,128)}', space=vmem, size = 0x2000, scoped, tag = 'scratch operand']
  %s0 = inlined_call_operand.vmem [shape: f32[16,16], index: 0, kind: input, shape index: {}]
  %s1 = inlined_call_operand.vmem [shape: f32[16,512], index: 1, kind: input, shape index: {}]
  %s2 = inlined_call_operand.hbm [shape: f32[128,512], index: 2, kind: input, shape index: {}]
  %s3 = inlined_call_operand.vmem [shape: f32[1,512], index: 3, kind: input, shape index: {}]
  %s4 = inlined_call_operand.hbm [shape: f32[128,512], index: 4, kind: input, shape index: {}]
  %s5 = inlined_call_operand.hbm [shape: f32[128,512], index: 5, kind: input, shape index: {}]
  %s6 = inlined_call_operand.vmem [shape: f32[1,512], index: 6, kind: input, shape index: {}]
  %s7 = inlined_call_operand.vmem [shape: f32[128,8], index: 7, kind: input, shape index: {}]
  %s8 = inlined_call_operand.vmem [shape: f32[1,8], index: 8, kind: input, shape index: {}]
  %s9 = inlined_call_operand.hbm [shape: f32[16,8], index: 9, kind: output, shape index: {}]
  %s10 = sld [smem:[#allocation0]]
  $region58: #{lstm_forward.1} parent=0
    _
  %s12 = ssub.s32 1, %s10
  %s13 = scalar_select 0, %s12, %s10
  $region1: #{lstm_forward.1} parent=0
    #allocation4 [shape = 'u8[262144]{0}', space=vmem, size = 0x40000, scoped, tag = 'input window, operand 2, single buffered']
    #allocation5 [shape = 's32[1]{0}', space=sflag, size = 0x4, scoped, tag = 'scoped memory for lstm_forward.1']
    #allocation6 [shape = 's32[1]{0}', space=sflag, size = 0x4, scoped, tag = 'scoped memory for lstm_forward.1']
    #allocation7 [shape = 'u8[262144]{0}', space=vmem, size = 0x40000, scoped, tag = 'input window, operand 4, single buffered']
    #allocation8 [shape = 's32[1]{0}', space=sflag, size = 0x4, scoped, tag = 'scoped memory for lstm_forward.1']
    #allocation9 [shape = 'u8[262144]{0}', space=vmem, size = 0x40000, scoped, tag = 'input window, operand 5, single buffered']
    #allocation10 [shape = 'u8[8192]{0}', space=vmem, size = 0x2000, scoped, tag = 'output window, operand 0, single buffered']
    %14 = vsyncpa [#allocation5], 0
    %15 = vsyncpa [#allocation8], 0
    %16 = vsyncpa [#allocation6], 0
    // Predicated region
    $region2: #{lstm_forward.1} parent=1 // pred_check
      _
    $region3: #{lstm_forward.1} parent=1 // pred_check_branch
      %18 = sbr.rel (0) target = $region5
    $region4: #{lstm_forward.1} parent=1 // pred_region
      _
    $region5: #{lstm_forward.1} parent=1 // pred_fallthru
      _
    // Predicated region
    $region6: #{lstm_forward.1} parent=1 // pred_check
      _
    $region7: #{lstm_forward.1} parent=1 // pred_check_branch
      %20 = sbr.rel (0) target = $region9
    $region8: #{lstm_forward.1} parent=1 // pred_region
      _
    $region9: #{lstm_forward.1} parent=1 // pred_fallthru
      _
    // Predicated region
    $region10: #{lstm_forward.1} parent=1 // pred_check
      _
    $region11: #{lstm_forward.1} parent=1 // pred_check_branch
      %22 = sbr.rel (0) target = $region13
    $region12: #{lstm_forward.1} parent=1 // pred_region
      %s24 = ssub.s32 8192, 8192
      %25 = vsyncadd [#allocation5], %s24
      %s26 = sshll.u32 [#allocation4], 4
      %s27 = int_to_ptr.vmem [resolvable:$true] %s26
      %32 = dma.hbm_to_vmem [thread:$0]  %s2, 8192, %s27, [#allocation5], 512, 512, 32
    $region13: #{lstm_forward.1} parent=1 // pred_fallthru
      _
    // Predicated region
    $region14: #{lstm_forward.1} parent=1 // pred_check
      _
    $region15: #{lstm_forward.1} parent=1 // pred_check_branch
      %34 = sbr.rel (0) target = $region17
    $region16: #{lstm_forward.1} parent=1 // pred_region
      _
    $region17: #{lstm_forward.1} parent=1 // pred_fallthru
      _
    // Predicated region
    $region18: #{lstm_forward.1} parent=1 // pred_check
      _
    $region19: #{lstm_forward.1} parent=1 // pred_check_branch
      %36 = sbr.rel (0) target = $region21
    $region20: #{lstm_forward.1} parent=1 // pred_region
      %s38 = ssub.s32 8192, 8192
      %39 = vsyncadd [#allocation8], %s38
      %s40 = sshll.u32 [#allocation7], 4
      %s41 = int_to_ptr.vmem [resolvable:$true] %s40
      %46 = dma.hbm_to_vmem [thread:$0]  %s4, 8192, %s41, [#allocation8], 512, 512, 32
    $region21: #{lstm_forward.1} parent=1 // pred_fallthru
      _
    // Predicated region
    $region22: #{lstm_forward.1} parent=1 // pred_check
      _
    $region23: #{lstm_forward.1} parent=1 // pred_check_branch
      %48 = sbr.rel (0) target = $region25
    $region24: #{lstm_forward.1} parent=1 // pred_region
      %s50 = ssub.s32 8192, 8192
      %51 = vsyncadd [#allocation8], %s50
      %s52 = sshll.u32 [#allocation9], 4
      %s53 = int_to_ptr.vmem [resolvable:$true] %s52
      %58 = dma.hbm_to_vmem [thread:$0]  %s5, 8192, %s53, [#allocation8], 512, 512, 32
    $region25: #{lstm_forward.1} parent=1 // pred_fallthru
      _
    // Predicated region
    $region26: #{lstm_forward.1} parent=1 // pred_check
      _
    $region27: #{lstm_forward.1} parent=1 // pred_check_branch
      %60 = sbr.rel (0) target = $region29
    $region28: #{lstm_forward.1} parent=1 // pred_region
      _
    $region29: #{lstm_forward.1} parent=1 // pred_fallthru
      _
    // Predicated region
    $region30: #{lstm_forward.1} parent=1 // pred_check
      _
    $region31: #{lstm_forward.1} parent=1 // pred_check_branch
      %62 = sbr.rel (0) target = $region33
    $region32: #{lstm_forward.1} parent=1 // pred_region
      _
    $region33: #{lstm_forward.1} parent=1 // pred_fallthru
      _
    // Predicated region
    $region34: #{lstm_forward.1} parent=1 // pred_check
      _
    $region35: #{lstm_forward.1} parent=1 // pred_check_branch
      %64 = sbr.rel (0) target = $region37
    $region36: #{lstm_forward.1} parent=1 // pred_region
      _
    $region37: #{lstm_forward.1} parent=1 // pred_fallthru
      _
    // Predicated region
    $region38: #{lstm_forward.1} parent=1 // pred_check
      _
    $region39: #{lstm_forward.1} parent=1 // pred_check_branch
      %66 = sbr.rel (0) target = $region41
    $region40: #{lstm_forward.1} parent=1 // pred_region
      %67 = dma.done [#allocation5], 8192
    $region41: #{lstm_forward.1} parent=1 // pred_fallthru
      _
    // Predicated region
    $region42: #{lstm_forward.1} parent=1 // pred_check
      _
    $region43: #{lstm_forward.1} parent=1 // pred_check_branch
      %69 = sbr.rel (0) target = $region45
    $region44: #{lstm_forward.1} parent=1 // pred_region
      %70 = dma.done [#allocation8], 8192
    $region45: #{lstm_forward.1} parent=1 // pred_fallthru
      _
    // Predicated region
    $region46: #{lstm_forward.1} parent=1 // pred_check
      _
    $region47: #{lstm_forward.1} parent=1 // pred_check_branch
      %72 = sbr.rel (0) target = $region49
    $region48: #{lstm_forward.1} parent=1 // pred_region
      %73 = dma.done [#allocation8], 8192
    $region49: #{lstm_forward.1} parent=1 // pred_fallthru
      _
    %v74 = vld [vmem:[%s0] sm:$0xff]
    %v75 = vld [vmem:[%s0 + $0x8] sm:$0xff]
    %v76 = vld [vmem:[%s1] sm:$0xff]
    %v77 = vld [vmem:[%s1 + $0x8] sm:$0xff]
    %v78 = vld [vmem:[%s1 + $0x10] sm:$0xff]
    %v79 = vld [vmem:[%s1 + $0x18] sm:$0xff]
    %v80 = vld [vmem:[%s1 + $0x20] sm:$0xff]
    %v81 = vld [vmem:[%s1 + $0x28] sm:$0xff]
    %v82 = vld [vmem:[%s1 + $0x30] sm:$0xff]
    %v83 = vld [vmem:[%s1 + $0x38] sm:$0xff]
    %v84 = vld [vmem:[#allocation4] sm:$0xff]
    %v85 = vld [vmem:[#allocation4 + $0x8] sm:$0xff]
    %v86 = vld [vmem:[#allocation4 + $0x10] sm:$0xff]
    %v87 = vld [vmem:[#allocation4 + $0x18] sm:$0xff]
    %v88 = vld [vmem:[#allocation4 + $0x20] sm:$0xff]
    %v89 = vld [vmem:[#allocation4 + $0x28] sm:$0xff]
    %v90 = vld [vmem:[#allocation4 + $0x30] sm:$0xff]
    %v91 = vld [vmem:[#allocation4 + $0x38] sm:$0xff]
    %v92 = vld [vmem:[#allocation4 + $0x40] sm:$0xff]
    %v93 = vld [vmem:[#allocation4 + $0x48] sm:$0xff]
    %v94 = vld [vmem:[#allocation4 + $0x50] sm:$0xff]
    %v95 = vld [vmem:[#allocation4 + $0x58] sm:$0xff]
    %v96 = vld [vmem:[#allocation4 + $0x60] sm:$0xff]
    %v97 = vld [vmem:[#allocation4 + $0x68] sm:$0xff]
    %v98 = vld [vmem:[#allocation4 + $0x70] sm:$0xff]
    %v99 = vld [vmem:[#allocation4 + $0x78] sm:$0xff]
    %v100 = vld [vmem:[#allocation4 + $0x80] sm:$0xff]
    %v101 = vld [vmem:[#allocation4 + $0x88] sm:$0xff]
    %v102 = vld [vmem:[#allocation4 + $0x90] sm:$0xff]
    %v103 = vld [vmem:[#allocation4 + $0x98] sm:$0xff]
    %v104 = vld [vmem:[#allocation4 + $0xa0] sm:$0xff]
    %v105 = vld [vmem:[#allocation4 + $0xa8] sm:$0xff]
    %v106 = vld [vmem:[#allocation4 + $0xb0] sm:$0xff]
    %v107 = vld [vmem:[#allocation4 + $0xb8] sm:$0xff]
    %v108 = vld [vmem:[#allocation4 + $0xc0] sm:$0xff]
    %v109 = vld [vmem:[#allocation4 + $0xc8] sm:$0xff]
    %v110 = vld [vmem:[#allocation4 + $0xd0] sm:$0xff]
    %v111 = vld [vmem:[#allocation4 + $0xd8] sm:$0xff]
    %v112 = vld [vmem:[#allocation4 + $0xe0] sm:$0xff]
    %v113 = vld [vmem:[#allocation4 + $0xe8] sm:$0xff]
    %v114 = vld [vmem:[#allocation4 + $0xf0] sm:$0xff]
    %v115 = vld [vmem:[#allocation4 + $0xf8] sm:$0xff]
    %v116 = vld [vmem:[#allocation4 + $0x100] sm:$0xff]
    %v117 = vld [vmem:[#allocation4 + $0x108] sm:$0xff]
    %v118 = vld [vmem:[#allocation4 + $0x110] sm:$0xff]
    %v119 = vld [vmem:[#allocation4 + $0x118] sm:$0xff]
    %v120 = vld [vmem:[#allocation4 + $0x120] sm:$0xff]
    %v121 = vld [vmem:[#allocation4 + $0x128] sm:$0xff]
    %v122 = vld [vmem:[#allocation4 + $0x130] sm:$0xff]
    %v123 = vld [vmem:[#allocation4 + $0x138] sm:$0xff]
    %v124 = vld [vmem:[#allocation4 + $0x140] sm:$0xff]
    %v125 = vld [vmem:[#allocation4 + $0x148] sm:$0xff]
    %v126 = vld [vmem:[#allocation4 + $0x150] sm:$0xff]
    %v127 = vld [vmem:[#allocation4 + $0x158] sm:$0xff]
    %v128 = vld [vmem:[#allocation4 + $0x160] sm:$0xff]
    %v129 = vld [vmem:[#allocation4 + $0x168] sm:$0xff]
    %v130 = vld [vmem:[#allocation4 + $0x170] sm:$0xff]
    %v131 = vld [vmem:[#allocation4 + $0x178] sm:$0xff]
    %v132 = vld [vmem:[#allocation4 + $0x180] sm:$0xff]
    %v133 = vld [vmem:[#allocation4 + $0x188] sm:$0xff]
    %v134 = vld [vmem:[#allocation4 + $0x190] sm:$0xff]
    %v135 = vld [vmem:[#allocation4 + $0x198] sm:$0xff]
    %v136 = vld [vmem:[#allocation4 + $0x1a0] sm:$0xff]
    %v137 = vld [vmem:[#allocation4 + $0x1a8] sm:$0xff]
    %v138 = vld [vmem:[#allocation4 + $0x1b0] sm:$0xff]
    %v139 = vld [vmem:[#allocation4 + $0x1b8] sm:$0xff]
    %v140 = vld [vmem:[#allocation4 + $0x1c0] sm:$0xff]
    %v141 = vld [vmem:[#allocation4 + $0x1c8] sm:$0xff]
    %v142 = vld [vmem:[#allocation4 + $0x1d0] sm:$0xff]
    %v143 = vld [vmem:[#allocation4 + $0x1d8] sm:$0xff]
    %v144 = vld [vmem:[#allocation4 + $0x1e0] sm:$0xff]
    %v145 = vld [vmem:[#allocation4 + $0x1e8] sm:$0xff]
    %v146 = vld [vmem:[#allocation4 + $0x1f0] sm:$0xff]
    %v147 = vld [vmem:[#allocation4 + $0x1f8] sm:$0xff]
    %v148 = vld [vmem:[%s3] sm:$0xf]
    %v150 = vlaneseq
    %v151 = vshrl.u32 %v150, 7
    %v152 = vsub.s32 0, %v151
    %v153 = vrot.slane %v148, %v152
    %v154 = vlaneseq
    %v155 = vshrl.u32 %v154, 7
    %v156 = vsub.s32 1, %v155
    %v157 = vrot.slane %v148, %v156
    %v158 = vlaneseq
    %v159 = vshrl.u32 %v158, 7
    %v160 = vsub.s32 2, %v159
    %v161 = vrot.slane %v148, %v160
    %v162 = vlaneseq
    %v163 = vshrl.u32 %v162, 7
    %v164 = vsub.s32 3, %v163
    %v165 = vrot.slane %v148, %v164
    %vm170 = vcmask 130048
    %v172 = vsel %vm170, %v74, 0
    %v175 = vsel %vm170, %v75, 0
    %177 = vmatprep.subr.mxu0 %v77
    %178 = vmatpush1.msra.mxu0 %v76
    %179 = vmatprep.subr.mxu0 %v81
    %180 = vmatpush1.msra.mxu0 %v80
    %181 = vmatprep.subr.mxu0 0.0
    %182 = vmatpush1.msra.mxu0 0.0
    %183 = vmatprep.subr.mxu0 0.0
    %184 = vmatpush1.msra.mxu0 0.0
    %185 = vmatprep.subr.mxu0 0.0
    %186 = vmatpush1.msra.mxu0 0.0
    %187 = vmatprep.subr.mxu0 0.0
    %188 = vmatpush1.msra.mxu0 0.0
    %189 = vmatprep.subr.mxu0 0.0
    %190 = vmatpush1.msra.mxu0 0.0
    %191 = vmatprep.subr.mxu0 0.0
    %192 = vmatpush1.msra.mxu0 0.0
    %193 = vmatprep.subr.mxu0 0.0
    %194 = vmatpush1.msra.mxu0 0.0
    %195 = vmatprep.subr.mxu0 0.0
    %196 = vmatpush1.msra.mxu0 0.0
    %197 = vmatprep.subr.mxu0 0.0
    %198 = vmatpush1.msra.mxu0 0.0
    %199 = vmatprep.subr.mxu0 0.0
    %200 = vmatpush1.msra.mxu0 0.0
    %201 = vmatprep.subr.mxu0 0.0
    %202 = vmatpush1.msra.mxu0 0.0
    %203 = vmatprep.subr.mxu0 0.0
    %204 = vmatpush1.msra.mxu0 0.0
    %205 = vmatprep.subr.mxu0 0.0
    %206 = vmatpush1.msra.mxu0 0.0
    %207 = vmatprep.subr.mxu0 0.0
    %208 = vmatpush1.msra.mxu0 0.0
    %209 = vmatprep.subr.mxu0 0.0
    %210 = vmatpush1.msra.mxu0 0.0
    %211 = vmatprep.subr.mxu0 0.0
    %212 = vmatpush1.msra.mxu0 0.0
    %213 = vmatprep.subr.mxu0 0.0
    %214 = vmatpush1.msra.mxu0 0.0
    %215 = vmatprep.subr.mxu0 0.0
    %216 = vmatpush1.msra.mxu0 0.0
    %217 = vmatprep.subr.mxu0 0.0
    %218 = vmatpush1.msra.mxu0 0.0
    %219 = vmatprep.subr.mxu0 0.0
    %220 = vmatpush1.msra.mxu0 0.0
    %221 = vmatprep.subr.mxu0 0.0
    %222 = vmatpush1.msra.mxu0 0.0
    %223 = vmatprep.subr.mxu0 0.0
    %224 = vmatpush1.msra.mxu0 0.0
    %225 = vmatprep.subr.mxu0 0.0
    %226 = vmatpush1.msra.mxu0 0.0
    %227 = vmatprep.subr.mxu0 0.0
    %228 = vmatpush1.msra.mxu0 0.0
    %229 = vmatprep.subr.mxu0 0.0
    %230 = vmatpush1.msra.mxu0 0.0
    %231 = vmatprep.subr.mxu0 0.0
    %232 = vmatpush1.msra.mxu0 0.0
    %233 = vmatprep.subr.mxu0 0.0
    %234 = vmatpush1.msra.mxu0 0.0
    %235 = vmatprep.subr.mxu0 0.0
    %236 = vmatpush1.msra.mxu0 0.0
    %237 = vmatprep.subr.mxu0 0.0
    %238 = vmatpush1.msra.mxu0 0.0
    %239 = vmatprep.subr.mxu0 0.0
    %240 = vmatpush1.msra.mxu0 0.0
    %241 = vmatprep.mubr.f32.mxu0 0.0
    %242 = vmatmul.mubr.f32.gmra.mrb[0].mxu0 %v172
    %v243 = vpop.f32.mrb[0].mxu0
    %v244 = vadd.f32 %v153, %v243
    %v245 = vpop.f32.mrb[0].mxu0
    %v246 = vadd.f32 %v157, %v245
    %247 = vmatprep.mubr.f32.mxu0 0.0
    %248 = vmatmul.mubr.f32.gmra.mrb[0].mxu0 %v175
    %v249 = vpop.f32.mrb[0].mxu0
    %v250 = vadd.f32 %v153, %v249
    %v251 = vpop.f32.mrb[0].mxu0
    %v252 = vadd.f32 %v157, %v251
    %253 = vdwg.mxu0
    %254 = vmatprep.subr.mxu0 %v79
    %255 = vmatpush1.msra.mxu0 %v78
    %256 = vmatprep.subr.mxu0 %v83
    %257 = vmatpush1.msra.mxu0 %v82
    %258 = vmatprep.subr.mxu0 0.0
    %259 = vmatpush1.msra.mxu0 0.0
    %260 = vmatprep.subr.mxu0 0.0
    %261 = vmatpush1.msra.mxu0 0.0
    %262 = vmatprep.subr.mxu0 0.0
    %263 = vmatpush1.msra.mxu0 0.0
    %264 = vmatprep.subr.mxu0 0.0
    %265 = vmatpush1.msra.mxu0 0.0
    %266 = vmatprep.subr.mxu0 0.0
    %267 = vmatpush1.msra.mxu0 0.0
    %268 = vmatprep.subr.mxu0 0.0
    %269 = vmatpush1.msra.mxu0 0.0
    %270 = vmatprep.subr.mxu0 0.0
    %271 = vmatpush1.msra.mxu0 0.0
    %272 = vmatprep.subr.mxu0 0.0
    %273 = vmatpush1.msra.mxu0 0.0
    %274 = vmatprep.subr.mxu0 0.0
    %275 = vmatpush1.msra.mxu0 0.0
    %276 = vmatprep.subr.mxu0 0.0
    %277 = vmatpush1.msra.mxu0 0.0
    %278 = vmatprep.subr.mxu0 0.0
    %279 = vmatpush1.msra.mxu0 0.0
    %280 = vmatprep.subr.mxu0 0.0
    %281 = vmatpush1.msra.mxu0 0.0
    %282 = vmatprep.subr.mxu0 0.0
    %283 = vmatpush1.msra.mxu0 0.0
    %284 = vmatprep.subr.mxu0 0.0
    %285 = vmatpush1.msra.mxu0 0.0
    %286 = vmatprep.subr.mxu0 0.0
    %287 = vmatpush1.msra.mxu0 0.0
    %288 = vmatprep.subr.mxu0 0.0
    %289 = vmatpush1.msra.mxu0 0.0
    %290 = vmatprep.subr.mxu0 0.0
    %291 = vmatpush1.msra.mxu0 0.0
    %292 = vmatprep.subr.mxu0 0.0
    %293 = vmatpush1.msra.mxu0 0.0
    %294 = vmatprep.subr.mxu0 0.0
    %295 = vmatpush1.msra.mxu0 0.0
    %296 = vmatprep.subr.mxu0 0.0
    %297 = vmatpush1.msra.mxu0 0.0
    %298 = vmatprep.subr.mxu0 0.0
    %299 = vmatpush1.msra.mxu0 0.0
    %300 = vmatprep.subr.mxu0 0.0
    %301 = vmatpush1.msra.mxu0 0.0
    %302 = vmatprep.subr.mxu0 0.0
    %303 = vmatpush1.msra.mxu0 0.0
    %304 = vmatprep.subr.mxu0 0.0
    %305 = vmatpush1.msra.mxu0 0.0
    %306 = vmatprep.subr.mxu0 0.0
    %307 = vmatpush1.msra.mxu0 0.0
    %308 = vmatprep.subr.mxu0 0.0
    %309 = vmatpush1.msra.mxu0 0.0
    %310 = vmatprep.subr.mxu0 0.0
    %311 = vmatpush1.msra.mxu0 0.0
    %312 = vmatprep.subr.mxu0 0.0
    %313 = vmatpush1.msra.mxu0 0.0
    %314 = vmatprep.subr.mxu0 0.0
    %315 = vmatpush1.msra.mxu0 0.0
    %316 = vmatprep.subr.mxu0 0.0
    %317 = vmatpush1.msra.mxu0 0.0
    %318 = vmatprep.mubr.f32.mxu0 0.0
    %319 = vmatmul.mubr.f32.gmra.mrb[0].mxu0 %v172
    %v320 = vpop.f32.mrb[0].mxu0
    %v321 = vadd.f32 %v161, %v320
    %v322 = vpop.f32.mrb[0].mxu0
    %v323 = vadd.f32 %v165, %v322
    %324 = vmatprep.mubr.f32.mxu0 0.0
    %325 = vmatmul.mubr.f32.gmra.mrb[0].mxu0 %v175
    %v326 = vpop.f32.mrb[0].mxu0
    %v327 = vadd.f32 %v161, %v326
    %v328 = vpop.f32.mrb[0].mxu0
    %v329 = vadd.f32 %v165, %v328
    %330 = vdwg.mxu0
    %331 = vmatprep.subr.mxu0 %v85
    %332 = vmatpush1.msra.mxu0 %v84
    %333 = vmatprep.subr.mxu0 %v89
    %334 = vmatpush1.msra.mxu0 %v88
    %335 = vmatprep.subr.mxu0 %v93
    %336 = vmatpush1.msra.mxu0 %v92
    %337 = vmatprep.subr.mxu0 %v97
    %338 = vmatpush1.msra.mxu0 %v96
    %339 = vmatprep.subr.mxu0 %v101
    %340 = vmatpush1.msra.mxu0 %v100
    %341 = vmatprep.subr.mxu0 %v105
    %342 = vmatpush1.msra.mxu0 %v104
    %343 = vmatprep.subr.mxu0 %v109
    %344 = vmatpush1.msra.mxu0 %v108
    %345 = vmatprep.subr.mxu0 %v113
    %346 = vmatpush1.msra.mxu0 %v112
    %347 = vmatprep.subr.mxu0 %v117
    %348 = vmatpush1.msra.mxu0 %v116
    %349 = vmatprep.subr.mxu0 %v121
    %350 = vmatpush1.msra.mxu0 %v120
    %351 = vmatprep.subr.mxu0 %v125
    %352 = vmatpush1.msra.mxu0 %v124
    %353 = vmatprep.subr.mxu0 %v129
    %354 = vmatpush1.msra.mxu0 %v128
    %355 = vmatprep.subr.mxu0 %v133
    %356 = vmatpush1.msra.mxu0 %v132
    %357 = vmatprep.subr.mxu0 %v137
    %358 = vmatpush1.msra.mxu0 %v136
    %359 = vmatprep.subr.mxu0 %v141
    %360 = vmatpush1.msra.mxu0 %v140
    %361 = vmatprep.subr.mxu0 %v145
    %362 = vmatpush1.msra.mxu0 %v144
    %363 = vmatprep.subr.mxu0 0.0
    %364 = vmatpush1.msra.mxu0 0.0
    %365 = vmatprep.subr.mxu0 0.0
    %366 = vmatpush1.msra.mxu0 0.0
    %367 = vmatprep.subr.mxu0 0.0
    %368 = vmatpush1.msra.mxu0 0.0
    %369 = vmatprep.subr.mxu0 0.0
    %370 = vmatpush1.msra.mxu0 0.0
    %371 = vmatprep.subr.mxu0 0.0
    %372 = vmatpush1.msra.mxu0 0.0
    %373 = vmatprep.subr.mxu0 0.0
    %374 = vmatpush1.msra.mxu0 0.0
    %375 = vmatprep.subr.mxu0 0.0
    %376 = vmatpush1.msra.mxu0 0.0
    %377 = vmatprep.subr.mxu0 0.0
    %378 = vmatpush1.msra.mxu0 0.0
    %379 = vmatprep.subr.mxu0 0.0
    %380 = vmatpush1.msra.mxu0 0.0
    %381 = vmatprep.subr.mxu0 0.0
    %382 = vmatpush1.msra.mxu0 0.0
    %383 = vmatprep.subr.mxu0 0.0
    %384 = vmatpush1.msra.mxu0 0.0
    %385 = vmatprep.subr.mxu0 0.0
    %386 = vmatpush1.msra.mxu0 0.0
    %387 = vmatprep.subr.mxu0 0.0
    %388 = vmatpush1.msra.mxu0 0.0
    %389 = vmatprep.subr.mxu0 0.0
    %390 = vmatpush1.msra.mxu0 0.0
    %391 = vmatprep.subr.mxu0 0.0
    %392 = vmatpush1.msra.mxu0 0.0
    %393 = vmatprep.subr.mxu0 0.0
    %394 = vmatpush1.msra.mxu0 0.0
    %395 = vmatprep.mubr.f32.mxu0 0.0
    %396 = vmatmul.mubr.f32.gmra.mrb[0].mxu0 0.0
    %v397 = vpop.f32.mrb[0].mxu0
    %v398 = vadd.f32 0.0, %v397
    %v399 = vpop.f32.mrb[0].mxu0
    %v400 = vadd.f32 0.0, %v399
    %401 = vdwg.mxu0
    %402 = vmatprep.subr.mxu0 %v87
    %403 = vmatpush1.msra.mxu0 %v86
    %404 = vmatprep.subr.mxu0 %v91
    %405 = vmatpush1.msra.mxu0 %v90
    %406 = vmatprep.subr.mxu0 %v95
    %407 = vmatpush1.msra.mxu0 %v94
    %408 = vmatprep.subr.mxu0 %v99
    %409 = vmatpush1.msra.mxu0 %v98
    %410 = vmatprep.subr.mxu0 %v103
    %411 = vmatpush1.msra.mxu0 %v102
    %412 = vmatprep.subr.mxu0 %v107
    %413 = vmatpush1.msra.mxu0 %v106
    %414 = vmatprep.subr.mxu0 %v111
    %415 = vmatpush1.msra.mxu0 %v110
    %416 = vmatprep.subr.mxu0 %v115
    %417 = vmatpush1.msra.mxu0 %v114
    %418 = vmatprep.subr.mxu0 %v119
    %419 = vmatpush1.msra.mxu0 %v118
    %420 = vmatprep.subr.mxu0 %v123
    %421 = vmatpush1.msra.mxu0 %v122
    %422 = vmatprep.subr.mxu0 %v127
    %423 = vmatpush1.msra.mxu0 %v126
    %424 = vmatprep.subr.mxu0 %v131
    %425 = vmatpush1.msra.mxu0 %v130
    %426 = vmatprep.subr.mxu0 %v135
    %427 = vmatpush1.msra.mxu0 %v134
    %428 = vmatprep.subr.mxu0 %v139
    %429 = vmatpush1.msra.mxu0 %v138
    %430 = vmatprep.subr.mxu0 %v143
    %431 = vmatpush1.msra.mxu0 %v142
    %432 = vmatprep.subr.mxu0 %v147
    %433 = vmatpush1.msra.mxu0 %v146
    %434 = vmatprep.subr.mxu0 0.0
    %435 = vmatpush1.msra.mxu0 0.0
    %436 = vmatprep.subr.mxu0 0.0
    %437 = vmatpush1.msra.mxu0 0.0
    %438 = vmatprep.subr.mxu0 0.0
    %439 = vmatpush1.msra.mxu0 0.0
    %440 = vmatprep.subr.mxu0 0.0
    %441 = vmatpush1.msra.mxu0 0.0
    %442 = vmatprep.subr.mxu0 0.0
    %443 = vmatpush1.msra.mxu0 0.0
    %444 = vmatprep.subr.mxu0 0.0
    %445 = vmatpush1.msra.mxu0 0.0
    %446 = vmatprep.subr.mxu0 0.0
    %447 = vmatpush1.msra.mxu0 0.0
    %448 = vmatprep.subr.mxu0 0.0
    %449 = vmatpush1.msra.mxu0 0.0
    %450 = vmatprep.subr.mxu0 0.0
    %451 = vmatpush1.msra.mxu0 0.0
    %452 = vmatprep.subr.mxu0 0.0
    %453 = vmatpush1.msra.mxu0 0.0
    %454 = vmatprep.subr.mxu0 0.0
    %455 = vmatpush1.msra.mxu0 0.0
    %456 = vmatprep.subr.mxu0 0.0
    %457 = vmatpush1.msra.mxu0 0.0
    %458 = vmatprep.subr.mxu0 0.0
    %459 = vmatpush1.msra.mxu0 0.0
    %460 = vmatprep.subr.mxu0 0.0
    %461 = vmatpush1.msra.mxu0 0.0
    %462 = vmatprep.subr.mxu0 0.0
    %463 = vmatpush1.msra.mxu0 0.0
    %464 = vmatprep.subr.mxu0 0.0
    %465 = vmatpush1.msra.mxu0 0.0
    %466 = vmatprep.mubr.f32.mxu0 0.0
    %467 = vmatmul.mubr.f32.gmra.mrb[0].mxu0 0.0
    %v468 = vpop.f32.mrb[0].mxu0
    %v469 = vadd.f32 0.0, %v468
    %v470 = vpop.f32.mrb[0].mxu0
    %v471 = vadd.f32 0.0, %v470
    %472 = vdwg.mxu0
    %v473 = vadd.f32 %v244, %v398
    %v474 = vadd.f32 %v246, %v400
    %v475 = vadd.f32 %v321, %v469
    %v476 = vadd.f32 %v323, %v471
    %v477 = vxor.u32 %v473, 2147483648
    %v478 = vmul.f32 %v477, 1.442695
    %v479 = vpow.pop %v478
    %v480 = vadd.f32 %v479, 1.0
    %v481 = vrcp.pop %v480
    %v482 = vmul.f32 1.0, %v481
    %v483 = vxor.u32 %v474, 2147483648
    %v484 = vmul.f32 %v483, 1.442695
    %v485 = vpow.pop %v484
    %v486 = vadd.f32 %v485, 1.0
    %v487 = vrcp.pop %v486
    %v488 = vmul.f32 1.0, %v487
    %v489 = vtanh.pop %v475
    %v490 = vxor.u32 %v476, 2147483648
    %v491 = vmul.f32 %v490, 1.442695
    %v492 = vpow.pop %v491
    %v493 = vadd.f32 %v492, 1.0
    %v494 = vrcp.pop %v493
    %v495 = vmul.f32 1.0, %v494
    %v496 = vmul.f32 %v488, 0.0
    %v497 = vmul.f32 %v482, %v489
    %v498 = vadd.f32 %v496, %v497
    %v499 = vtanh.pop %v498
    %v500 = vmul.f32 %v495, %v499
    %501 = vst [vmem:[#allocation2] sm:$0x3] %v500
    %502 = vmatprep.subr.mxu0 %v85
    %503 = vmatpush1.msra.mxu0 %v84
    %504 = vmatprep.subr.mxu0 %v89
    %505 = vmatpush1.msra.mxu0 %v88
    %506 = vmatprep.subr.mxu0 %v93
    %507 = vmatpush1.msra.mxu0 %v92
    %508 = vmatprep.subr.mxu0 %v97
    %509 = vmatpush1.msra.mxu0 %v96
    %510 = vmatprep.subr.mxu0 %v101
    %511 = vmatpush1.msra.mxu0 %v100
    %512 = vmatprep.subr.mxu0 %v105
    %513 = vmatpush1.msra.mxu0 %v104
    %514 = vmatprep.subr.mxu0 %v109
    %515 = vmatpush1.msra.mxu0 %v108
    %516 = vmatprep.subr.mxu0 %v113
    %517 = vmatpush1.msra.mxu0 %v112
    %518 = vmatprep.subr.mxu0 %v117
    %519 = vmatpush1.msra.mxu0 %v116
    %520 = vmatprep.subr.mxu0 %v121
    %521 = vmatpush1.msra.mxu0 %v120
    %522 = vmatprep.subr.mxu0 %v125
    %523 = vmatpush1.msra.mxu0 %v124
    %524 = vmatprep.subr.mxu0 %v129
    %525 = vmatpush1.msra.mxu0 %v128
    %526 = vmatprep.subr.mxu0 %v133
    %527 = vmatpush1.msra.mxu0 %v132
    %528 = vmatprep.subr.mxu0 %v137
    %529 = vmatpush1.msra.mxu0 %v136
    %530 = vmatprep.subr.mxu0 %v141
    %531 = vmatpush1.msra.mxu0 %v140
    %532 = vmatprep.subr.mxu0 %v145
    %533 = vmatpush1.msra.mxu0 %v144
    %534 = vmatprep.subr.mxu0 0.0
    %535 = vmatpush1.msra.mxu0 0.0
    %536 = vmatprep.subr.mxu0 0.0
    %537 = vmatpush1.msra.mxu0 0.0
    %538 = vmatprep.subr.mxu0 0.0
    %539 = vmatpush1.msra.mxu0 0.0
    %540 = vmatprep.subr.mxu0 0.0
    %541 = vmatpush1.msra.mxu0 0.0
    %542 = vmatprep.subr.mxu0 0.0
    %543 = vmatpush1.msra.mxu0 0.0
    %544 = vmatprep.subr.mxu0 0.0
    %545 = vmatpush1.msra.mxu0 0.0
    %546 = vmatprep.subr.mxu0 0.0
    %547 = vmatpush1.msra.mxu0 0.0
    %548 = vmatprep.subr.mxu0 0.0
    %549 = vmatpush1.msra.mxu0 0.0
    %550 = vmatprep.subr.mxu0 0.0
    %551 = vmatpush1.msra.mxu0 0.0
    %552 = vmatprep.subr.mxu0 0.0
    %553 = vmatpush1.msra.mxu0 0.0
    %554 = vmatprep.subr.mxu0 0.0
    %555 = vmatpush1.msra.mxu0 0.0
    %556 = vmatprep.subr.mxu0 0.0
    %557 = vmatpush1.msra.mxu0 0.0
    %558 = vmatprep.subr.mxu0 0.0
    %559 = vmatpush1.msra.mxu0 0.0
    %560 = vmatprep.subr.mxu0 0.0
    %561 = vmatpush1.msra.mxu0 0.0
    %562 = vmatprep.subr.mxu0 0.0
    %563 = vmatpush1.msra.mxu0 0.0
    %564 = vmatprep.subr.mxu0 0.0
    %565 = vmatpush1.msra.mxu0 0.0
    %566 = vmatprep.mubr.f32.mxu0 0.0
    %567 = vmatmul.mubr.f32.gmra.mrb[0].mxu0 %v500
    %v568 = vpop.f32.mrb[0].mxu0
    %v569 = vadd.f32 0.0, %v568
    %v570 = vpop.f32.mrb[0].mxu0
    %v571 = vadd.f32 0.0, %v570
    %572 = vdwg.mxu0
    %573 = vmatprep.subr.mxu0 %v87
    %574 = vmatpush1.msra.mxu0 %v86
    %575 = vmatprep.subr.mxu0 %v91
    %576 = vmatpush1.msra.mxu0 %v90
    %577 = vmatprep.subr.mxu0 %v95
    %578 = vmatpush1.msra.mxu0 %v94
    %579 = vmatprep.subr.mxu0 %v99
    %580 = vmatpush1.msra.mxu0 %v98
    %581 = vmatprep.subr.mxu0 %v103
    %582 = vmatpush1.msra.mxu0 %v102
    %583 = vmatprep.subr.mxu0 %v107
    %584 = vmatpush1.msra.mxu0 %v106
    %585 = vmatprep.subr.mxu0 %v111
    %586 = vmatpush1.msra.mxu0 %v110
    %587 = vmatprep.subr.mxu0 %v115
    %588 = vmatpush1.msra.mxu0 %v114
    %589 = vmatprep.subr.mxu0 %v119
    %590 = vmatpush1.msra.mxu0 %v118
    %591 = vmatprep.subr.mxu0 %v123
    %592 = vmatpush1.msra.mxu0 %v122
    %593 = vmatprep.subr.mxu0 %v127
    %594 = vmatpush1.msra.mxu0 %v126
    %595 = vmatprep.subr.mxu0 %v131
    %596 = vmatpush1.msra.mxu0 %v130
    %597 = vmatprep.subr.mxu0 %v135
    %598 = vmatpush1.msra.mxu0 %v134
    %599 = vmatprep.subr.mxu0 %v139
    %600 = vmatpush1.msra.mxu0 %v138
    %601 = vmatprep.subr.mxu0 %v143
    %602 = vmatpush1.msra.mxu0 %v142
    %603 = vmatprep.subr.mxu0 %v147
    %604 = vmatpush1.msra.mxu0 %v146
    %605 = vmatprep.subr.mxu0 0.0
    %606 = vmatpush1.msra.mxu0 0.0
    %607 = vmatprep.subr.mxu0 0.0
    %608 = vmatpush1.msra.mxu0 0.0
    %609 = vmatprep.subr.mxu0 0.0
    %610 = vmatpush1.msra.mxu0 0.0
    %611 = vmatprep.subr.mxu0 0.0
    %612 = vmatpush1.msra.mxu0 0.0
    %613 = vmatprep.subr.mxu0 0.0
    %614 = vmatpush1.msra.mxu0 0.0
    %615 = vmatprep.subr.mxu0 0.0
    %616 = vmatpush1.msra.mxu0 0.0
    %617 = vmatprep.subr.mxu0 0.0
    %618 = vmatpush1.msra.mxu0 0.0
    %619 = vmatprep.subr.mxu0 0.0
    %620 = vmatpush1.msra.mxu0 0.0
    %621 = vmatprep.subr.mxu0 0.0
    %622 = vmatpush1.msra.mxu0 0.0
    %623 = vmatprep.subr.mxu0 0.0
    %624 = vmatpush1.msra.mxu0 0.0
    %625 = vmatprep.subr.mxu0 0.0
    %626 = vmatpush1.msra.mxu0 0.0
    %627 = vmatprep.subr.mxu0 0.0
    %628 = vmatpush1.msra.mxu0 0.0
    %629 = vmatprep.subr.mxu0 0.0
    %630 = vmatpush1.msra.mxu0 0.0
    %631 = vmatprep.subr.mxu0 0.0
    %632 = vmatpush1.msra.mxu0 0.0
    %633 = vmatprep.subr.mxu0 0.0
    %634 = vmatpush1.msra.mxu0 0.0
    %635 = vmatprep.subr.mxu0 0.0
    %636 = vmatpush1.msra.mxu0 0.0
    %637 = vmatprep.mubr.f32.mxu0 0.0
    %638 = vmatmul.mubr.f32.gmra.mrb[0].mxu0 %v500
    %v639 = vpop.f32.mrb[0].mxu0
    %v640 = vadd.f32 0.0, %v639
    %v641 = vpop.f32.mrb[0].mxu0
    %v642 = vadd.f32 0.0, %v641
    %643 = vdwg.mxu0
    %v648 = vrot.slane %v569, 6
    %v649 = vrot.slane %v571, 6
    %v650 = vrot.slane %v640, 6
    %v651 = vrot.slane %v642, 6
    %v656 = vadd.f32 %v244, %v648
    %v657 = vadd.f32 %v246, %v649
    %v658 = vadd.f32 %v321, %v650
    %v659 = vadd.f32 %v323, %v651
    %v660 = vxor.u32 %v656, 2147483648
    %v661 = vmul.f32 %v660, 1.442695
    %v662 = vpow.pop %v661
    %v663 = vadd.f32 %v662, 1.0
    %v664 = vrcp.pop %v663
    %v665 = vmul.f32 1.0, %v664
    %v666 = vxor.u32 %v657, 2147483648
    %v667 = vmul.f32 %v666, 1.442695
    %v668 = vpow.pop %v667
    %v669 = vadd.f32 %v668, 1.0
    %v670 = vrcp.pop %v669
    %v671 = vmul.f32 1.0, %v670
    %v672 = vtanh.pop %v658
    %v673 = vxor.u32 %v659, 2147483648
    %v674 = vmul.f32 %v673, 1.442695
    %v675 = vpow.pop %v674
    %v676 = vadd.f32 %v675, 1.0
    %v677 = vrcp.pop %v676
    %v678 = vmul.f32 1.0, %v677
    %v680 = vrot.slane %v498, 6
    %v682 = vmul.f32 %v671, %v680
    %v683 = vmul.f32 %v665, %v672
    %v684 = vadd.f32 %v682, %v683
    %v685 = vtanh.pop %v684
    %v686 = vmul.f32 %v678, %v685
    %687 = vst [vmem:[#allocation2] sm:$0xc] %v686
    %v689 = vrot.slane %v686, 2
    %691 = vmatprep.subr.mxu0 %v85
    %692 = vmatpush1.msra.mxu0 %v84
    %693 = vmatprep.subr.mxu0 %v89
    %694 = vmatpush1.msra.mxu0 %v88
    %695 = vmatprep.subr.mxu0 %v93
    %696 = vmatpush1.msra.mxu0 %v92
    %697 = vmatprep.subr.mxu0 %v97
    %698 = vmatpush1.msra.mxu0 %v96
    %699 = vmatprep.subr.mxu0 %v101
    %700 = vmatpush1.msra.mxu0 %v100
    %701 = vmatprep.subr.mxu0 %v105
    %702 = vmatpush1.msra.mxu0 %v104
    %703 = vmatprep.subr.mxu0 %v109
    %704 = vmatpush1.msra.mxu0 %v108
    %705 = vmatprep.subr.mxu0 %v113
    %706 = vmatpush1.msra.mxu0 %v112
    %707 = vmatprep.subr.mxu0 %v117
    %708 = vmatpush1.msra.mxu0 %v116
    %709 = vmatprep.subr.mxu0 %v121
    %710 = vmatpush1.msra.mxu0 %v120
    %711 = vmatprep.subr.mxu0 %v125
    %712 = vmatpush1.msra.mxu0 %v124
    %713 = vmatprep.subr.mxu0 %v129
    %714 = vmatpush1.msra.mxu0 %v128
    %715 = vmatprep.subr.mxu0 %v133
    %716 = vmatpush1.msra.mxu0 %v132
    %717 = vmatprep.subr.mxu0 %v137
    %718 = vmatpush1.msra.mxu0 %v136
    %719 = vmatprep.subr.mxu0 %v141
    %720 = vmatpush1.msra.mxu0 %v140
    %721 = vmatprep.subr.mxu0 %v145
    %722 = vmatpush1.msra.mxu0 %v144
    %723 = vmatprep.subr.mxu0 0.0
    %724 = vmatpush1.msra.mxu0 0.0
    %725 = vmatprep.subr.mxu0 0.0
    %726 = vmatpush1.msra.mxu0 0.0
    %727 = vmatprep.subr.mxu0 0.0
    %728 = vmatpush1.msra.mxu0 0.0
    %729 = vmatprep.subr.mxu0 0.0
    %730 = vmatpush1.msra.mxu0 0.0
    %731 = vmatprep.subr.mxu0 0.0
    %732 = vmatpush1.msra.mxu0 0.0
    %733 = vmatprep.subr.mxu0 0.0
    %734 = vmatpush1.msra.mxu0 0.0
    %735 = vmatprep.subr.mxu0 0.0
    %736 = vmatpush1.msra.mxu0 0.0
    %737 = vmatprep.subr.mxu0 0.0
    %738 = vmatpush1.msra.mxu0 0.0
    %739 = vmatprep.subr.mxu0 0.0
    %740 = vmatpush1.msra.mxu0 0.0
    %741 = vmatprep.subr.mxu0 0.0
    %742 = vmatpush1.msra.mxu0 0.0
    %743 = vmatprep.subr.mxu0 0.0
    %744 = vmatpush1.msra.mxu0 0.0
    %745 = vmatprep.subr.mxu0 0.0
    %746 = vmatpush1.msra.mxu0 0.0
    %747 = vmatprep.subr.mxu0 0.0
    %748 = vmatpush1.msra.mxu0 0.0
    %749 = vmatprep.subr.mxu0 0.0
    %750 = vmatpush1.msra.mxu0 0.0
    %751 = vmatprep.subr.mxu0 0.0
    %752 = vmatpush1.msra.mxu0 0.0
    %753 = vmatprep.subr.mxu0 0.0
    %754 = vmatpush1.msra.mxu0 0.0
    %755 = vmatprep.mubr.f32.mxu0 0.0
    %756 = vmatmul.mubr.f32.gmra.mrb[0].mxu0 %v689
    %v757 = vpop.f32.mrb[0].mxu0
    %v758 = vadd.f32 0.0, %v757
    %v759 = vpop.f32.mrb[0].mxu0
    %v760 = vadd.f32 0.0, %v759
    %761 = vdwg.mxu0
    %762 = vmatprep.subr.mxu0 %v87
    %763 = vmatpush1.msra.mxu0 %v86
    %764 = vmatprep.subr.mxu0 %v91
    %765 = vmatpush1.msra.mxu0 %v90
    %766 = vmatprep.subr.mxu0 %v95
    %767 = vmatpush1.msra.mxu0 %v94
    %768 = vmatprep.subr.mxu0 %v99
    %769 = vmatpush1.msra.mxu0 %v98
    %770 = vmatprep.subr.mxu0 %v103
    %771 = vmatpush1.msra.mxu0 %v102
    %772 = vmatprep.subr.mxu0 %v107
    %773 = vmatpush1.msra.mxu0 %v106
    %774 = vmatprep.subr.mxu0 %v111
    %775 = vmatpush1.msra.mxu0 %v110
    %776 = vmatprep.subr.mxu0 %v115
    %777 = vmatpush1.msra.mxu0 %v114
    %778 = vmatprep.subr.mxu0 %v119
    %779 = vmatpush1.msra.mxu0 %v118
    %780 = vmatprep.subr.mxu0 %v123
    %781 = vmatpush1.msra.mxu0 %v122
    %782 = vmatprep.subr.mxu0 %v127
    %783 = vmatpush1.msra.mxu0 %v126
    %784 = vmatprep.subr.mxu0 %v131
    %785 = vmatpush1.msra.mxu0 %v130
    %786 = vmatprep.subr.mxu0 %v135
    %787 = vmatpush1.msra.mxu0 %v134
    %788 = vmatprep.subr.mxu0 %v139
    %789 = vmatpush1.msra.mxu0 %v138
    %790 = vmatprep.subr.mxu0 %v143
    %791 = vmatpush1.msra.mxu0 %v142
    %792 = vmatprep.subr.mxu0 %v147
    %793 = vmatpush1.msra.mxu0 %v146
    %794 = vmatprep.subr.mxu0 0.0
    %795 = vmatpush1.msra.mxu0 0.0
    %796 = vmatprep.subr.mxu0 0.0
    %797 = vmatpush1.msra.mxu0 0.0
    %798 = vmatprep.subr.mxu0 0.0
    %799 = vmatpush1.msra.mxu0 0.0
    %800 = vmatprep.subr.mxu0 0.0
    %801 = vmatpush1.msra.mxu0 0.0
    %802 = vmatprep.subr.mxu0 0.0
    %803 = vmatpush1.msra.mxu0 0.0
    %804 = vmatprep.subr.mxu0 0.0
    %805 = vmatpush1.msra.mxu0 0.0
    %806 = vmatprep.subr.mxu0 0.0
    %807 = vmatpush1.msra.mxu0 0.0
    %808 = vmatprep.subr.mxu0 0.0
    %809 = vmatpush1.msra.mxu0 0.0
    %810 = vmatprep.subr.mxu0 0.0
    %811 = vmatpush1.msra.mxu0 0.0
    %812 = vmatprep.subr.mxu0 0.0
    %813 = vmatpush1.msra.mxu0 0.0
    %814 = vmatprep.subr.mxu0 0.0
    %815 = vmatpush1.msra.mxu0 0.0
    %816 = vmatprep.subr.mxu0 0.0
    %817 = vmatpush1.msra.mxu0 0.0
    %818 = vmatprep.subr.mxu0 0.0
    %819 = vmatpush1.msra.mxu0 0.0
    %820 = vmatprep.subr.mxu0 0.0
    %821 = vmatpush1.msra.mxu0 0.0
    %822 = vmatprep.subr.mxu0 0.0
    %823 = vmatpush1.msra.mxu0 0.0
    %824 = vmatprep.subr.mxu0 0.0
    %825 = vmatpush1.msra.mxu0 0.0
    %826 = vmatprep.mubr.f32.mxu0 0.0
    %827 = vmatmul.mubr.f32.gmra.mrb[0].mxu0 %v689
    %v828 = vpop.f32.mrb[0].mxu0
    %v829 = vadd.f32 0.0, %v828
    %v830 = vpop.f32.mrb[0].mxu0
    %v831 = vadd.f32 0.0, %v830
    %832 = vdwg.mxu0
    %v837 = vrot.slane %v758, 4
    %v838 = vrot.slane %v760, 4
    %v839 = vrot.slane %v829, 4
    %v840 = vrot.slane %v831, 4
    %v845 = vadd.f32 %v244, %v837
    %v846 = vadd.f32 %v246, %v838
    %v847 = vadd.f32 %v321, %v839
    %v848 = vadd.f32 %v323, %v840
    %v849 = vxor.u32 %v845, 2147483648
    %v850 = vmul.f32 %v849, 1.442695
    %v851 = vpow.pop %v850
    %v852 = vadd.f32 %v851, 1.0
    %v853 = vrcp.pop %v852
    %v854 = vmul.f32 1.0, %v853
    %v855 = vxor.u32 %v846, 2147483648
    %v856 = vmul.f32 %v855, 1.442695
    %v857 = vpow.pop %v856
    %v858 = vadd.f32 %v857, 1.0
    %v859 = vrcp.pop %v858
    %v860 = vmul.f32 1.0, %v859
    %v861 = vtanh.pop %v847
    %v862 = vxor.u32 %v848, 2147483648
    %v863 = vmul.f32 %v862, 1.442695
    %v864 = vpow.pop %v863
    %v865 = vadd.f32 %v864, 1.0
    %v866 = vrcp.pop %v865
    %v867 = vmul.f32 1.0, %v866
    %v869 = vrot.slane %v684, 6
    %v871 = vmul.f32 %v860, %v869
    %v872 = vmul.f32 %v854, %v861
    %v873 = vadd.f32 %v871, %v872
    %v874 = vtanh.pop %v873
    %v875 = vmul.f32 %v867, %v874
    %876 = vst [vmem:[#allocation2] sm:$0x30] %v875
    %v878 = vrot.slane %v875, 4
    %880 = vmatprep.subr.mxu0 %v85
    %881 = vmatpush1.msra.mxu0 %v84
    %882 = vmatprep.subr.mxu0 %v89
    %883 = vmatpush1.msra.mxu0 %v88
    %884 = vmatprep.subr.mxu0 %v93
    %885 = vmatpush1.msra.mxu0 %v92
    %886 = vmatprep.subr.mxu0 %v97
    %887 = vmatpush1.msra.mxu0 %v96
    %888 = vmatprep.subr.mxu0 %v101
    %889 = vmatpush1.msra.mxu0 %v100
    %890 = vmatprep.subr.mxu0 %v105
    %891 = vmatpush1.msra.mxu0 %v104
    %892 = vmatprep.subr.mxu0 %v109
    %893 = vmatpush1.msra.mxu0 %v108
    %894 = vmatprep.subr.mxu0 %v113
    %895 = vmatpush1.msra.mxu0 %v112
    %896 = vmatprep.subr.mxu0 %v117
    %897 = vmatpush1.msra.mxu0 %v116
    %898 = vmatprep.subr.mxu0 %v121
    %899 = vmatpush1.msra.mxu0 %v120
    %900 = vmatprep.subr.mxu0 %v125
    %901 = vmatpush1.msra.mxu0 %v124
    %902 = vmatprep.subr.mxu0 %v129
    %903 = vmatpush1.msra.mxu0 %v128
    %904 = vmatprep.subr.mxu0 %v133
    %905 = vmatpush1.msra.mxu0 %v132
    %906 = vmatprep.subr.mxu0 %v137
    %907 = vmatpush1.msra.mxu0 %v136
    %908 = vmatprep.subr.mxu0 %v141
    %909 = vmatpush1.msra.mxu0 %v140
    %910 = vmatprep.subr.mxu0 %v145
    %911 = vmatpush1.msra.mxu0 %v144
    %912 = vmatprep.subr.mxu0 0.0
    %913 = vmatpush1.msra.mxu0 0.0
    %914 = vmatprep.subr.mxu0 0.0
    %915 = vmatpush1.msra.mxu0 0.0
    %916 = vmatprep.subr.mxu0 0.0
    %917 = vmatpush1.msra.mxu0 0.0
    %918 = vmatprep.subr.mxu0 0.0
    %919 = vmatpush1.msra.mxu0 0.0
    %920 = vmatprep.subr.mxu0 0.0
    %921 = vmatpush1.msra.mxu0 0.0
    %922 = vmatprep.subr.mxu0 0.0
    %923 = vmatpush1.msra.mxu0 0.0
    %924 = vmatprep.subr.mxu0 0.0
    %925 = vmatpush1.msra.mxu0 0.0
    %926 = vmatprep.subr.mxu0 0.0
    %927 = vmatpush1.msra.mxu0 0.0
    %928 = vmatprep.subr.mxu0 0.0
    %929 = vmatpush1.msra.mxu0 0.0
    %930 = vmatprep.subr.mxu0 0.0
    %931 = vmatpush1.msra.mxu0 0.0
    %932 = vmatprep.subr.mxu0 0.0
    %933 = vmatpush1.msra.mxu0 0.0
    %934 = vmatprep.subr.mxu0 0.0
    %935 = vmatpush1.msra.mxu0 0.0
    %936 = vmatprep.subr.mxu0 0.0
    %937 = vmatpush1.msra.mxu0 0.0
    %938 = vmatprep.subr.mxu0 0.0
    %939 = vmatpush1.msra.mxu0 0.0
    %940 = vmatprep.subr.mxu0 0.0
    %941 = vmatpush1.msra.mxu0 0.0
    %942 = vmatprep.subr.mxu0 0.0
    %943 = vmatpush1.msra.mxu0 0.0
    %944 = vmatprep.mubr.f32.mxu0 0.0
    %945 = vmatmul.mubr.f32.gmra.mrb[0].mxu0 %v878
    %v946 = vpop.f32.mrb[0].mxu0
    %v947 = vadd.f32 0.0, %v946
    %v948 = vpop.f32.mrb[0].mxu0
    %v949 = vadd.f32 0.0, %v948
    %950 = vdwg.mxu0
    %951 = vmatprep.subr.mxu0 %v87
    %952 = vmatpush1.msra.mxu0 %v86
    %953 = vmatprep.subr.mxu0 %v91
    %954 = vmatpush1.msra.mxu0 %v90
    %955 = vmatprep.subr.mxu0 %v95
    %956 = vmatpush1.msra.mxu0 %v94
    %957 = vmatprep.subr.mxu0 %v99
    %958 = vmatpush1.msra.mxu0 %v98
    %959 = vmatprep.subr.mxu0 %v103
    %960 = vmatpush1.msra.mxu0 %v102
    %961 = vmatprep.subr.mxu0 %v107
    %962 = vmatpush1.msra.mxu0 %v106
    %963 = vmatprep.subr.mxu0 %v111
    %964 = vmatpush1.msra.mxu0 %v110
    %965 = vmatprep.subr.mxu0 %v115
    %966 = vmatpush1.msra.mxu0 %v114
    %967 = vmatprep.subr.mxu0 %v119
    %968 = vmatpush1.msra.mxu0 %v118
    %969 = vmatprep.subr.mxu0 %v123
    %970 = vmatpush1.msra.mxu0 %v122
    %971 = vmatprep.subr.mxu0 %v127
    %972 = vmatpush1.msra.mxu0 %v126
    %973 = vmatprep.subr.mxu0 %v131
    %974 = vmatpush1.msra.mxu0 %v130
    %975 = vmatprep.subr.mxu0 %v135
    %976 = vmatpush1.msra.mxu0 %v134
    %977 = vmatprep.subr.mxu0 %v139
    %978 = vmatpush1.msra.mxu0 %v138
    %979 = vmatprep.subr.mxu0 %v143
    %980 = vmatpush1.msra.mxu0 %v142
    %981 = vmatprep.subr.mxu0 %v147
    %982 = vmatpush1.msra.mxu0 %v146
    %983 = vmatprep.subr.mxu0 0.0
    %984 = vmatpush1.msra.mxu0 0.0
    %985 = vmatprep.subr.mxu0 0.0
    %986 = vmatpush1.msra.mxu0 0.0
    %987 = vmatprep.subr.mxu0 0.0
    %988 = vmatpush1.msra.mxu0 0.0
    %989 = vmatprep.subr.mxu0 0.0
    %990 = vmatpush1.msra.mxu0 0.0
    %991 = vmatprep.subr.mxu0 0.0
    %992 = vmatpush1.msra.mxu0 0.0
    %993 = vmatprep.subr.mxu0 0.0
    %994 = vmatpush1.msra.mxu0 0.0
    %995 = vmatprep.subr.mxu0 0.0
    %996 = vmatpush1.msra.mxu0 0.0
    %997 = vmatprep.subr.mxu0 0.0
    %998 = vmatpush1.msra.mxu0 0.0
    %999 = vmatprep.subr.mxu0 0.0
    %1000 = vmatpush1.msra.mxu0 0.0
    %1001 = vmatprep.subr.mxu0 0.0
    %1002 = vmatpush1.msra.mxu0 0.0
    %1003 = vmatprep.subr.mxu0 0.0
    %1004 = vmatpush1.msra.mxu0 0.0
    %1005 = vmatprep.subr.mxu0 0.0
    %1006 = vmatpush1.msra.mxu0 0.0
    %1007 = vmatprep.subr.mxu0 0.0
    %1008 = vmatpush1.msra.mxu0 0.0
    %1009 = vmatprep.subr.mxu0 0.0
    %1010 = vmatpush1.msra.mxu0 0.0
    %1011 = vmatprep.subr.mxu0 0.0
    %1012 = vmatpush1.msra.mxu0 0.0
    %1013 = vmatprep.subr.mxu0 0.0
    %1014 = vmatpush1.msra.mxu0 0.0
    %1015 = vmatprep.mubr.f32.mxu0 0.0
    %1016 = vmatmul.mubr.f32.gmra.mrb[0].mxu0 %v878
    %v1017 = vpop.f32.mrb[0].mxu0
    %v1018 = vadd.f32 0.0, %v1017
    %v1019 = vpop.f32.mrb[0].mxu0
    %v1020 = vadd.f32 0.0, %v1019
    %1021 = vdwg.mxu0
    %v1026 = vrot.slane %v947, 2
    %v1027 = vrot.slane %v949, 2
    %v1028 = vrot.slane %v1018, 2
    %v1029 = vrot.slane %v1020, 2
    %v1034 = vadd.f32 %v244, %v1026
    %v1035 = vadd.f32 %v246, %v1027
    %v1036 = vadd.f32 %v321, %v1028
    %v1037 = vadd.f32 %v323, %v1029
    %v1038 = vxor.u32 %v1034, 2147483648
    %v1039 = vmul.f32 %v1038, 1.442695
    %v1040 = vpow.pop %v1039
    %v1041 = vadd.f32 %v1040, 1.0
    %v1042 = vrcp.pop %v1041
    %v1043 = vmul.f32 1.0, %v1042
    %v1044 = vxor.u32 %v1035, 2147483648
    %v1045 = vmul.f32 %v1044, 1.442695
    %v1046 = vpow.pop %v1045
    %v1047 = vadd.f32 %v1046, 1.0
    %v1048 = vrcp.pop %v1047
    %v1049 = vmul.f32 1.0, %v1048
    %v1050 = vtanh.pop %v1036
    %v1051 = vxor.u32 %v1037, 2147483648
    %v1052 = vmul.f32 %v1051, 1.442695
    %v1053 = vpow.pop %v1052
    %v1054 = vadd.f32 %v1053, 1.0
    %v1055 = vrcp.pop %v1054
    %v1056 = vmul.f32 1.0, %v1055
    %v1058 = vrot.slane %v873, 6
    %v1060 = vmul.f32 %v1049, %v1058
    %v1061 = vmul.f32 %v1043, %v1050
    %v1062 = vadd.f32 %v1060, %v1061
    %v1063 = vtanh.pop %v1062
    %v1064 = vmul.f32 %v1056, %v1063
    %1065 = vst [vmem:[#allocation2] sm:$0xc0] %v1064
    %v1067 = vrot.slane %v1064, 6
    %1069 = vmatprep.subr.mxu0 %v85
    %1070 = vmatpush1.msra.mxu0 %v84
    %1071 = vmatprep.subr.mxu0 %v89
    %1072 = vmatpush1.msra.mxu0 %v88
    %1073 = vmatprep.subr.mxu0 %v93
    %1074 = vmatpush1.msra.mxu0 %v92
    %1075 = vmatprep.subr.mxu0 %v97
    %1076 = vmatpush1.msra.mxu0 %v96
    %1077 = vmatprep.subr.mxu0 %v101
    %1078 = vmatpush1.msra.mxu0 %v100
    %1079 = vmatprep.subr.mxu0 %v105
    %1080 = vmatpush1.msra.mxu0 %v104
    %1081 = vmatprep.subr.mxu0 %v109
    %1082 = vmatpush1.msra.mxu0 %v108
    %1083 = vmatprep.subr.mxu0 %v113
    %1084 = vmatpush1.msra.mxu0 %v112
    %1085 = vmatprep.subr.mxu0 %v117
    %1086 = vmatpush1.msra.mxu0 %v116
    %1087 = vmatprep.subr.mxu0 %v121
    %1088 = vmatpush1.msra.mxu0 %v120
    %1089 = vmatprep.subr.mxu0 %v125
    %1090 = vmatpush1.msra.mxu0 %v124
    %1091 = vmatprep.subr.mxu0 %v129
    %1092 = vmatpush1.msra.mxu0 %v128
    %1093 = vmatprep.subr.mxu0 %v133
    %1094 = vmatpush1.msra.mxu0 %v132
    %1095 = vmatprep.subr.mxu0 %v137
    %1096 = vmatpush1.msra.mxu0 %v136
    %1097 = vmatprep.subr.mxu0 %v141
    %1098 = vmatpush1.msra.mxu0 %v140
    %1099 = vmatprep.subr.mxu0 %v145
    %1100 = vmatpush1.msra.mxu0 %v144
    %1101 = vmatprep.subr.mxu0 0.0
    %1102 = vmatpush1.msra.mxu0 0.0
    %1103 = vmatprep.subr.mxu0 0.0
    %1104 = vmatpush1.msra.mxu0 0.0
    %1105 = vmatprep.subr.mxu0 0.0
    %1106 = vmatpush1.msra.mxu0 0.0
    %1107 = vmatprep.subr.mxu0 0.0
    %1108 = vmatpush1.msra.mxu0 0.0
    %1109 = vmatprep.subr.mxu0 0.0
    %1110 = vmatpush1.msra.mxu0 0.0
    %1111 = vmatprep.subr.mxu0 0.0
    %1112 = vmatpush1.msra.mxu0 0.0
    %1113 = vmatprep.subr.mxu0 0.0
    %1114 = vmatpush1.msra.mxu0 0.0
    %1115 = vmatprep.subr.mxu0 0.0
    %1116 = vmatpush1.msra.mxu0 0.0
    %1117 = vmatprep.subr.mxu0 0.0
    %1118 = vmatpush1.msra.mxu0 0.0
    %1119 = vmatprep.subr.mxu0 0.0
    %1120 = vmatpush1.msra.mxu0 0.0
    %1121 = vmatprep.subr.mxu0 0.0
    %1122 = vmatpush1.msra.mxu0 0.0
    %1123 = vmatprep.subr.mxu0 0.0
    %1124 = vmatpush1.msra.mxu0 0.0
    %1125 = vmatprep.subr.mxu0 0.0
    %1126 = vmatpush1.msra.mxu0 0.0
    %1127 = vmatprep.subr.mxu0 0.0
    %1128 = vmatpush1.msra.mxu0 0.0
    %1129 = vmatprep.subr.mxu0 0.0
    %1130 = vmatpush1.msra.mxu0 0.0
    %1131 = vmatprep.subr.mxu0 0.0
    %1132 = vmatpush1.msra.mxu0 0.0
    %1133 = vmatprep.mubr.f32.mxu0 0.0
    %1134 = vmatmul.mubr.f32.gmra.mrb[0].mxu0 %v1067
    %v1135 = vpop.f32.mrb[0].mxu0
    %v1136 = vadd.f32 0.0, %v1135
    %v1137 = vpop.f32.mrb[0].mxu0
    %v1138 = vadd.f32 0.0, %v1137
    %1139 = vdwg.mxu0
    %1140 = vmatprep.subr.mxu0 %v87
    %1141 = vmatpush1.msra.mxu0 %v86
    %1142 = vmatprep.subr.mxu0 %v91
    %1143 = vmatpush1.msra.mxu0 %v90
    %1144 = vmatprep.subr.mxu0 %v95
    %1145 = vmatpush1.msra.mxu0 %v94
    %1146 = vmatprep.subr.mxu0 %v99
    %1147 = vmatpush1.msra.mxu0 %v98
    %1148 = vmatprep.subr.mxu0 %v103
    %1149 = vmatpush1.msra.mxu0 %v102
    %1150 = vmatprep.subr.mxu0 %v107
    %1151 = vmatpush1.msra.mxu0 %v106
    %1152 = vmatprep.subr.mxu0 %v111
    %1153 = vmatpush1.msra.mxu0 %v110
    %1154 = vmatprep.subr.mxu0 %v115
    %1155 = vmatpush1.msra.mxu0 %v114
    %1156 = vmatprep.subr.mxu0 %v119
    %1157 = vmatpush1.msra.mxu0 %v118
    %1158 = vmatprep.subr.mxu0 %v123
    %1159 = vmatpush1.msra.mxu0 %v122
    %1160 = vmatprep.subr.mxu0 %v127
    %1161 = vmatpush1.msra.mxu0 %v126
    %1162 = vmatprep.subr.mxu0 %v131
    %1163 = vmatpush1.msra.mxu0 %v130
    %1164 = vmatprep.subr.mxu0 %v135
    %1165 = vmatpush1.msra.mxu0 %v134
    %1166 = vmatprep.subr.mxu0 %v139
    %1167 = vmatpush1.msra.mxu0 %v138
    %1168 = vmatprep.subr.mxu0 %v143
    %1169 = vmatpush1.msra.mxu0 %v142
    %1170 = vmatprep.subr.mxu0 %v147
    %1171 = vmatpush1.msra.mxu0 %v146
    %1172 = vmatprep.subr.mxu0 0.0
    %1173 = vmatpush1.msra.mxu0 0.0
    %1174 = vmatprep.subr.mxu0 0.0
    %1175 = vmatpush1.msra.mxu0 0.0
    %1176 = vmatprep.subr.mxu0 0.0
    %1177 = vmatpush1.msra.mxu0 0.0
    %1178 = vmatprep.subr.mxu0 0.0
    %1179 = vmatpush1.msra.mxu0 0.0
    %1180 = vmatprep.subr.mxu0 0.0
    %1181 = vmatpush1.msra.mxu0 0.0
    %1182 = vmatprep.subr.mxu0 0.0
    %1183 = vmatpush1.msra.mxu0 0.0
    %1184 = vmatprep.subr.mxu0 0.0
    %1185 = vmatpush1.msra.mxu0 0.0
    %1186 = vmatprep.subr.mxu0 0.0
    %1187 = vmatpush1.msra.mxu0 0.0
    %1188 = vmatprep.subr.mxu0 0.0
    %1189 = vmatpush1.msra.mxu0 0.0
    %1190 = vmatprep.subr.mxu0 0.0
    %1191 = vmatpush1.msra.mxu0 0.0
    %1192 = vmatprep.subr.mxu0 0.0
    %1193 = vmatpush1.msra.mxu0 0.0
    %1194 = vmatprep.subr.mxu0 0.0
    %1195 = vmatpush1.msra.mxu0 0.0
    %1196 = vmatprep.subr.mxu0 0.0
    %1197 = vmatpush1.msra.mxu0 0.0
    %1198 = vmatprep.subr.mxu0 0.0
    %1199 = vmatpush1.msra.mxu0 0.0
    %1200 = vmatprep.subr.mxu0 0.0
    %1201 = vmatpush1.msra.mxu0 0.0
    %1202 = vmatprep.subr.mxu0 0.0
    %1203 = vmatpush1.msra.mxu0 0.0
    %1204 = vmatprep.mubr.f32.mxu0 0.0
    %1205 = vmatmul.mubr.f32.gmra.mrb[0].mxu0 %v1067
    %v1206 = vpop.f32.mrb[0].mxu0
    %v1207 = vadd.f32 0.0, %v1206
    %v1208 = vpop.f32.mrb[0].mxu0
    %v1209 = vadd.f32 0.0, %v1208
    %1210 = vdwg.mxu0
    %v1211 = vadd.f32 %v250, %v1136
    %v1212 = vadd.f32 %v252, %v1138
    %v1213 = vadd.f32 %v327, %v1207
    %v1214 = vadd.f32 %v329, %v1209
    %v1215 = vxor.u32 %v1211, 2147483648
    %v1216 = vmul.f32 %v1215, 1.442695
    %v1217 = vpow.pop %v1216
    %v1218 = vadd.f32 %v1217, 1.0
    %v1219 = vrcp.pop %v1218
    %v1220 = vmul.f32 1.0, %v1219
    %v1221 = vxor.u32 %v1212, 2147483648
    %v1222 = vmul.f32 %v1221, 1.442695
    %v1223 = vpow.pop %v1222
    %v1224 = vadd.f32 %v1223, 1.0
    %v1225 = vrcp.pop %v1224
    %v1226 = vmul.f32 1.0, %v1225
    %v1227 = vtanh.pop %v1213
    %v1228 = vxor.u32 %v1214, 2147483648
    %v1229 = vmul.f32 %v1228, 1.442695
    %v1230 = vpow.pop %v1229
    %v1231 = vadd.f32 %v1230, 1.0
    %v1232 = vrcp.pop %v1231
    %v1233 = vmul.f32 1.0, %v1232
    %v1235 = vrot.slane %v1062, 6
    %v1237 = vmul.f32 %v1226, %v1235
    %v1238 = vmul.f32 %v1220, %v1227
    %v1239 = vadd.f32 %v1237, %v1238
    %v1240 = vtanh.pop %v1239
    %v1241 = vmul.f32 %v1233, %v1240
    %1242 = vst [vmem:[#allocation2 + $0x8] sm:$0x3] %v1241
    %1243 = vmatprep.subr.mxu0 %v85
    %1244 = vmatpush1.msra.mxu0 %v84
    %1245 = vmatprep.subr.mxu0 %v89
    %1246 = vmatpush1.msra.mxu0 %v88
    %1247 = vmatprep.subr.mxu0 %v93
    %1248 = vmatpush1.msra.mxu0 %v92
    %1249 = vmatprep.subr.mxu0 %v97
    %1250 = vmatpush1.msra.mxu0 %v96
    %1251 = vmatprep.subr.mxu0 %v101
    %1252 = vmatpush1.msra.mxu0 %v100
    %1253 = vmatprep.subr.mxu0 %v105
    %1254 = vmatpush1.msra.mxu0 %v104
    %1255 = vmatprep.subr.mxu0 %v109
    %1256 = vmatpush1.msra.mxu0 %v108
    %1257 = vmatprep.subr.mxu0 %v113
    %1258 = vmatpush1.msra.mxu0 %v112
    %1259 = vmatprep.subr.mxu0 %v117
    %1260 = vmatpush1.msra.mxu0 %v116
    %1261 = vmatprep.subr.mxu0 %v121
    %1262 = vmatpush1.msra.mxu0 %v120
    %1263 = vmatprep.subr.mxu0 %v125
    %1264 = vmatpush1.msra.mxu0 %v124
    %1265 = vmatprep.subr.mxu0 %v129
    %1266 = vmatpush1.msra.mxu0 %v128
    %1267 = vmatprep.subr.mxu0 %v133
    %1268 = vmatpush1.msra.mxu0 %v132
    %1269 = vmatprep.subr.mxu0 %v137
    %1270 = vmatpush1.msra.mxu0 %v136
    %1271 = vmatprep.subr.mxu0 %v141
    %1272 = vmatpush1.msra.mxu0 %v140
    %1273 = vmatprep.subr.mxu0 %v145
    %1274 = vmatpush1.msra.mxu0 %v144
    %1275 = vmatprep.subr.mxu0 0.0
    %1276 = vmatpush1.msra.mxu0 0.0
    %1277 = vmatprep.subr.mxu0 0.0
    %1278 = vmatpush1.msra.mxu0 0.0
    %1279 = vmatprep.subr.mxu0 0.0
    %1280 = vmatpush1.msra.mxu0 0.0
    %1281 = vmatprep.subr.mxu0 0.0
    %1282 = vmatpush1.msra.mxu0 0.0
    %1283 = vmatprep.subr.mxu0 0.0
    %1284 = vmatpush1.msra.mxu0 0.0
    %1285 = vmatprep.subr.mxu0 0.0
    %1286 = vmatpush1.msra.mxu0 0.0
    %1287 = vmatprep.subr.mxu0 0.0
    %1288 = vmatpush1.msra.mxu0 0.0
    %1289 = vmatprep.subr.mxu0 0.0
    %1290 = vmatpush1.msra.mxu0 0.0
    %1291 = vmatprep.subr.mxu0 0.0
    %1292 = vmatpush1.msra.mxu0 0.0
    %1293 = vmatprep.subr.mxu0 0.0
    %1294 = vmatpush1.msra.mxu0 0.0
    %1295 = vmatprep.subr.mxu0 0.0
    %1296 = vmatpush1.msra.mxu0 0.0
    %1297 = vmatprep.subr.mxu0 0.0
    %1298 = vmatpush1.msra.mxu0 0.0
    %1299 = vmatprep.subr.mxu0 0.0
    %1300 = vmatpush1.msra.mxu0 0.0
    %1301 = vmatprep.subr.mxu0 0.0
    %1302 = vmatpush1.msra.mxu0 0.0
    %1303 = vmatprep.subr.mxu0 0.0
    %1304 = vmatpush1.msra.mxu0 0.0
    %1305 = vmatprep.subr.mxu0 0.0
    %1306 = vmatpush1.msra.mxu0 0.0
    %1307 = vmatprep.mubr.f32.mxu0 0.0
    %1308 = vmatmul.mubr.f32.gmra.mrb[0].mxu0 %v1241
    %v1309 = vpop.f32.mrb[0].mxu0
    %v1310 = vadd.f32 0.0, %v1309
    %v1311 = vpop.f32.mrb[0].mxu0
    %v1312 = vadd.f32 0.0, %v1311
    %1313 = vdwg.mxu0
    %1314 = vmatprep.subr.mxu0 %v87
    %1315 = vmatpush1.msra.mxu0 %v86
    %1316 = vmatprep.subr.mxu0 %v91
    %1317 = vmatpush1.msra.mxu0 %v90
    %1318 = vmatprep.subr.mxu0 %v95
    %1319 = vmatpush1.msra.mxu0 %v94
    %1320 = vmatprep.subr.mxu0 %v99
    %1321 = vmatpush1.msra.mxu0 %v98
    %1322 = vmatprep.subr.mxu0 %v103
    %1323 = vmatpush1.msra.mxu0 %v102
    %1324 = vmatprep.subr.mxu0 %v107
    %1325 = vmatpush1.msra.mxu0 %v106
    %1326 = vmatprep.subr.mxu0 %v111
    %1327 = vmatpush1.msra.mxu0 %v110
    %1328 = vmatprep.subr.mxu0 %v115
    %1329 = vmatpush1.msra.mxu0 %v114
    %1330 = vmatprep.subr.mxu0 %v119
    %1331 = vmatpush1.msra.mxu0 %v118
    %1332 = vmatprep.subr.mxu0 %v123
    %1333 = vmatpush1.msra.mxu0 %v122
    %1334 = vmatprep.subr.mxu0 %v127
    %1335 = vmatpush1.msra.mxu0 %v126
    %1336 = vmatprep.subr.mxu0 %v131
    %1337 = vmatpush1.msra.mxu0 %v130
    %1338 = vmatprep.subr.mxu0 %v135
    %1339 = vmatpush1.msra.mxu0 %v134
    %1340 = vmatprep.subr.mxu0 %v139
    %1341 = vmatpush1.msra.mxu0 %v138
    %1342 = vmatprep.subr.mxu0 %v143
    %1343 = vmatpush1.msra.mxu0 %v142
    %1344 = vmatprep.subr.mxu0 %v147
    %1345 = vmatpush1.msra.mxu0 %v146
    %1346 = vmatprep.subr.mxu0 0.0
    %1347 = vmatpush1.msra.mxu0 0.0
    %1348 = vmatprep.subr.mxu0 0.0
    %1349 = vmatpush1.msra.mxu0 0.0
    %1350 = vmatprep.subr.mxu0 0.0
    %1351 = vmatpush1.msra.mxu0 0.0
    %1352 = vmatprep.subr.mxu0 0.0
    %1353 = vmatpush1.msra.mxu0 0.0
    %1354 = vmatprep.subr.mxu0 0.0
    %1355 = vmatpush1.msra.mxu0 0.0
    %1356 = vmatprep.subr.mxu0 0.0
    %1357 = vmatpush1.msra.mxu0 0.0
    %1358 = vmatprep.subr.mxu0 0.0
    %1359 = vmatpush1.msra.mxu0 0.0
    %1360 = vmatprep.subr.mxu0 0.0
    %1361 = vmatpush1.msra.mxu0 0.0
    %1362 = vmatprep.subr.mxu0 0.0
    %1363 = vmatpush1.msra.mxu0 0.0
    %1364 = vmatprep.subr.mxu0 0.0
    %1365 = vmatpush1.msra.mxu0 0.0
    %1366 = vmatprep.subr.mxu0 0.0
    %1367 = vmatpush1.msra.mxu0 0.0
    %1368 = vmatprep.subr.mxu0 0.0
    %1369 = vmatpush1.msra.mxu0 0.0
    %1370 = vmatprep.subr.mxu0 0.0
    %1371 = vmatpush1.msra.mxu0 0.0
    %1372 = vmatprep.subr.mxu0 0.0
    %1373 = vmatpush1.msra.mxu0 0.0
    %1374 = vmatprep.subr.mxu0 0.0
    %1375 = vmatpush1.msra.mxu0 0.0
    %1376 = vmatprep.subr.mxu0 0.0
    %1377 = vmatpush1.msra.mxu0 0.0
    %1378 = vmatprep.mubr.f32.mxu0 0.0
    %1379 = vmatmul.mubr.f32.gmra.mrb[0].mxu0 %v1241
    %v1380 = vpop.f32.mrb[0].mxu0
    %v1381 = vadd.f32 0.0, %v1380
    %v1382 = vpop.f32.mrb[0].mxu0
    %v1383 = vadd.f32 0.0, %v1382
    %1384 = vdwg.mxu0
    %v1389 = vrot.slane %v1310, 6
    %v1390 = vrot.slane %v1312, 6
    %v1391 = vrot.slane %v1381, 6
    %v1392 = vrot.slane %v1383, 6
    %v1397 = vadd.f32 %v250, %v1389
    %v1398 = vadd.f32 %v252, %v1390
    %v1399 = vadd.f32 %v327, %v1391
    %v1400 = vadd.f32 %v329, %v1392
    %v1401 = vxor.u32 %v1397, 2147483648
    %v1402 = vmul.f32 %v1401, 1.442695
    %v1403 = vpow.pop %v1402
    %v1404 = vadd.f32 %v1403, 1.0
    %v1405 = vrcp.pop %v1404
    %v1406 = vmul.f32 1.0, %v1405
    %v1407 = vxor.u32 %v1398, 2147483648
    %v1408 = vmul.f32 %v1407, 1.442695
    %v1409 = vpow.pop %v1408
    %v1410 = vadd.f32 %v1409, 1.0
    %v1411 = vrcp.pop %v1410
    %v1412 = vmul.f32 1.0, %v1411
    %v1413 = vtanh.pop %v1399
    %v1414 = vxor.u32 %v1400, 2147483648
    %v1415 = vmul.f32 %v1414, 1.442695
    %v1416 = vpow.pop %v1415
    %v1417 = vadd.f32 %v1416, 1.0
    %v1418 = vrcp.pop %v1417
    %v1419 = vmul.f32 1.0, %v1418
    %v1421 = vrot.slane %v1239, 6
    %v1423 = vmul.f32 %v1412, %v1421
    %v1424 = vmul.f32 %v1406, %v1413
    %v1425 = vadd.f32 %v1423, %v1424
    %v1426 = vtanh.pop %v1425
    %v1427 = vmul.f32 %v1419, %v1426
    %1428 = vst [vmem:[#allocation2 + $0x8] sm:$0xc] %v1427
    %v1430 = vrot.slane %v1427, 2
    %1432 = vmatprep.subr.mxu0 %v85
    %1433 = vmatpush1.msra.mxu0 %v84
    %1434 = vmatprep.subr.mxu0 %v89
    %1435 = vmatpush1.msra.mxu0 %v88
    %1436 = vmatprep.subr.mxu0 %v93
    %1437 = vmatpush1.msra.mxu0 %v92
    %1438 = vmatprep.subr.mxu0 %v97
    %1439 = vmatpush1.msra.mxu0 %v96
    %1440 = vmatprep.subr.mxu0 %v101
    %1441 = vmatpush1.msra.mxu0 %v100
    %1442 = vmatprep.subr.mxu0 %v105
    %1443 = vmatpush1.msra.mxu0 %v104
    %1444 = vmatprep.subr.mxu0 %v109
    %1445 = vmatpush1.msra.mxu0 %v108
    %1446 = vmatprep.subr.mxu0 %v113
    %1447 = vmatpush1.msra.mxu0 %v112
    %1448 = vmatprep.subr.mxu0 %v117
    %1449 = vmatpush1.msra.mxu0 %v116
    %1450 = vmatprep.subr.mxu0 %v121
    %1451 = vmatpush1.msra.mxu0 %v120
    %1452 = vmatprep.subr.mxu0 %v125
    %1453 = vmatpush1.msra.mxu0 %v124
    %1454 = vmatprep.subr.mxu0 %v129
    %1455 = vmatpush1.msra.mxu0 %v128
    %1456 = vmatprep.subr.mxu0 %v133
    %1457 = vmatpush1.msra.mxu0 %v132
    %1458 = vmatprep.subr.mxu0 %v137
    %1459 = vmatpush1.msra.mxu0 %v136
    %1460 = vmatprep.subr.mxu0 %v141
    %1461 = vmatpush1.msra.mxu0 %v140
    %1462 = vmatprep.subr.mxu0 %v145
    %1463 = vmatpush1.msra.mxu0 %v144
    %1464 = vmatprep.subr.mxu0 0.0
    %1465 = vmatpush1.msra.mxu0 0.0
    %1466 = vmatprep.subr.mxu0 0.0
    %1467 = vmatpush1.msra.mxu0 0.0
    %1468 = vmatprep.subr.mxu0 0.0
    %1469 = vmatpush1.msra.mxu0 0.0
    %1470 = vmatprep.subr.mxu0 0.0
    %1471 = vmatpush1.msra.mxu0 0.0
    %1472 = vmatprep.subr.mxu0 0.0
    %1473 = vmatpush1.msra.mxu0 0.0
    %1474 = vmatprep.subr.mxu0 0.0
    %1475 = vmatpush1.msra.mxu0 0.0
    %1476 = vmatprep.subr.mxu0 0.0
    %1477 = vmatpush1.msra.mxu0 0.0
    %1478 = vmatprep.subr.mxu0 0.0
    %1479 = vmatpush1.msra.mxu0 0.0
    %1480 = vmatprep.subr.mxu0 0.0
    %1481 = vmatpush1.msra.mxu0 0.0
    %1482 = vmatprep.subr.mxu0 0.0
    %1483 = vmatpush1.msra.mxu0 0.0
    %1484 = vmatprep.subr.mxu0 0.0
    %1485 = vmatpush1.msra.mxu0 0.0
    %1486 = vmatprep.subr.mxu0 0.0
    %1487 = vmatpush1.msra.mxu0 0.0
    %1488 = vmatprep.subr.mxu0 0.0
    %1489 = vmatpush1.msra.mxu0 0.0
    %1490 = vmatprep.subr.mxu0 0.0
    %1491 = vmatpush1.msra.mxu0 0.0
    %1492 = vmatprep.subr.mxu0 0.0
    %1493 = vmatpush1.msra.mxu0 0.0
    %1494 = vmatprep.subr.mxu0 0.0
    %1495 = vmatpush1.msra.mxu0 0.0
    %1496 = vmatprep.mubr.f32.mxu0 0.0
    %1497 = vmatmul.mubr.f32.gmra.mrb[0].mxu0 %v1430
    %v1498 = vpop.f32.mrb[0].mxu0
    %v1499 = vadd.f32 0.0, %v1498
    %v1500 = vpop.f32.mrb[0].mxu0
    %v1501 = vadd.f32 0.0, %v1500
    %1502 = vdwg.mxu0
    %1503 = vmatprep.subr.mxu0 %v87
    %1504 = vmatpush1.msra.mxu0 %v86
    %1505 = vmatprep.subr.mxu0 %v91
    %1506 = vmatpush1.msra.mxu0 %v90
    %1507 = vmatprep.subr.mxu0 %v95
    %1508 = vmatpush1.msra.mxu0 %v94
    %1509 = vmatprep.subr.mxu0 %v99
    %1510 = vmatpush1.msra.mxu0 %v98
    %1511 = vmatprep.subr.mxu0 %v103
    %1512 = vmatpush1.msra.mxu0 %v102
    %1513 = vmatprep.subr.mxu0 %v107
    %1514 = vmatpush1.msra.mxu0 %v106
    %1515 = vmatprep.subr.mxu0 %v111
    %1516 = vmatpush1.msra.mxu0 %v110
    %1517 = vmatprep.subr.mxu0 %v115
    %1518 = vmatpush1.msra.mxu0 %v114
    %1519 = vmatprep.subr.mxu0 %v119
    %1520 = vmatpush1.msra.mxu0 %v118
    %1521 = vmatprep.subr.mxu0 %v123
    %1522 = vmatpush1.msra.mxu0 %v122
    %1523 = vmatprep.subr.mxu0 %v127
    %1524 = vmatpush1.msra.mxu0 %v126
    %1525 = vmatprep.subr.mxu0 %v131
    %1526 = vmatpush1.msra.mxu0 %v130
    %1527 = vmatprep.subr.mxu0 %v135
    %1528 = vmatpush1.msra.mxu0 %v134
    %1529 = vmatprep.subr.mxu0 %v139
    %1530 = vmatpush1.msra.mxu0 %v138
    %1531 = vmatprep.subr.mxu0 %v143
    %1532 = vmatpush1.msra.mxu0 %v142
    %1533 = vmatprep.subr.mxu0 %v147
    %1534 = vmatpush1.msra.mxu0 %v146
    %1535 = vmatprep.subr.mxu0 0.0
    %1536 = vmatpush1.msra.mxu0 0.0
    %1537 = vmatprep.subr.mxu0 0.0
    %1538 = vmatpush1.msra.mxu0 0.0
    %1539 = vmatprep.subr.mxu0 0.0
    %1540 = vmatpush1.msra.mxu0 0.0
    %1541 = vmatprep.subr.mxu0 0.0
    %1542 = vmatpush1.msra.mxu0 0.0
    %1543 = vmatprep.subr.mxu0 0.0
    %1544 = vmatpush1.msra.mxu0 0.0
    %1545 = vmatprep.subr.mxu0 0.0
    %1546 = vmatpush1.msra.mxu0 0.0
    %1547 = vmatprep.subr.mxu0 0.0
    %1548 = vmatpush1.msra.mxu0 0.0
    %1549 = vmatprep.subr.mxu0 0.0
    %1550 = vmatpush1.msra.mxu0 0.0
    %1551 = vmatprep.subr.mxu0 0.0
    %1552 = vmatpush1.msra.mxu0 0.0
    %1553 = vmatprep.subr.mxu0 0.0
    %1554 = vmatpush1.msra.mxu0 0.0
    %1555 = vmatprep.subr.mxu0 0.0
    %1556 = vmatpush1.msra.mxu0 0.0
    %1557 = vmatprep.subr.mxu0 0.0
    %1558 = vmatpush1.msra.mxu0 0.0
    %1559 = vmatprep.subr.mxu0 0.0
    %1560 = vmatpush1.msra.mxu0 0.0
    %1561 = vmatprep.subr.mxu0 0.0
    %1562 = vmatpush1.msra.mxu0 0.0
    %1563 = vmatprep.subr.mxu0 0.0
    %1564 = vmatpush1.msra.mxu0 0.0
    %1565 = vmatprep.subr.mxu0 0.0
    %1566 = vmatpush1.msra.mxu0 0.0
    %1567 = vmatprep.mubr.f32.mxu0 0.0
    %1568 = vmatmul.mubr.f32.gmra.mrb[0].mxu0 %v1430
    %v1569 = vpop.f32.mrb[0].mxu0
    %v1570 = vadd.f32 0.0, %v1569
    %v1571 = vpop.f32.mrb[0].mxu0
    %v1572 = vadd.f32 0.0, %v1571
    %1573 = vdwg.mxu0
    %v1578 = vrot.slane %v1499, 4
    %v1579 = vrot.slane %v1501, 4
    %v1580 = vrot.slane %v1570, 4
    %v1581 = vrot.slane %v1572, 4
    %v1586 = vadd.f32 %v250, %v1578
    %v1587 = vadd.f32 %v252, %v1579
    %v1588 = vadd.f32 %v327, %v1580
    %v1589 = vadd.f32 %v329, %v1581
    %v1590 = vxor.u32 %v1586, 2147483648
    %v1591 = vmul.f32 %v1590, 1.442695
    %v1592 = vpow.pop %v1591
    %v1593 = vadd.f32 %v1592, 1.0
    %v1594 = vrcp.pop %v1593
    %v1595 = vmul.f32 1.0, %v1594
    %v1596 = vxor.u32 %v1587, 2147483648
    %v1597 = vmul.f32 %v1596, 1.442695
    %v1598 = vpow.pop %v1597
    %v1599 = vadd.f32 %v1598, 1.0
    %v1600 = vrcp.pop %v1599
    %v1601 = vmul.f32 1.0, %v1600
    %v1602 = vtanh.pop %v1588
    %v1603 = vxor.u32 %v1589, 2147483648
    %v1604 = vmul.f32 %v1603, 1.442695
    %v1605 = vpow.pop %v1604
    %v1606 = vadd.f32 %v1605, 1.0
    %v1607 = vrcp.pop %v1606
    %v1608 = vmul.f32 1.0, %v1607
    %v1610 = vrot.slane %v1425, 6
    %v1612 = vmul.f32 %v1601, %v1610
    %v1613 = vmul.f32 %v1595, %v1602
    %v1614 = vadd.f32 %v1612, %v1613
    %v1615 = vtanh.pop %v1614
    %v1616 = vmul.f32 %v1608, %v1615
    %1617 = vst [vmem:[#allocation2 + $0x8] sm:$0x30] %v1616
    %v1619 = vrot.slane %v1616, 4
    %1621 = vmatprep.subr.mxu0 %v85
    %1622 = vmatpush1.msra.mxu0 %v84
    %1623 = vmatprep.subr.mxu0 %v89
    %1624 = vmatpush1.msra.mxu0 %v88
    %1625 = vmatprep.subr.mxu0 %v93
    %1626 = vmatpush1.msra.mxu0 %v92
    %1627 = vmatprep.subr.mxu0 %v97
    %1628 = vmatpush1.msra.mxu0 %v96
    %1629 = vmatprep.subr.mxu0 %v101
    %1630 = vmatpush1.msra.mxu0 %v100
    %1631 = vmatprep.subr.mxu0 %v105
    %1632 = vmatpush1.msra.mxu0 %v104
    %1633 = vmatprep.subr.mxu0 %v109
    %1634 = vmatpush1.msra.mxu0 %v108
    %1635 = vmatprep.subr.mxu0 %v113
    %1636 = vmatpush1.msra.mxu0 %v112
    %1637 = vmatprep.subr.mxu0 %v117
    %1638 = vmatpush1.msra.mxu0 %v116
    %1639 = vmatprep.subr.mxu0 %v121
    %1640 = vmatpush1.msra.mxu0 %v120
    %1641 = vmatprep.subr.mxu0 %v125
    %1642 = vmatpush1.msra.mxu0 %v124
    %1643 = vmatprep.subr.mxu0 %v129
    %1644 = vmatpush1.msra.mxu0 %v128
    %1645 = vmatprep.subr.mxu0 %v133
    %1646 = vmatpush1.msra.mxu0 %v132
    %1647 = vmatprep.subr.mxu0 %v137
    %1648 = vmatpush1.msra.mxu0 %v136
    %1649 = vmatprep.subr.mxu0 %v141
    %1650 = vmatpush1.msra.mxu0 %v140
    %1651 = vmatprep.subr.mxu0 %v145
    %1652 = vmatpush1.msra.mxu0 %v144
    %1653 = vmatprep.subr.mxu0 0.0
    %1654 = vmatpush1.msra.mxu0 0.0
    %1655 = vmatprep.subr.mxu0 0.0
    %1656 = vmatpush1.msra.mxu0 0.0
    %1657 = vmatprep.subr.mxu0 0.0
    %1658 = vmatpush1.msra.mxu0 0.0
    %1659 = vmatprep.subr.mxu0 0.0
    %1660 = vmatpush1.msra.mxu0 0.0
    %1661 = vmatprep.subr.mxu0 0.0
    %1662 = vmatpush1.msra.mxu0 0.0
    %1663 = vmatprep.subr.mxu0 0.0
    %1664 = vmatpush1.msra.mxu0 0.0
    %1665 = vmatprep.subr.mxu0 0.0
    %1666 = vmatpush1.msra.mxu0 0.0
    %1667 = vmatprep.subr.mxu0 0.0
    %1668 = vmatpush1.msra.mxu0 0.0
    %1669 = vmatprep.subr.mxu0 0.0
    %1670 = vmatpush1.msra.mxu0 0.0
    %1671 = vmatprep.subr.mxu0 0.0
    %1672 = vmatpush1.msra.mxu0 0.0
    %1673 = vmatprep.subr.mxu0 0.0
    %1674 = vmatpush1.msra.mxu0 0.0
    %1675 = vmatprep.subr.mxu0 0.0
    %1676 = vmatpush1.msra.mxu0 0.0
    %1677 = vmatprep.subr.mxu0 0.0
    %1678 = vmatpush1.msra.mxu0 0.0
    %1679 = vmatprep.subr.mxu0 0.0
    %1680 = vmatpush1.msra.mxu0 0.0
    %1681 = vmatprep.subr.mxu0 0.0
    %1682 = vmatpush1.msra.mxu0 0.0
    %1683 = vmatprep.subr.mxu0 0.0
    %1684 = vmatpush1.msra.mxu0 0.0
    %1685 = vmatprep.mubr.f32.mxu0 0.0
    %1686 = vmatmul.mubr.f32.gmra.mrb[0].mxu0 %v1619
    %v1687 = vpop.f32.mrb[0].mxu0
    %v1688 = vadd.f32 0.0, %v1687
    %v1689 = vpop.f32.mrb[0].mxu0
    %v1690 = vadd.f32 0.0, %v1689
    %1691 = vdwg.mxu0
    %1692 = vmatprep.subr.mxu0 %v87
    %1693 = vmatpush1.msra.mxu0 %v86
    %1694 = vmatprep.subr.mxu0 %v91
    %1695 = vmatpush1.msra.mxu0 %v90
    %1696 = vmatprep.subr.mxu0 %v95
    %1697 = vmatpush1.msra.mxu0 %v94
    %1698 = vmatprep.subr.mxu0 %v99
    %1699 = vmatpush1.msra.mxu0 %v98
    %1700 = vmatprep.subr.mxu0 %v103
    %1701 = vmatpush1.msra.mxu0 %v102
    %1702 = vmatprep.subr.mxu0 %v107
    %1703 = vmatpush1.msra.mxu0 %v106
    %1704 = vmatprep.subr.mxu0 %v111
    %1705 = vmatpush1.msra.mxu0 %v110
    %1706 = vmatprep.subr.mxu0 %v115
    %1707 = vmatpush1.msra.mxu0 %v114
    %1708 = vmatprep.subr.mxu0 %v119
    %1709 = vmatpush1.msra.mxu0 %v118
    %1710 = vmatprep.subr.mxu0 %v123
    %1711 = vmatpush1.msra.mxu0 %v122
    %1712 = vmatprep.subr.mxu0 %v127
    %1713 = vmatpush1.msra.mxu0 %v126
    %1714 = vmatprep.subr.mxu0 %v131
    %1715 = vmatpush1.msra.mxu0 %v130
    %1716 = vmatprep.subr.mxu0 %v135
    %1717 = vmatpush1.msra.mxu0 %v134
    %1718 = vmatprep.subr.mxu0 %v139
    %1719 = vmatpush1.msra.mxu0 %v138
    %1720 = vmatprep.subr.mxu0 %v143
    %1721 = vmatpush1.msra.mxu0 %v142
    %1722 = vmatprep.subr.mxu0 %v147
    %1723 = vmatpush1.msra.mxu0 %v146
    %1724 = vmatprep.subr.mxu0 0.0
    %1725 = vmatpush1.msra.mxu0 0.0
    %1726 = vmatprep.subr.mxu0 0.0
    %1727 = vmatpush1.msra.mxu0 0.0
    %1728 = vmatprep.subr.mxu0 0.0
    %1729 = vmatpush1.msra.mxu0 0.0
    %1730 = vmatprep.subr.mxu0 0.0
    %1731 = vmatpush1.msra.mxu0 0.0
    %1732 = vmatprep.subr.mxu0 0.0
    %1733 = vmatpush1.msra.mxu0 0.0
    %1734 = vmatprep.subr.mxu0 0.0
    %1735 = vmatpush1.msra.mxu0 0.0
    %1736 = vmatprep.subr.mxu0 0.0
    %1737 = vmatpush1.msra.mxu0 0.0
    %1738 = vmatprep.subr.mxu0 0.0
    %1739 = vmatpush1.msra.mxu0 0.0
    %1740 = vmatprep.subr.mxu0 0.0
    %1741 = vmatpush1.msra.mxu0 0.0
    %1742 = vmatprep.subr.mxu0 0.0
    %1743 = vmatpush1.msra.mxu0 0.0
    %1744 = vmatprep.subr.mxu0 0.0
    %1745 = vmatpush1.msra.mxu0 0.0
    %1746 = vmatprep.subr.mxu0 0.0
    %1747 = vmatpush1.msra.mxu0 0.0
    %1748 = vmatprep.subr.mxu0 0.0
    %1749 = vmatpush1.msra.mxu0 0.0
    %1750 = vmatprep.subr.mxu0 0.0
    %1751 = vmatpush1.msra.mxu0 0.0
    %1752 = vmatprep.subr.mxu0 0.0
    %1753 = vmatpush1.msra.mxu0 0.0
    %1754 = vmatprep.subr.mxu0 0.0
    %1755 = vmatpush1.msra.mxu0 0.0
    %1756 = vmatprep.mubr.f32.mxu0 0.0
    %1757 = vmatmul.mubr.f32.gmra.mrb[0].mxu0 %v1619
    %v1758 = vpop.f32.mrb[0].mxu0
    %v1759 = vadd.f32 0.0, %v1758
    %v1760 = vpop.f32.mrb[0].mxu0
    %v1761 = vadd.f32 0.0, %v1760
    %1762 = vdwg.mxu0
    %v1767 = vrot.slane %v1688, 2
    %v1768 = vrot.slane %v1690, 2
    %v1769 = vrot.slane %v1759, 2
    %v1770 = vrot.slane %v1761, 2
    %v1775 = vadd.f32 %v250, %v1767
    %v1776 = vadd.f32 %v252, %v1768
    %v1777 = vadd.f32 %v327, %v1769
    %v1778 = vadd.f32 %v329, %v1770
    %v1779 = vxor.u32 %v1775, 2147483648
    %v1780 = vmul.f32 %v1779, 1.442695
    %v1781 = vpow.pop %v1780
    %v1782 = vadd.f32 %v1781, 1.0
    %v1783 = vrcp.pop %v1782
    %v1784 = vmul.f32 1.0, %v1783
    %v1785 = vxor.u32 %v1776, 2147483648
    %v1786 = vmul.f32 %v1785, 1.442695
    %v1787 = vpow.pop %v1786
    %v1788 = vadd.f32 %v1787, 1.0
    %v1789 = vrcp.pop %v1788
    %v1790 = vmul.f32 1.0, %v1789
    %v1791 = vtanh.pop %v1777
    %v1792 = vxor.u32 %v1778, 2147483648
    %v1793 = vmul.f32 %v1792, 1.442695
    %v1794 = vpow.pop %v1793
    %v1795 = vadd.f32 %v1794, 1.0
    %v1796 = vrcp.pop %v1795
    %v1797 = vmul.f32 1.0, %v1796
    %v1799 = vrot.slane %v1614, 6
    %v1801 = vmul.f32 %v1790, %v1799
    %v1802 = vmul.f32 %v1784, %v1791
    %v1803 = vadd.f32 %v1801, %v1802
    %v1804 = vtanh.pop %v1803
    %v1805 = vmul.f32 %v1797, %v1804
    %1806 = vst [vmem:[#allocation2 + $0x8] sm:$0xc0] %v1805
    %v1807 = vld [vmem:[#allocation2] sm:$0xff]
    %v1808 = vld [vmem:[#allocation2 + $0x8] sm:$0xff]
    %v1809 = vld [vmem:[#allocation7] sm:$0xff]
    %v1810 = vld [vmem:[#allocation7 + $0x8] sm:$0xff]
    %v1811 = vld [vmem:[#allocation7 + $0x10] sm:$0xff]
    %v1812 = vld [vmem:[#allocation7 + $0x18] sm:$0xff]
    %v1813 = vld [vmem:[#allocation7 + $0x20] sm:$0xff]
    %v1814 = vld [vmem:[#allocation7 + $0x28] sm:$0xff]
    %v1815 = vld [vmem:[#allocation7 + $0x30] sm:$0xff]
    %v1816 = vld [vmem:[#allocation7 + $0x38] sm:$0xff]
    %v1817 = vld [vmem:[#allocation7 + $0x40] sm:$0xff]
    %v1818 = vld [vmem:[#allocation7 + $0x48] sm:$0xff]
    %v1819 = vld [vmem:[#allocation7 + $0x50] sm:$0xff]
    %v1820 = vld [vmem:[#allocation7 + $0x58] sm:$0xff]
    %v1821 = vld [vmem:[#allocation7 + $0x60] sm:$0xff]
    %v1822 = vld [vmem:[#allocation7 + $0x68] sm:$0xff]
    %v1823 = vld [vmem:[#allocation7 + $0x70] sm:$0xff]
    %v1824 = vld [vmem:[#allocation7 + $0x78] sm:$0xff]
    %v1825 = vld [vmem:[#allocation7 + $0x80] sm:$0xff]
    %v1826 = vld [vmem:[#allocation7 + $0x88] sm:$0xff]
    %v1827 = vld [vmem:[#allocation7 + $0x90] sm:$0xff]
    %v1828 = vld [vmem:[#allocation7 + $0x98] sm:$0xff]
    %v1829 = vld [vmem:[#allocation7 + $0xa0] sm:$0xff]
    %v1830 = vld [vmem:[#allocation7 + $0xa8] sm:$0xff]
    %v1831 = vld [vmem:[#allocation7 + $0xb0] sm:$0xff]
    %v1832 = vld [vmem:[#allocation7 + $0xb8] sm:$0xff]
    %v1833 = vld [vmem:[#allocation7 + $0xc0] sm:$0xff]
    %v1834 = vld [vmem:[#allocation7 + $0xc8] sm:$0xff]
    %v1835 = vld [vmem:[#allocation7 + $0xd0] sm:$0xff]
    %v1836 = vld [vmem:[#allocation7 + $0xd8] sm:$0xff]
    %v1837 = vld [vmem:[#allocation7 + $0xe0] sm:$0xff]
    %v1838 = vld [vmem:[#allocation7 + $0xe8] sm:$0xff]
    %v1839 = vld [vmem:[#allocation7 + $0xf0] sm:$0xff]
    %v1840 = vld [vmem:[#allocation7 + $0xf8] sm:$0xff]
    %v1841 = vld [vmem:[#allocation7 + $0x100] sm:$0xff]
    %v1842 = vld [vmem:[#allocation7 + $0x108] sm:$0xff]
    %v1843 = vld [vmem:[#allocation7 + $0x110] sm:$0xff]
    %v1844 = vld [vmem:[#allocation7 + $0x118] sm:$0xff]
    %v1845 = vld [vmem:[#allocation7 + $0x120] sm:$0xff]
    %v1846 = vld [vmem:[#allocation7 + $0x128] sm:$0xff]
    %v1847 = vld [vmem:[#allocation7 + $0x130] sm:$0xff]
    %v1848 = vld [vmem:[#allocation7 + $0x138] sm:$0xff]
    %v1849 = vld [vmem:[#allocation7 + $0x140] sm:$0xff]
    %v1850 = vld [vmem:[#allocation7 + $0x148] sm:$0xff]
    %v1851 = vld [vmem:[#allocation7 + $0x150] sm:$0xff]
    %v1852 = vld [vmem:[#allocation7 + $0x158] sm:$0xff]
    %v1853 = vld [vmem:[#allocation7 + $0x160] sm:$0xff]
    %v1854 = vld [vmem:[#allocation7 + $0x168] sm:$0xff]
    %v1855 = vld [vmem:[#allocation7 + $0x170] sm:$0xff]
    %v1856 = vld [vmem:[#allocation7 + $0x178] sm:$0xff]
    %v1857 = vld [vmem:[#allocation7 + $0x180] sm:$0xff]
    %v1858 = vld [vmem:[#allocation7 + $0x188] sm:$0xff]
    %v1859 = vld [vmem:[#allocation7 + $0x190] sm:$0xff]
    %v1860 = vld [vmem:[#allocation7 + $0x198] sm:$0xff]
    %v1861 = vld [vmem:[#allocation7 + $0x1a0] sm:$0xff]
    %v1862 = vld [vmem:[#allocation7 + $0x1a8] sm:$0xff]
    %v1863 = vld [vmem:[#allocation7 + $0x1b0] sm:$0xff]
    %v1864 = vld [vmem:[#allocation7 + $0x1b8] sm:$0xff]
    %v1865 = vld [vmem:[#allocation7 + $0x1c0] sm:$0xff]
    %v1866 = vld [vmem:[#allocation7 + $0x1c8] sm:$0xff]
    %v1867 = vld [vmem:[#allocation7 + $0x1d0] sm:$0xff]
    %v1868 = vld [vmem:[#allocation7 + $0x1d8] sm:$0xff]
    %v1869 = vld [vmem:[#allocation7 + $0x1e0] sm:$0xff]
    %v1870 = vld [vmem:[#allocation7 + $0x1e8] sm:$0xff]
    %v1871 = vld [vmem:[#allocation7 + $0x1f0] sm:$0xff]
    %v1872 = vld [vmem:[#allocation7 + $0x1f8] sm:$0xff]
    %v1873 = vld [vmem:[#allocation9] sm:$0xff]
    %v1874 = vld [vmem:[#allocation9 + $0x8] sm:$0xff]
    %v1875 = vld [vmem:[#allocation9 + $0x10] sm:$0xff]
    %v1876 = vld [vmem:[#allocation9 + $0x18] sm:$0xff]
    %v1877 = vld [vmem:[#allocation9 + $0x20] sm:$0xff]
    %v1878 = vld [vmem:[#allocation9 + $0x28] sm:$0xff]
    %v1879 = vld [vmem:[#allocation9 + $0x30] sm:$0xff]
    %v1880 = vld [vmem:[#allocation9 + $0x38] sm:$0xff]
    %v1881 = vld [vmem:[#allocation9 + $0x40] sm:$0xff]
    %v1882 = vld [vmem:[#allocation9 + $0x48] sm:$0xff]
    %v1883 = vld [vmem:[#allocation9 + $0x50] sm:$0xff]
    %v1884 = vld [vmem:[#allocation9 + $0x58] sm:$0xff]
    %v1885 = vld [vmem:[#allocation9 + $0x60] sm:$0xff]
    %v1886 = vld [vmem:[#allocation9 + $0x68] sm:$0xff]
    %v1887 = vld [vmem:[#allocation9 + $0x70] sm:$0xff]
    %v1888 = vld [vmem:[#allocation9 + $0x78] sm:$0xff]
    %v1889 = vld [vmem:[#allocation9 + $0x80] sm:$0xff]
    %v1890 = vld [vmem:[#allocation9 + $0x88] sm:$0xff]
    %v1891 = vld [vmem:[#allocation9 + $0x90] sm:$0xff]
    %v1892 = vld [vmem:[#allocation9 + $0x98] sm:$0xff]
    %v1893 = vld [vmem:[#allocation9 + $0xa0] sm:$0xff]
    %v1894 = vld [vmem:[#allocation9 + $0xa8] sm:$0xff]
    %v1895 = vld [vmem:[#allocation9 + $0xb0] sm:$0xff]
    %v1896 = vld [vmem:[#allocation9 + $0xb8] sm:$0xff]
    %v1897 = vld [vmem:[#allocation9 + $0xc0] sm:$0xff]
    %v1898 = vld [vmem:[#allocation9 + $0xc8] sm:$0xff]
    %v1899 = vld [vmem:[#allocation9 + $0xd0] sm:$0xff]
    %v1900 = vld [vmem:[#allocation9 + $0xd8] sm:$0xff]
    %v1901 = vld [vmem:[#allocation9 + $0xe0] sm:$0xff]
    %v1902 = vld [vmem:[#allocation9 + $0xe8] sm:$0xff]
    %v1903 = vld [vmem:[#allocation9 + $0xf0] sm:$0xff]
    %v1904 = vld [vmem:[#allocation9 + $0xf8] sm:$0xff]
    %v1905 = vld [vmem:[#allocation9 + $0x100] sm:$0xff]
    %v1906 = vld [vmem:[#allocation9 + $0x108] sm:$0xff]
    %v1907 = vld [vmem:[#allocation9 + $0x110] sm:$0xff]
    %v1908 = vld [vmem:[#allocation9 + $0x118] sm:$0xff]
    %v1909 = vld [vmem:[#allocation9 + $0x120] sm:$0xff]
    %v1910 = vld [vmem:[#allocation9 + $0x128] sm:$0xff]
    %v1911 = vld [vmem:[#allocation9 + $0x130] sm:$0xff]
    %v1912 = vld [vmem:[#allocation9 + $0x138] sm:$0xff]
    %v1913 = vld [vmem:[#allocation9 + $0x140] sm:$0xff]
    %v1914 = vld [vmem:[#allocation9 + $0x148] sm:$0xff]
    %v1915 = vld [vmem:[#allocation9 + $0x150] sm:$0xff]
    %v1916 = vld [vmem:[#allocation9 + $0x158] sm:$0xff]
    %v1917 = vld [vmem:[#allocation9 + $0x160] sm:$0xff]
    %v1918 = vld [vmem:[#allocation9 + $0x168] sm:$0xff]
    %v1919 = vld [vmem:[#allocation9 + $0x170] sm:$0xff]
    %v1920 = vld [vmem:[#allocation9 + $0x178] sm:$0xff]
    %v1921 = vld [vmem:[#allocation9 + $0x180] sm:$0xff]
    %v1922 = vld [vmem:[#allocation9 + $0x188] sm:$0xff]
    %v1923 = vld [vmem:[#allocation9 + $0x190] sm:$0xff]
    %v1924 = vld [vmem:[#allocation9 + $0x198] sm:$0xff]
    %v1925 = vld [vmem:[#allocation9 + $0x1a0] sm:$0xff]
    %v1926 = vld [vmem:[#allocation9 + $0x1a8] sm:$0xff]
    %v1927 = vld [vmem:[#allocation9 + $0x1b0] sm:$0xff]
    %v1928 = vld [vmem:[#allocation9 + $0x1b8] sm:$0xff]
    %v1929 = vld [vmem:[#allocation9 + $0x1c0] sm:$0xff]
    %v1930 = vld [vmem:[#allocation9 + $0x1c8] sm:$0xff]
    %v1931 = vld [vmem:[#allocation9 + $0x1d0] sm:$0xff]
    %v1932 = vld [vmem:[#allocation9 + $0x1d8] sm:$0xff]
    %v1933 = vld [vmem:[#allocation9 + $0x1e0] sm:$0xff]
    %v1934 = vld [vmem:[#allocation9 + $0x1e8] sm:$0xff]
    %v1935 = vld [vmem:[#allocation9 + $0x1f0] sm:$0xff]
    %v1936 = vld [vmem:[#allocation9 + $0x1f8] sm:$0xff]
    %v1937 = vld [vmem:[%s6] sm:$0xf]
    %v1939 = vlaneseq
    %v1940 = vshrl.u32 %v1939, 7
    %v1941 = vsub.s32 0, %v1940
    %v1942 = vrot.slane %v1937, %v1941
    %v1943 = vlaneseq
    %v1944 = vshrl.u32 %v1943, 7
    %v1945 = vsub.s32 1, %v1944
    %v1946 = vrot.slane %v1937, %v1945
    %v1947 = vlaneseq
    %v1948 = vshrl.u32 %v1947, 7
    %v1949 = vsub.s32 2, %v1948
    %v1950 = vrot.slane %v1937, %v1949
    %v1951 = vlaneseq
    %v1952 = vshrl.u32 %v1951, 7
    %v1953 = vsub.s32 3, %v1952
    %v1954 = vrot.slane %v1937, %v1953
    %1959 = vmatprep.subr.mxu0 %v1810
    %1960 = vmatpush1.msra.mxu0 %v1809
    %1961 = vmatprep.subr.mxu0 %v1814
    %1962 = vmatpush1.msra.mxu0 %v1813
    %1963 = vmatprep.subr.mxu0 %v1818
    %1964 = vmatpush1.msra.mxu0 %v1817
    %1965 = vmatprep.subr.mxu0 %v1822
    %1966 = vmatpush1.msra.mxu0 %v1821
    %1967 = vmatprep.subr.mxu0 %v1826
    %1968 = vmatpush1.msra.mxu0 %v1825
    %1969 = vmatprep.subr.mxu0 %v1830
    %1970 = vmatpush1.msra.mxu0 %v1829
    %1971 = vmatprep.subr.mxu0 %v1834
    %1972 = vmatpush1.msra.mxu0 %v1833
    %1973 = vmatprep.subr.mxu0 %v1838
    %1974 = vmatpush1.msra.mxu0 %v1837
    %1975 = vmatprep.subr.mxu0 %v1842
    %1976 = vmatpush1.msra.mxu0 %v1841
    %1977 = vmatprep.subr.mxu0 %v1846
    %1978 = vmatpush1.msra.mxu0 %v1845
    %1979 = vmatprep.subr.mxu0 %v1850
    %1980 = vmatpush1.msra.mxu0 %v1849
    %1981 = vmatprep.subr.mxu0 %v1854
    %1982 = vmatpush1.msra.mxu0 %v1853
    %1983 = vmatprep.subr.mxu0 %v1858
    %1984 = vmatpush1.msra.mxu0 %v1857
    %1985 = vmatprep.subr.mxu0 %v1862
    %1986 = vmatpush1.msra.mxu0 %v1861
    %1987 = vmatprep.subr.mxu0 %v1866
    %1988 = vmatpush1.msra.mxu0 %v1865
    %1989 = vmatprep.subr.mxu0 %v1870
    %1990 = vmatpush1.msra.mxu0 %v1869
    %1991 = vmatprep.subr.mxu0 0.0
    %1992 = vmatpush1.msra.mxu0 0.0
    %1993 = vmatprep.subr.mxu0 0.0
    %1994 = vmatpush1.msra.mxu0 0.0
    %1995 = vmatprep.subr.mxu0 0.0
    %1996 = vmatpush1.msra.mxu0 0.0
    %1997 = vmatprep.subr.mxu0 0.0
    %1998 = vmatpush1.msra.mxu0 0.0
    %1999 = vmatprep.subr.mxu0 0.0
    %2000 = vmatpush1.msra.mxu0 0.0
    %2001 = vmatprep.subr.mxu0 0.0
    %2002 = vmatpush1.msra.mxu0 0.0
    %2003 = vmatprep.subr.mxu0 0.0
    %2004 = vmatpush1.msra.mxu0 0.0
    %2005 = vmatprep.subr.mxu0 0.0
    %2006 = vmatpush1.msra.mxu0 0.0
    %2007 = vmatprep.subr.mxu0 0.0
    %2008 = vmatpush1.msra.mxu0 0.0
    %2009 = vmatprep.subr.mxu0 0.0
    %2010 = vmatpush1.msra.mxu0 0.0
    %2011 = vmatprep.subr.mxu0 0.0
    %2012 = vmatpush1.msra.mxu0 0.0
    %2013 = vmatprep.subr.mxu0 0.0
    %2014 = vmatpush1.msra.mxu0 0.0
    %2015 = vmatprep.subr.mxu0 0.0
    %2016 = vmatpush1.msra.mxu0 0.0
    %2017 = vmatprep.subr.mxu0 0.0
    %2018 = vmatpush1.msra.mxu0 0.0
    %2019 = vmatprep.subr.mxu0 0.0
    %2020 = vmatpush1.msra.mxu0 0.0
    %2021 = vmatprep.subr.mxu0 0.0
    %2022 = vmatpush1.msra.mxu0 0.0
    %2023 = vmatprep.mubr.f32.mxu0 0.0
    %2024 = vmatmul.mubr.f32.gmra.mrb[0].mxu0 %v1807
    %v2025 = vpop.f32.mrb[0].mxu0
    %v2026 = vadd.f32 %v1942, %v2025
    %v2027 = vpop.f32.mrb[0].mxu0
    %v2028 = vadd.f32 %v1946, %v2027
    %2029 = vmatprep.mubr.f32.mxu0 0.0
    %2030 = vmatmul.mubr.f32.gmra.mrb[0].mxu0 %v1808
    %v2031 = vpop.f32.mrb[0].mxu0
    %v2032 = vadd.f32 %v1942, %v2031
    %v2033 = vpop.f32.mrb[0].mxu0
    %v2034 = vadd.f32 %v1946, %v2033
    %2035 = vdwg.mxu0
    %2036 = vmatprep.subr.mxu0 %v1812
    %2037 = vmatpush1.msra.mxu0 %v1811
    %2038 = vmatprep.subr.mxu0 %v1816
    %2039 = vmatpush1.msra.mxu0 %v1815
    %2040 = vmatprep.subr.mxu0 %v1820
    %2041 = vmatpush1.msra.mxu0 %v1819
    %2042 = vmatprep.subr.mxu0 %v1824
    %2043 = vmatpush1.msra.mxu0 %v1823
    %2044 = vmatprep.subr.mxu0 %v1828
    %2045 = vmatpush1.msra.mxu0 %v1827
    %2046 = vmatprep.subr.mxu0 %v1832
    %2047 = vmatpush1.msra.mxu0 %v1831
    %2048 = vmatprep.subr.mxu0 %v1836
    %2049 = vmatpush1.msra.mxu0 %v1835
    %2050 = vmatprep.subr.mxu0 %v1840
    %2051 = vmatpush1.msra.mxu0 %v1839
    %2052 = vmatprep.subr.mxu0 %v1844
    %2053 = vmatpush1.msra.mxu0 %v1843
    %2054 = vmatprep.subr.mxu0 %v1848
    %2055 = vmatpush1.msra.mxu0 %v1847
    %2056 = vmatprep.subr.mxu0 %v1852
    %2057 = vmatpush1.msra.mxu0 %v1851
    %2058 = vmatprep.subr.mxu0 %v1856
    %2059 = vmatpush1.msra.mxu0 %v1855
    %2060 = vmatprep.subr.mxu0 %v1860
    %2061 = vmatpush1.msra.mxu0 %v1859
    %2062 = vmatprep.subr.mxu0 %v1864
    %2063 = vmatpush1.msra.mxu0 %v1863
    %2064 = vmatprep.subr.mxu0 %v1868
    %2065 = vmatpush1.msra.mxu0 %v1867
    %2066 = vmatprep.subr.mxu0 %v1872
    %2067 = vmatpush1.msra.mxu0 %v1871
    %2068 = vmatprep.subr.mxu0 0.0
    %2069 = vmatpush1.msra.mxu0 0.0
    %2070 = vmatprep.subr.mxu0 0.0
    %2071 = vmatpush1.msra.mxu0 0.0
    %2072 = vmatprep.subr.mxu0 0.0
    %2073 = vmatpush1.msra.mxu0 0.0
    %2074 = vmatprep.subr.mxu0 0.0
    %2075 = vmatpush1.msra.mxu0 0.0
    %2076 = vmatprep.subr.mxu0 0.0
    %2077 = vmatpush1.msra.mxu0 0.0
    %2078 = vmatprep.subr.mxu0 0.0
    %2079 = vmatpush1.msra.mxu0 0.0
    %2080 = vmatprep.subr.mxu0 0.0
    %2081 = vmatpush1.msra.mxu0 0.0
    %2082 = vmatprep.subr.mxu0 0.0
    %2083 = vmatpush1.msra.mxu0 0.0
    %2084 = vmatprep.subr.mxu0 0.0
    %2085 = vmatpush1.msra.mxu0 0.0
    %2086 = vmatprep.subr.mxu0 0.0
    %2087 = vmatpush1.msra.mxu0 0.0
    %2088 = vmatprep.subr.mxu0 0.0
    %2089 = vmatpush1.msra.mxu0 0.0
    %2090 = vmatprep.subr.mxu0 0.0
    %2091 = vmatpush1.msra.mxu0 0.0
    %2092 = vmatprep.subr.mxu0 0.0
    %2093 = vmatpush1.msra.mxu0 0.0
    %2094 = vmatprep.subr.mxu0 0.0
    %2095 = vmatpush1.msra.mxu0 0.0
    %2096 = vmatprep.subr.mxu0 0.0
    %2097 = vmatpush1.msra.mxu0 0.0
    %2098 = vmatprep.subr.mxu0 0.0
    %2099 = vmatpush1.msra.mxu0 0.0
    %2100 = vmatprep.mubr.f32.mxu0 0.0
    %2101 = vmatmul.mubr.f32.gmra.mrb[0].mxu0 %v1807
    %v2102 = vpop.f32.mrb[0].mxu0
    %v2103 = vadd.f32 %v1950, %v2102
    %v2104 = vpop.f32.mrb[0].mxu0
    %v2105 = vadd.f32 %v1954, %v2104
    %2106 = vmatprep.mubr.f32.mxu0 0.0
    %2107 = vmatmul.mubr.f32.gmra.mrb[0].mxu0 %v1808
    %v2108 = vpop.f32.mrb[0].mxu0
    %v2109 = vadd.f32 %v1950, %v2108
    %v2110 = vpop.f32.mrb[0].mxu0
    %v2111 = vadd.f32 %v1954, %v2110
    %2112 = vdwg.mxu0
    %2113 = vmatprep.subr.mxu0 %v1874
    %2114 = vmatpush1.msra.mxu0 %v1873
    %2115 = vmatprep.subr.mxu0 %v1878
    %2116 = vmatpush1.msra.mxu0 %v1877
    %2117 = vmatprep.subr.mxu0 %v1882
    %2118 = vmatpush1.msra.mxu0 %v1881
    %2119 = vmatprep.subr.mxu0 %v1886
    %2120 = vmatpush1.msra.mxu0 %v1885
    %2121 = vmatprep.subr.mxu0 %v1890
    %2122 = vmatpush1.msra.mxu0 %v1889
    %2123 = vmatprep.subr.mxu0 %v1894
    %2124 = vmatpush1.msra.mxu0 %v1893
    %2125 = vmatprep.subr.mxu0 %v1898
    %2126 = vmatpush1.msra.mxu0 %v1897
    %2127 = vmatprep.subr.mxu0 %v1902
    %2128 = vmatpush1.msra.mxu0 %v1901
    %2129 = vmatprep.subr.mxu0 %v1906
    %2130 = vmatpush1.msra.mxu0 %v1905
    %2131 = vmatprep.subr.mxu0 %v1910
    %2132 = vmatpush1.msra.mxu0 %v1909
    %2133 = vmatprep.subr.mxu0 %v1914
    %2134 = vmatpush1.msra.mxu0 %v1913
    %2135 = vmatprep.subr.mxu0 %v1918
    %2136 = vmatpush1.msra.mxu0 %v1917
    %2137 = vmatprep.subr.mxu0 %v1922
    %2138 = vmatpush1.msra.mxu0 %v1921
    %2139 = vmatprep.subr.mxu0 %v1926
    %2140 = vmatpush1.msra.mxu0 %v1925
    %2141 = vmatprep.subr.mxu0 %v1930
    %2142 = vmatpush1.msra.mxu0 %v1929
    %2143 = vmatprep.subr.mxu0 %v1934
    %2144 = vmatpush1.msra.mxu0 %v1933
    %2145 = vmatprep.subr.mxu0 0.0
    %2146 = vmatpush1.msra.mxu0 0.0
    %2147 = vmatprep.subr.mxu0 0.0
    %2148 = vmatpush1.msra.mxu0 0.0
    %2149 = vmatprep.subr.mxu0 0.0
    %2150 = vmatpush1.msra.mxu0 0.0
    %2151 = vmatprep.subr.mxu0 0.0
    %2152 = vmatpush1.msra.mxu0 0.0
    %2153 = vmatprep.subr.mxu0 0.0
    %2154 = vmatpush1.msra.mxu0 0.0
    %2155 = vmatprep.subr.mxu0 0.0
    %2156 = vmatpush1.msra.mxu0 0.0
    %2157 = vmatprep.subr.mxu0 0.0
    %2158 = vmatpush1.msra.mxu0 0.0
    %2159 = vmatprep.subr.mxu0 0.0
    %2160 = vmatpush1.msra.mxu0 0.0
    %2161 = vmatprep.subr.mxu0 0.0
    %2162 = vmatpush1.msra.mxu0 0.0
    %2163 = vmatprep.subr.mxu0 0.0
    %2164 = vmatpush1.msra.mxu0 0.0
    %2165 = vmatprep.subr.mxu0 0.0
    %2166 = vmatpush1.msra.mxu0 0.0
    %2167 = vmatprep.subr.mxu0 0.0
    %2168 = vmatpush1.msra.mxu0 0.0
    %2169 = vmatprep.subr.mxu0 0.0
    %2170 = vmatpush1.msra.mxu0 0.0
    %2171 = vmatprep.subr.mxu0 0.0
    %2172 = vmatpush1.msra.mxu0 0.0
    %2173 = vmatprep.subr.mxu0 0.0
    %2174 = vmatpush1.msra.mxu0 0.0
    %2175 = vmatprep.subr.mxu0 0.0
    %2176 = vmatpush1.msra.mxu0 0.0
    %2177 = vmatprep.mubr.f32.mxu0 0.0
    %2178 = vmatmul.mubr.f32.gmra.mrb[0].mxu0 0.0
    %v2179 = vpop.f32.mrb[0].mxu0
    %v2180 = vadd.f32 0.0, %v2179
    %v2181 = vpop.f32.mrb[0].mxu0
    %v2182 = vadd.f32 0.0, %v2181
    %2183 = vdwg.mxu0
    %2184 = vmatprep.subr.mxu0 %v1876
    %2185 = vmatpush1.msra.mxu0 %v1875
    %2186 = vmatprep.subr.mxu0 %v1880
    %2187 = vmatpush1.msra.mxu0 %v1879
    %2188 = vmatprep.subr.mxu0 %v1884
    %2189 = vmatpush1.msra.mxu0 %v1883
    %2190 = vmatprep.subr.mxu0 %v1888
    %2191 = vmatpush1.msra.mxu0 %v1887
    %2192 = vmatprep.subr.mxu0 %v1892
    %2193 = vmatpush1.msra.mxu0 %v1891
    %2194 = vmatprep.subr.mxu0 %v1896
    %2195 = vmatpush1.msra.mxu0 %v1895
    %2196 = vmatprep.subr.mxu0 %v1900
    %2197 = vmatpush1.msra.mxu0 %v1899
    %2198 = vmatprep.subr.mxu0 %v1904
    %2199 = vmatpush1.msra.mxu0 %v1903
    %2200 = vmatprep.subr.mxu0 %v1908
    %2201 = vmatpush1.msra.mxu0 %v1907
    %2202 = vmatprep.subr.mxu0 %v1912
    %2203 = vmatpush1.msra.mxu0 %v1911
    %2204 = vmatprep.subr.mxu0 %v1916
    %2205 = vmatpush1.msra.mxu0 %v1915
    %2206 = vmatprep.subr.mxu0 %v1920
    %2207 = vmatpush1.msra.mxu0 %v1919
    %2208 = vmatprep.subr.mxu0 %v1924
    %2209 = vmatpush1.msra.mxu0 %v1923
    %2210 = vmatprep.subr.mxu0 %v1928
    %2211 = vmatpush1.msra.mxu0 %v1927
    %2212 = vmatprep.subr.mxu0 %v1932
    %2213 = vmatpush1.msra.mxu0 %v1931
    %2214 = vmatprep.subr.mxu0 %v1936
    %2215 = vmatpush1.msra.mxu0 %v1935
    %2216 = vmatprep.subr.mxu0 0.0
    %2217 = vmatpush1.msra.mxu0 0.0
    %2218 = vmatprep.subr.mxu0 0.0
    %2219 = vmatpush1.msra.mxu0 0.0
    %2220 = vmatprep.subr.mxu0 0.0
    %2221 = vmatpush1.msra.mxu0 0.0
    %2222 = vmatprep.subr.mxu0 0.0
    %2223 = vmatpush1.msra.mxu0 0.0
    %2224 = vmatprep.subr.mxu0 0.0
    %2225 = vmatpush1.msra.mxu0 0.0
    %2226 = vmatprep.subr.mxu0 0.0
    %2227 = vmatpush1.msra.mxu0 0.0
    %2228 = vmatprep.subr.mxu0 0.0
    %2229 = vmatpush1.msra.mxu0 0.0
    %2230 = vmatprep.subr.mxu0 0.0
    %2231 = vmatpush1.msra.mxu0 0.0
    %2232 = vmatprep.subr.mxu0 0.0
    %2233 = vmatpush1.msra.mxu0 0.0
    %2234 = vmatprep.subr.mxu0 0.0
    %2235 = vmatpush1.msra.mxu0 0.0
    %2236 = vmatprep.subr.mxu0 0.0
    %2237 = vmatpush1.msra.mxu0 0.0
    %2238 = vmatprep.subr.mxu0 0.0
    %2239 = vmatpush1.msra.mxu0 0.0
    %2240 = vmatprep.subr.mxu0 0.0
    %2241 = vmatpush1.msra.mxu0 0.0
    %2242 = vmatprep.subr.mxu0 0.0
    %2243 = vmatpush1.msra.mxu0 0.0
    %2244 = vmatprep.subr.mxu0 0.0
    %2245 = vmatpush1.msra.mxu0 0.0
    %2246 = vmatprep.subr.mxu0 0.0
    %2247 = vmatpush1.msra.mxu0 0.0
    %2248 = vmatprep.mubr.f32.mxu0 0.0
    %2249 = vmatmul.mubr.f32.gmra.mrb[0].mxu0 0.0
    %v2250 = vpop.f32.mrb[0].mxu0
    %v2251 = vadd.f32 0.0, %v2250
    %v2252 = vpop.f32.mrb[0].mxu0
    %v2253 = vadd.f32 0.0, %v2252
    %2254 = vdwg.mxu0
    %v2255 = vadd.f32 %v2026, %v2180
    %v2256 = vadd.f32 %v2028, %v2182
    %v2257 = vadd.f32 %v2103, %v2251
    %v2258 = vadd.f32 %v2105, %v2253
    %v2259 = vxor.u32 %v2255, 2147483648
    %v2260 = vmul.f32 %v2259, 1.442695
    %v2261 = vpow.pop %v2260
    %v2262 = vadd.f32 %v2261, 1.0
    %v2263 = vrcp.pop %v2262
    %v2264 = vmul.f32 1.0, %v2263
    %v2265 = vxor.u32 %v2256, 2147483648
    %v2266 = vmul.f32 %v2265, 1.442695
    %v2267 = vpow.pop %v2266
    %v2268 = vadd.f32 %v2267, 1.0
    %v2269 = vrcp.pop %v2268
    %v2270 = vmul.f32 1.0, %v2269
    %v2271 = vtanh.pop %v2257
    %v2272 = vxor.u32 %v2258, 2147483648
    %v2273 = vmul.f32 %v2272, 1.442695
    %v2274 = vpow.pop %v2273
    %v2275 = vadd.f32 %v2274, 1.0
    %v2276 = vrcp.pop %v2275
    %v2277 = vmul.f32 1.0, %v2276
    %v2278 = vmul.f32 %v2270, 0.0
    %v2279 = vmul.f32 %v2264, %v2271
    %v2280 = vadd.f32 %v2278, %v2279
    %v2281 = vtanh.pop %v2280
    %v2282 = vmul.f32 %v2277, %v2281
    %2283 = vst [vmem:[#allocation3] sm:$0x3] %v2282
    %2284 = vmatprep.subr.mxu0 %v1874
    %2285 = vmatpush1.msra.mxu0 %v1873
    %2286 = vmatprep.subr.mxu0 %v1878
    %2287 = vmatpush1.msra.mxu0 %v1877
    %2288 = vmatprep.subr.mxu0 %v1882
    %2289 = vmatpush1.msra.mxu0 %v1881
    %2290 = vmatprep.subr.mxu0 %v1886
    %2291 = vmatpush1.msra.mxu0 %v1885
    %2292 = vmatprep.subr.mxu0 %v1890
    %2293 = vmatpush1.msra.mxu0 %v1889
    %2294 = vmatprep.subr.mxu0 %v1894
    %2295 = vmatpush1.msra.mxu0 %v1893
    %2296 = vmatprep.subr.mxu0 %v1898
    %2297 = vmatpush1.msra.mxu0 %v1897
    %2298 = vmatprep.subr.mxu0 %v1902
    %2299 = vmatpush1.msra.mxu0 %v1901
    %2300 = vmatprep.subr.mxu0 %v1906
    %2301 = vmatpush1.msra.mxu0 %v1905
    %2302 = vmatprep.subr.mxu0 %v1910
    %2303 = vmatpush1.msra.mxu0 %v1909
    %2304 = vmatprep.subr.mxu0 %v1914
    %2305 = vmatpush1.msra.mxu0 %v1913
    %2306 = vmatprep.subr.mxu0 %v1918
    %2307 = vmatpush1.msra.mxu0 %v1917
    %2308 = vmatprep.subr.mxu0 %v1922
    %2309 = vmatpush1.msra.mxu0 %v1921
    %2310 = vmatprep.subr.mxu0 %v1926
    %2311 = vmatpush1.msra.mxu0 %v1925
    %2312 = vmatprep.subr.mxu0 %v1930
    %2313 = vmatpush1.msra.mxu0 %v1929
    %2314 = vmatprep.subr.mxu0 %v1934
    %2315 = vmatpush1.msra.mxu0 %v1933
    %2316 = vmatprep.subr.mxu0 0.0
    %2317 = vmatpush1.msra.mxu0 0.0
    %2318 = vmatprep.subr.mxu0 0.0
    %2319 = vmatpush1.msra.mxu0 0.0
    %2320 = vmatprep.subr.mxu0 0.0
    %2321 = vmatpush1.msra.mxu0 0.0
    %2322 = vmatprep.subr.mxu0 0.0
    %2323 = vmatpush1.msra.mxu0 0.0
    %2324 = vmatprep.subr.mxu0 0.0
    %2325 = vmatpush1.msra.mxu0 0.0
    %2326 = vmatprep.subr.mxu0 0.0
    %2327 = vmatpush1.msra.mxu0 0.0
    %2328 = vmatprep.subr.mxu0 0.0
    %2329 = vmatpush1.msra.mxu0 0.0
    %2330 = vmatprep.subr.mxu0 0.0
    %2331 = vmatpush1.msra.mxu0 0.0
    %2332 = vmatprep.subr.mxu0 0.0
    %2333 = vmatpush1.msra.mxu0 0.0
    %2334 = vmatprep.subr.mxu0 0.0
    %2335 = vmatpush1.msra.mxu0 0.0
    %2336 = vmatprep.subr.mxu0 0.0
    %2337 = vmatpush1.msra.mxu0 0.0
    %2338 = vmatprep.subr.mxu0 0.0
    %2339 = vmatpush1.msra.mxu0 0.0
    %2340 = vmatprep.subr.mxu0 0.0
    %2341 = vmatpush1.msra.mxu0 0.0
    %2342 = vmatprep.subr.mxu0 0.0
    %2343 = vmatpush1.msra.mxu0 0.0
    %2344 = vmatprep.subr.mxu0 0.0
    %2345 = vmatpush1.msra.mxu0 0.0
    %2346 = vmatprep.subr.mxu0 0.0
    %2347 = vmatpush1.msra.mxu0 0.0
    %2348 = vmatprep.mubr.f32.mxu0 0.0
    %2349 = vmatmul.mubr.f32.gmra.mrb[0].mxu0 %v2282
    %v2350 = vpop.f32.mrb[0].mxu0
    %v2351 = vadd.f32 0.0, %v2350
    %v2352 = vpop.f32.mrb[0].mxu0
    %v2353 = vadd.f32 0.0, %v2352
    %2354 = vdwg.mxu0
    %2355 = vmatprep.subr.mxu0 %v1876
    %2356 = vmatpush1.msra.mxu0 %v1875
    %2357 = vmatprep.subr.mxu0 %v1880
    %2358 = vmatpush1.msra.mxu0 %v1879
    %2359 = vmatprep.subr.mxu0 %v1884
    %2360 = vmatpush1.msra.mxu0 %v1883
    %2361 = vmatprep.subr.mxu0 %v1888
    %2362 = vmatpush1.msra.mxu0 %v1887
    %2363 = vmatprep.subr.mxu0 %v1892
    %2364 = vmatpush1.msra.mxu0 %v1891
    %2365 = vmatprep.subr.mxu0 %v1896
    %2366 = vmatpush1.msra.mxu0 %v1895
    %2367 = vmatprep.subr.mxu0 %v1900
    %2368 = vmatpush1.msra.mxu0 %v1899
    %2369 = vmatprep.subr.mxu0 %v1904
    %2370 = vmatpush1.msra.mxu0 %v1903
    %2371 = vmatprep.subr.mxu0 %v1908
    %2372 = vmatpush1.msra.mxu0 %v1907
    %2373 = vmatprep.subr.mxu0 %v1912
    %2374 = vmatpush1.msra.mxu0 %v1911
    %2375 = vmatprep.subr.mxu0 %v1916
    %2376 = vmatpush1.msra.mxu0 %v1915
    %2377 = vmatprep.subr.mxu0 %v1920
    %2378 = vmatpush1.msra.mxu0 %v1919
    %2379 = vmatprep.subr.mxu0 %v1924
    %2380 = vmatpush1.msra.mxu0 %v1923
    %2381 = vmatprep.subr.mxu0 %v1928
    %2382 = vmatpush1.msra.mxu0 %v1927
    %2383 = vmatprep.subr.mxu0 %v1932
    %2384 = vmatpush1.msra.mxu0 %v1931
    %2385 = vmatprep.subr.mxu0 %v1936
    %2386 = vmatpush1.msra.mxu0 %v1935
    %2387 = vmatprep.subr.mxu0 0.0
    %2388 = vmatpush1.msra.mxu0 0.0
    %2389 = vmatprep.subr.mxu0 0.0
    %2390 = vmatpush1.msra.mxu0 0.0
    %2391 = vmatprep.subr.mxu0 0.0
    %2392 = vmatpush1.msra.mxu0 0.0
    %2393 = vmatprep.subr.mxu0 0.0
    %2394 = vmatpush1.msra.mxu0 0.0
    %2395 = vmatprep.subr.mxu0 0.0
    %2396 = vmatpush1.msra.mxu0 0.0
    %2397 = vmatprep.subr.mxu0 0.0
    %2398 = vmatpush1.msra.mxu0 0.0
    %2399 = vmatprep.subr.mxu0 0.0
    %2400 = vmatpush1.msra.mxu0 0.0
    %2401 = vmatprep.subr.mxu0 0.0
    %2402 = vmatpush1.msra.mxu0 0.0
    %2403 = vmatprep.subr.mxu0 0.0
    %2404 = vmatpush1.msra.mxu0 0.0
    %2405 = vmatprep.subr.mxu0 0.0
    %2406 = vmatpush1.msra.mxu0 0.0
    %2407 = vmatprep.subr.mxu0 0.0
    %2408 = vmatpush1.msra.mxu0 0.0
    %2409 = vmatprep.subr.mxu0 0.0
    %2410 = vmatpush1.msra.mxu0 0.0
    %2411 = vmatprep.subr.mxu0 0.0
    %2412 = vmatpush1.msra.mxu0 0.0
    %2413 = vmatprep.subr.mxu0 0.0
    %2414 = vmatpush1.msra.mxu0 0.0
    %2415 = vmatprep.subr.mxu0 0.0
    %2416 = vmatpush1.msra.mxu0 0.0
    %2417 = vmatprep.subr.mxu0 0.0
    %2418 = vmatpush1.msra.mxu0 0.0
    %2419 = vmatprep.mubr.f32.mxu0 0.0
    %2420 = vmatmul.mubr.f32.gmra.mrb[0].mxu0 %v2282
    %v2421 = vpop.f32.mrb[0].mxu0
    %v2422 = vadd.f32 0.0, %v2421
    %v2423 = vpop.f32.mrb[0].mxu0
    %v2424 = vadd.f32 0.0, %v2423
    %2425 = vdwg.mxu0
    %v2430 = vrot.slane %v2351, 6
    %v2431 = vrot.slane %v2353, 6
    %v2432 = vrot.slane %v2422, 6
    %v2433 = vrot.slane %v2424, 6
    %v2438 = vadd.f32 %v2026, %v2430
    %v2439 = vadd.f32 %v2028, %v2431
    %v2440 = vadd.f32 %v2103, %v2432
    %v2441 = vadd.f32 %v2105, %v2433
    %v2442 = vxor.u32 %v2438, 2147483648
    %v2443 = vmul.f32 %v2442, 1.442695
    %v2444 = vpow.pop %v2443
    %v2445 = vadd.f32 %v2444, 1.0
    %v2446 = vrcp.pop %v2445
    %v2447 = vmul.f32 1.0, %v2446
    %v2448 = vxor.u32 %v2439, 2147483648
    %v2449 = vmul.f32 %v2448, 1.442695
    %v2450 = vpow.pop %v2449
    %v2451 = vadd.f32 %v2450, 1.0
    %v2452 = vrcp.pop %v2451
    %v2453 = vmul.f32 1.0, %v2452
    %v2454 = vtanh.pop %v2440
    %v2455 = vxor.u32 %v2441, 2147483648
    %v2456 = vmul.f32 %v2455, 1.442695
    %v2457 = vpow.pop %v2456
    %v2458 = vadd.f32 %v2457, 1.0
    %v2459 = vrcp.pop %v2458
    %v2460 = vmul.f32 1.0, %v2459
    %v2462 = vrot.slane %v2280, 6
    %v2464 = vmul.f32 %v2453, %v2462
    %v2465 = vmul.f32 %v2447, %v2454
    %v2466 = vadd.f32 %v2464, %v2465
    %v2467 = vtanh.pop %v2466
    %v2468 = vmul.f32 %v2460, %v2467
    %2469 = vst [vmem:[#allocation3] sm:$0xc] %v2468
    %v2471 = vrot.slane %v2468, 2
    %2473 = vmatprep.subr.mxu0 %v1874
    %2474 = vmatpush1.msra.mxu0 %v1873
    %2475 = vmatprep.subr.mxu0 %v1878
    %2476 = vmatpush1.msra.mxu0 %v1877
    %2477 = vmatprep.subr.mxu0 %v1882
    %2478 = vmatpush1.msra.mxu0 %v1881
    %2479 = vmatprep.subr.mxu0 %v1886
    %2480 = vmatpush1.msra.mxu0 %v1885
    %2481 = vmatprep.subr.mxu0 %v1890
    %2482 = vmatpush1.msra.mxu0 %v1889
    %2483 = vmatprep.subr.mxu0 %v1894
    %2484 = vmatpush1.msra.mxu0 %v1893
    %2485 = vmatprep.subr.mxu0 %v1898
    %2486 = vmatpush1.msra.mxu0 %v1897
    %2487 = vmatprep.subr.mxu0 %v1902
    %2488 = vmatpush1.msra.mxu0 %v1901
    %2489 = vmatprep.subr.mxu0 %v1906
    %2490 = vmatpush1.msra.mxu0 %v1905
    %2491 = vmatprep.subr.mxu0 %v1910
    %2492 = vmatpush1.msra.mxu0 %v1909
    %2493 = vmatprep.subr.mxu0 %v1914
    %2494 = vmatpush1.msra.mxu0 %v1913
    %2495 = vmatprep.subr.mxu0 %v1918
    %2496 = vmatpush1.msra.mxu0 %v1917
    %2497 = vmatprep.subr.mxu0 %v1922
    %2498 = vmatpush1.msra.mxu0 %v1921
    %2499 = vmatprep.subr.mxu0 %v1926
    %2500 = vmatpush1.msra.mxu0 %v1925
    %2501 = vmatprep.subr.mxu0 %v1930
    %2502 = vmatpush1.msra.mxu0 %v1929
    %2503 = vmatprep.subr.mxu0 %v1934
    %2504 = vmatpush1.msra.mxu0 %v1933
    %2505 = vmatprep.subr.mxu0 0.0
    %2506 = vmatpush1.msra.mxu0 0.0
    %2507 = vmatprep.subr.mxu0 0.0
    %2508 = vmatpush1.msra.mxu0 0.0
    %2509 = vmatprep.subr.mxu0 0.0
    %2510 = vmatpush1.msra.mxu0 0.0
    %2511 = vmatprep.subr.mxu0 0.0
    %2512 = vmatpush1.msra.mxu0 0.0
    %2513 = vmatprep.subr.mxu0 0.0
    %2514 = vmatpush1.msra.mxu0 0.0
    %2515 = vmatprep.subr.mxu0 0.0
    %2516 = vmatpush1.msra.mxu0 0.0
    %2517 = vmatprep.subr.mxu0 0.0
    %2518 = vmatpush1.msra.mxu0 0.0
    %2519 = vmatprep.subr.mxu0 0.0
    %2520 = vmatpush1.msra.mxu0 0.0
    %2521 = vmatprep.subr.mxu0 0.0
    %2522 = vmatpush1.msra.mxu0 0.0
    %2523 = vmatprep.subr.mxu0 0.0
    %2524 = vmatpush1.msra.mxu0 0.0
    %2525 = vmatprep.subr.mxu0 0.0
    %2526 = vmatpush1.msra.mxu0 0.0
    %2527 = vmatprep.subr.mxu0 0.0
    %2528 = vmatpush1.msra.mxu0 0.0
    %2529 = vmatprep.subr.mxu0 0.0
    %2530 = vmatpush1.msra.mxu0 0.0
    %2531 = vmatprep.subr.mxu0 0.0
    %2532 = vmatpush1.msra.mxu0 0.0
    %2533 = vmatprep.subr.mxu0 0.0
    %2534 = vmatpush1.msra.mxu0 0.0
    %2535 = vmatprep.subr.mxu0 0.0
    %2536 = vmatpush1.msra.mxu0 0.0
    %2537 = vmatprep.mubr.f32.mxu0 0.0
    %2538 = vmatmul.mubr.f32.gmra.mrb[0].mxu0 %v2471
    %v2539 = vpop.f32.mrb[0].mxu0
    %v2540 = vadd.f32 0.0, %v2539
    %v2541 = vpop.f32.mrb[0].mxu0
    %v2542 = vadd.f32 0.0, %v2541
    %2543 = vdwg.mxu0
    %2544 = vmatprep.subr.mxu0 %v1876
    %2545 = vmatpush1.msra.mxu0 %v1875
    %2546 = vmatprep.subr.mxu0 %v1880
    %2547 = vmatpush1.msra.mxu0 %v1879
    %2548 = vmatprep.subr.mxu0 %v1884
    %2549 = vmatpush1.msra.mxu0 %v1883
    %2550 = vmatprep.subr.mxu0 %v1888
    %2551 = vmatpush1.msra.mxu0 %v1887
    %2552 = vmatprep.subr.mxu0 %v1892
    %2553 = vmatpush1.msra.mxu0 %v1891
    %2554 = vmatprep.subr.mxu0 %v1896
    %2555 = vmatpush1.msra.mxu0 %v1895
    %2556 = vmatprep.subr.mxu0 %v1900
    %2557 = vmatpush1.msra.mxu0 %v1899
    %2558 = vmatprep.subr.mxu0 %v1904
    %2559 = vmatpush1.msra.mxu0 %v1903
    %2560 = vmatprep.subr.mxu0 %v1908
    %2561 = vmatpush1.msra.mxu0 %v1907
    %2562 = vmatprep.subr.mxu0 %v1912
    %2563 = vmatpush1.msra.mxu0 %v1911
    %2564 = vmatprep.subr.mxu0 %v1916
    %2565 = vmatpush1.msra.mxu0 %v1915
    %2566 = vmatprep.subr.mxu0 %v1920
    %2567 = vmatpush1.msra.mxu0 %v1919
    %2568 = vmatprep.subr.mxu0 %v1924
    %2569 = vmatpush1.msra.mxu0 %v1923
    %2570 = vmatprep.subr.mxu0 %v1928
    %2571 = vmatpush1.msra.mxu0 %v1927
    %2572 = vmatprep.subr.mxu0 %v1932
    %2573 = vmatpush1.msra.mxu0 %v1931
    %2574 = vmatprep.subr.mxu0 %v1936
    %2575 = vmatpush1.msra.mxu0 %v1935
    %2576 = vmatprep.subr.mxu0 0.0
    %2577 = vmatpush1.msra.mxu0 0.0
    %2578 = vmatprep.subr.mxu0 0.0
    %2579 = vmatpush1.msra.mxu0 0.0
    %2580 = vmatprep.subr.mxu0 0.0
    %2581 = vmatpush1.msra.mxu0 0.0
    %2582 = vmatprep.subr.mxu0 0.0
    %2583 = vmatpush1.msra.mxu0 0.0
    %2584 = vmatprep.subr.mxu0 0.0
    %2585 = vmatpush1.msra.mxu0 0.0
    %2586 = vmatprep.subr.mxu0 0.0
    %2587 = vmatpush1.msra.mxu0 0.0
    %2588 = vmatprep.subr.mxu0 0.0
    %2589 = vmatpush1.msra.mxu0 0.0
    %2590 = vmatprep.subr.mxu0 0.0
    %2591 = vmatpush1.msra.mxu0 0.0
    %2592 = vmatprep.subr.mxu0 0.0
    %2593 = vmatpush1.msra.mxu0 0.0
    %2594 = vmatprep.subr.mxu0 0.0
    %2595 = vmatpush1.msra.mxu0 0.0
    %2596 = vmatprep.subr.mxu0 0.0
    %2597 = vmatpush1.msra.mxu0 0.0
    %2598 = vmatprep.subr.mxu0 0.0
    %2599 = vmatpush1.msra.mxu0 0.0
    %2600 = vmatprep.subr.mxu0 0.0
    %2601 = vmatpush1.msra.mxu0 0.0
    %2602 = vmatprep.subr.mxu0 0.0
    %2603 = vmatpush1.msra.mxu0 0.0
    %2604 = vmatprep.subr.mxu0 0.0
    %2605 = vmatpush1.msra.mxu0 0.0
    %2606 = vmatprep.subr.mxu0 0.0
    %2607 = vmatpush1.msra.mxu0 0.0
    %2608 = vmatprep.mubr.f32.mxu0 0.0
    %2609 = vmatmul.mubr.f32.gmra.mrb[0].mxu0 %v2471
    %v2610 = vpop.f32.mrb[0].mxu0
    %v2611 = vadd.f32 0.0, %v2610
    %v2612 = vpop.f32.mrb[0].mxu0
    %v2613 = vadd.f32 0.0, %v2612
    %2614 = vdwg.mxu0
    %v2619 = vrot.slane %v2540, 4
    %v2620 = vrot.slane %v2542, 4
    %v2621 = vrot.slane %v2611, 4
    %v2622 = vrot.slane %v2613, 4
    %v2627 = vadd.f32 %v2026, %v2619
    %v2628 = vadd.f32 %v2028, %v2620
    %v2629 = vadd.f32 %v2103, %v2621
    %v2630 = vadd.f32 %v2105, %v2622
    %v2631 = vxor.u32 %v2627, 2147483648
    %v2632 = vmul.f32 %v2631, 1.442695
    %v2633 = vpow.pop %v2632
    %v2634 = vadd.f32 %v2633, 1.0
    %v2635 = vrcp.pop %v2634
    %v2636 = vmul.f32 1.0, %v2635
    %v2637 = vxor.u32 %v2628, 2147483648
    %v2638 = vmul.f32 %v2637, 1.442695
    %v2639 = vpow.pop %v2638
    %v2640 = vadd.f32 %v2639, 1.0
    %v2641 = vrcp.pop %v2640
    %v2642 = vmul.f32 1.0, %v2641
    %v2643 = vtanh.pop %v2629
    %v2644 = vxor.u32 %v2630, 2147483648
    %v2645 = vmul.f32 %v2644, 1.442695
    %v2646 = vpow.pop %v2645
    %v2647 = vadd.f32 %v2646, 1.0
    %v2648 = vrcp.pop %v2647
    %v2649 = vmul.f32 1.0, %v2648
    %v2651 = vrot.slane %v2466, 6
    %v2653 = vmul.f32 %v2642, %v2651
    %v2654 = vmul.f32 %v2636, %v2643
    %v2655 = vadd.f32 %v2653, %v2654
    %v2656 = vtanh.pop %v2655
    %v2657 = vmul.f32 %v2649, %v2656
    %2658 = vst [vmem:[#allocation3] sm:$0x30] %v2657
    %v2660 = vrot.slane %v2657, 4
    %2662 = vmatprep.subr.mxu0 %v1874
    %2663 = vmatpush1.msra.mxu0 %v1873
    %2664 = vmatprep.subr.mxu0 %v1878
    %2665 = vmatpush1.msra.mxu0 %v1877
    %2666 = vmatprep.subr.mxu0 %v1882
    %2667 = vmatpush1.msra.mxu0 %v1881
    %2668 = vmatprep.subr.mxu0 %v1886
    %2669 = vmatpush1.msra.mxu0 %v1885
    %2670 = vmatprep.subr.mxu0 %v1890
    %2671 = vmatpush1.msra.mxu0 %v1889
    %2672 = vmatprep.subr.mxu0 %v1894
    %2673 = vmatpush1.msra.mxu0 %v1893
    %2674 = vmatprep.subr.mxu0 %v1898
    %2675 = vmatpush1.msra.mxu0 %v1897
    %2676 = vmatprep.subr.mxu0 %v1902
    %2677 = vmatpush1.msra.mxu0 %v1901
    %2678 = vmatprep.subr.mxu0 %v1906
    %2679 = vmatpush1.msra.mxu0 %v1905
    %2680 = vmatprep.subr.mxu0 %v1910
    %2681 = vmatpush1.msra.mxu0 %v1909
    %2682 = vmatprep.subr.mxu0 %v1914
    %2683 = vmatpush1.msra.mxu0 %v1913
    %2684 = vmatprep.subr.mxu0 %v1918
    %2685 = vmatpush1.msra.mxu0 %v1917
    %2686 = vmatprep.subr.mxu0 %v1922
    %2687 = vmatpush1.msra.mxu0 %v1921
    %2688 = vmatprep.subr.mxu0 %v1926
    %2689 = vmatpush1.msra.mxu0 %v1925
    %2690 = vmatprep.subr.mxu0 %v1930
    %2691 = vmatpush1.msra.mxu0 %v1929
    %2692 = vmatprep.subr.mxu0 %v1934
    %2693 = vmatpush1.msra.mxu0 %v1933
    %2694 = vmatprep.subr.mxu0 0.0
    %2695 = vmatpush1.msra.mxu0 0.0
    %2696 = vmatprep.subr.mxu0 0.0
    %2697 = vmatpush1.msra.mxu0 0.0
    %2698 = vmatprep.subr.mxu0 0.0
    %2699 = vmatpush1.msra.mxu0 0.0
    %2700 = vmatprep.subr.mxu0 0.0
    %2701 = vmatpush1.msra.mxu0 0.0
    %2702 = vmatprep.subr.mxu0 0.0
    %2703 = vmatpush1.msra.mxu0 0.0
    %2704 = vmatprep.subr.mxu0 0.0
    %2705 = vmatpush1.msra.mxu0 0.0
    %2706 = vmatprep.subr.mxu0 0.0
    %2707 = vmatpush1.msra.mxu0 0.0
    %2708 = vmatprep.subr.mxu0 0.0
    %2709 = vmatpush1.msra.mxu0 0.0
    %2710 = vmatprep.subr.mxu0 0.0
    %2711 = vmatpush1.msra.mxu0 0.0
    %2712 = vmatprep.subr.mxu0 0.0
    %2713 = vmatpush1.msra.mxu0 0.0
    %2714 = vmatprep.subr.mxu0 0.0
    %2715 = vmatpush1.msra.mxu0 0.0
    %2716 = vmatprep.subr.mxu0 0.0
    %2717 = vmatpush1.msra.mxu0 0.0
    %2718 = vmatprep.subr.mxu0 0.0
    %2719 = vmatpush1.msra.mxu0 0.0
    %2720 = vmatprep.subr.mxu0 0.0
    %2721 = vmatpush1.msra.mxu0 0.0
    %2722 = vmatprep.subr.mxu0 0.0
    %2723 = vmatpush1.msra.mxu0 0.0
    %2724 = vmatprep.subr.mxu0 0.0
    %2725 = vmatpush1.msra.mxu0 0.0
    %2726 = vmatprep.mubr.f32.mxu0 0.0
    %2727 = vmatmul.mubr.f32.gmra.mrb[0].mxu0 %v2660
    %v2728 = vpop.f32.mrb[0].mxu0
    %v2729 = vadd.f32 0.0, %v2728
    %v2730 = vpop.f32.mrb[0].mxu0
    %v2731 = vadd.f32 0.0, %v2730
    %2732 = vdwg.mxu0
    %2733 = vmatprep.subr.mxu0 %v1876
    %2734 = vmatpush1.msra.mxu0 %v1875
    %2735 = vmatprep.subr.mxu0 %v1880
    %2736 = vmatpush1.msra.mxu0 %v1879
    %2737 = vmatprep.subr.mxu0 %v1884
    %2738 = vmatpush1.msra.mxu0 %v1883
    %2739 = vmatprep.subr.mxu0 %v1888
    %2740 = vmatpush1.msra.mxu0 %v1887
    %2741 = vmatprep.subr.mxu0 %v1892
    %2742 = vmatpush1.msra.mxu0 %v1891
    %2743 = vmatprep.subr.mxu0 %v1896
    %2744 = vmatpush1.msra.mxu0 %v1895
    %2745 = vmatprep.subr.mxu0 %v1900
    %2746 = vmatpush1.msra.mxu0 %v1899
    %2747 = vmatprep.subr.mxu0 %v1904
    %2748 = vmatpush1.msra.mxu0 %v1903
    %2749 = vmatprep.subr.mxu0 %v1908
    %2750 = vmatpush1.msra.mxu0 %v1907
    %2751 = vmatprep.subr.mxu0 %v1912
    %2752 = vmatpush1.msra.mxu0 %v1911
    %2753 = vmatprep.subr.mxu0 %v1916
    %2754 = vmatpush1.msra.mxu0 %v1915
    %2755 = vmatprep.subr.mxu0 %v1920
    %2756 = vmatpush1.msra.mxu0 %v1919
    %2757 = vmatprep.subr.mxu0 %v1924
    %2758 = vmatpush1.msra.mxu0 %v1923
    %2759 = vmatprep.subr.mxu0 %v1928
    %2760 = vmatpush1.msra.mxu0 %v1927
    %2761 = vmatprep.subr.mxu0 %v1932
    %2762 = vmatpush1.msra.mxu0 %v1931
    %2763 = vmatprep.subr.mxu0 %v1936
    %2764 = vmatpush1.msra.mxu0 %v1935
    %2765 = vmatprep.subr.mxu0 0.0
    %2766 = vmatpush1.msra.mxu0 0.0
    %2767 = vmatprep.subr.mxu0 0.0
    %2768 = vmatpush1.msra.mxu0 0.0
    %2769 = vmatprep.subr.mxu0 0.0
    %2770 = vmatpush1.msra.mxu0 0.0
    %2771 = vmatprep.subr.mxu0 0.0
    %2772 = vmatpush1.msra.mxu0 0.0
    %2773 = vmatprep.subr.mxu0 0.0
    %2774 = vmatpush1.msra.mxu0 0.0
    %2775 = vmatprep.subr.mxu0 0.0
    %2776 = vmatpush1.msra.mxu0 0.0
    %2777 = vmatprep.subr.mxu0 0.0
    %2778 = vmatpush1.msra.mxu0 0.0
    %2779 = vmatprep.subr.mxu0 0.0
    %2780 = vmatpush1.msra.mxu0 0.0
    %2781 = vmatprep.subr.mxu0 0.0
    %2782 = vmatpush1.msra.mxu0 0.0
    %2783 = vmatprep.subr.mxu0 0.0
    %2784 = vmatpush1.msra.mxu0 0.0
    %2785 = vmatprep.subr.mxu0 0.0
    %2786 = vmatpush1.msra.mxu0 0.0
    %2787 = vmatprep.subr.mxu0 0.0
    %2788 = vmatpush1.msra.mxu0 0.0
    %2789 = vmatprep.subr.mxu0 0.0
    %2790 = vmatpush1.msra.mxu0 0.0
    %2791 = vmatprep.subr.mxu0 0.0
    %2792 = vmatpush1.msra.mxu0 0.0
    %2793 = vmatprep.subr.mxu0 0.0
    %2794 = vmatpush1.msra.mxu0 0.0
    %2795 = vmatprep.subr.mxu0 0.0
    %2796 = vmatpush1.msra.mxu0 0.0
    %2797 = vmatprep.mubr.f32.mxu0 0.0
    %2798 = vmatmul.mubr.f32.gmra.mrb[0].mxu0 %v2660
    %v2799 = vpop.f32.mrb[0].mxu0
    %v2800 = vadd.f32 0.0, %v2799
    %v2801 = vpop.f32.mrb[0].mxu0
    %v2802 = vadd.f32 0.0, %v2801
    %2803 = vdwg.mxu0
    %v2808 = vrot.slane %v2729, 2
    %v2809 = vrot.slane %v2731, 2
    %v2810 = vrot.slane %v2800, 2
    %v2811 = vrot.slane %v2802, 2
    %v2816 = vadd.f32 %v2026, %v2808
    %v2817 = vadd.f32 %v2028, %v2809
    %v2818 = vadd.f32 %v2103, %v2810
    %v2819 = vadd.f32 %v2105, %v2811
    %v2820 = vxor.u32 %v2816, 2147483648
    %v2821 = vmul.f32 %v2820, 1.442695
    %v2822 = vpow.pop %v2821
    %v2823 = vadd.f32 %v2822, 1.0
    %v2824 = vrcp.pop %v2823
    %v2825 = vmul.f32 1.0, %v2824
    %v2826 = vxor.u32 %v2817, 2147483648
    %v2827 = vmul.f32 %v2826, 1.442695
    %v2828 = vpow.pop %v2827
    %v2829 = vadd.f32 %v2828, 1.0
    %v2830 = vrcp.pop %v2829
    %v2831 = vmul.f32 1.0, %v2830
    %v2832 = vtanh.pop %v2818
    %v2833 = vxor.u32 %v2819, 2147483648
    %v2834 = vmul.f32 %v2833, 1.442695
    %v2835 = vpow.pop %v2834
    %v2836 = vadd.f32 %v2835, 1.0
    %v2837 = vrcp.pop %v2836
    %v2838 = vmul.f32 1.0, %v2837
    %v2840 = vrot.slane %v2655, 6
    %v2842 = vmul.f32 %v2831, %v2840
    %v2843 = vmul.f32 %v2825, %v2832
    %v2844 = vadd.f32 %v2842, %v2843
    %v2845 = vtanh.pop %v2844
    %v2846 = vmul.f32 %v2838, %v2845
    %2847 = vst [vmem:[#allocation3] sm:$0xc0] %v2846
    %v2849 = vrot.slane %v2846, 6
    %2851 = vmatprep.subr.mxu0 %v1874
    %2852 = vmatpush1.msra.mxu0 %v1873
    %2853 = vmatprep.subr.mxu0 %v1878
    %2854 = vmatpush1.msra.mxu0 %v1877
    %2855 = vmatprep.subr.mxu0 %v1882
    %2856 = vmatpush1.msra.mxu0 %v1881
    %2857 = vmatprep.subr.mxu0 %v1886
    %2858 = vmatpush1.msra.mxu0 %v1885
    %2859 = vmatprep.subr.mxu0 %v1890
    %2860 = vmatpush1.msra.mxu0 %v1889
    %2861 = vmatprep.subr.mxu0 %v1894
    %2862 = vmatpush1.msra.mxu0 %v1893
    %2863 = vmatprep.subr.mxu0 %v1898
    %2864 = vmatpush1.msra.mxu0 %v1897
    %2865 = vmatprep.subr.mxu0 %v1902
    %2866 = vmatpush1.msra.mxu0 %v1901
    %2867 = vmatprep.subr.mxu0 %v1906
    %2868 = vmatpush1.msra.mxu0 %v1905
    %2869 = vmatprep.subr.mxu0 %v1910
    %2870 = vmatpush1.msra.mxu0 %v1909
    %2871 = vmatprep.subr.mxu0 %v1914
    %2872 = vmatpush1.msra.mxu0 %v1913
    %2873 = vmatprep.subr.mxu0 %v1918
    %2874 = vmatpush1.msra.mxu0 %v1917
    %2875 = vmatprep.subr.mxu0 %v1922
    %2876 = vmatpush1.msra.mxu0 %v1921
    %2877 = vmatprep.subr.mxu0 %v1926
    %2878 = vmatpush1.msra.mxu0 %v1925
    %2879 = vmatprep.subr.mxu0 %v1930
    %2880 = vmatpush1.msra.mxu0 %v1929
    %2881 = vmatprep.subr.mxu0 %v1934
    %2882 = vmatpush1.msra.mxu0 %v1933
    %2883 = vmatprep.subr.mxu0 0.0
    %2884 = vmatpush1.msra.mxu0 0.0
    %2885 = vmatprep.subr.mxu0 0.0
    %2886 = vmatpush1.msra.mxu0 0.0
    %2887 = vmatprep.subr.mxu0 0.0
    %2888 = vmatpush1.msra.mxu0 0.0
    %2889 = vmatprep.subr.mxu0 0.0
    %2890 = vmatpush1.msra.mxu0 0.0
    %2891 = vmatprep.subr.mxu0 0.0
    %2892 = vmatpush1.msra.mxu0 0.0
    %2893 = vmatprep.subr.mxu0 0.0
    %2894 = vmatpush1.msra.mxu0 0.0
    %2895 = vmatprep.subr.mxu0 0.0
    %2896 = vmatpush1.msra.mxu0 0.0
    %2897 = vmatprep.subr.mxu0 0.0
    %2898 = vmatpush1.msra.mxu0 0.0
    %2899 = vmatprep.subr.mxu0 0.0
    %2900 = vmatpush1.msra.mxu0 0.0
    %2901 = vmatprep.subr.mxu0 0.0
    %2902 = vmatpush1.msra.mxu0 0.0
    %2903 = vmatprep.subr.mxu0 0.0
    %2904 = vmatpush1.msra.mxu0 0.0
    %2905 = vmatprep.subr.mxu0 0.0
    %2906 = vmatpush1.msra.mxu0 0.0
    %2907 = vmatprep.subr.mxu0 0.0
    %2908 = vmatpush1.msra.mxu0 0.0
    %2909 = vmatprep.subr.mxu0 0.0
    %2910 = vmatpush1.msra.mxu0 0.0
    %2911 = vmatprep.subr.mxu0 0.0
    %2912 = vmatpush1.msra.mxu0 0.0
    %2913 = vmatprep.subr.mxu0 0.0
    %2914 = vmatpush1.msra.mxu0 0.0
    %2915 = vmatprep.mubr.f32.mxu0 0.0
    %2916 = vmatmul.mubr.f32.gmra.mrb[0].mxu0 %v2849
    %v2917 = vpop.f32.mrb[0].mxu0
    %v2918 = vadd.f32 0.0, %v2917
    %v2919 = vpop.f32.mrb[0].mxu0
    %v2920 = vadd.f32 0.0, %v2919
    %2921 = vdwg.mxu0
    %2922 = vmatprep.subr.mxu0 %v1876
    %2923 = vmatpush1.msra.mxu0 %v1875
    %2924 = vmatprep.subr.mxu0 %v1880
    %2925 = vmatpush1.msra.mxu0 %v1879
    %2926 = vmatprep.subr.mxu0 %v1884
    %2927 = vmatpush1.msra.mxu0 %v1883
    %2928 = vmatprep.subr.mxu0 %v1888
    %2929 = vmatpush1.msra.mxu0 %v1887
    %2930 = vmatprep.subr.mxu0 %v1892
    %2931 = vmatpush1.msra.mxu0 %v1891
    %2932 = vmatprep.subr.mxu0 %v1896
    %2933 = vmatpush1.msra.mxu0 %v1895
    %2934 = vmatprep.subr.mxu0 %v1900
    %2935 = vmatpush1.msra.mxu0 %v1899
    %2936 = vmatprep.subr.mxu0 %v1904
    %2937 = vmatpush1.msra.mxu0 %v1903
    %2938 = vmatprep.subr.mxu0 %v1908
    %2939 = vmatpush1.msra.mxu0 %v1907
    %2940 = vmatprep.subr.mxu0 %v1912
    %2941 = vmatpush1.msra.mxu0 %v1911
    %2942 = vmatprep.subr.mxu0 %v1916
    %2943 = vmatpush1.msra.mxu0 %v1915
    %2944 = vmatprep.subr.mxu0 %v1920
    %2945 = vmatpush1.msra.mxu0 %v1919
    %2946 = vmatprep.subr.mxu0 %v1924
    %2947 = vmatpush1.msra.mxu0 %v1923
    %2948 = vmatprep.subr.mxu0 %v1928
    %2949 = vmatpush1.msra.mxu0 %v1927
    %2950 = vmatprep.subr.mxu0 %v1932
    %2951 = vmatpush1.msra.mxu0 %v1931
    %2952 = vmatprep.subr.mxu0 %v1936
    %2953 = vmatpush1.msra.mxu0 %v1935
    %2954 = vmatprep.subr.mxu0 0.0
    %2955 = vmatpush1.msra.mxu0 0.0
    %2956 = vmatprep.subr.mxu0 0.0
    %2957 = vmatpush1.msra.mxu0 0.0
    %2958 = vmatprep.subr.mxu0 0.0
    %2959 = vmatpush1.msra.mxu0 0.0
    %2960 = vmatprep.subr.mxu0 0.0
    %2961 = vmatpush1.msra.mxu0 0.0
    %2962 = vmatprep.subr.mxu0 0.0
    %2963 = vmatpush1.msra.mxu0 0.0
    %2964 = vmatprep.subr.mxu0 0.0
    %2965 = vmatpush1.msra.mxu0 0.0
    %2966 = vmatprep.subr.mxu0 0.0
    %2967 = vmatpush1.msra.mxu0 0.0
    %2968 = vmatprep.subr.mxu0 0.0
    %2969 = vmatpush1.msra.mxu0 0.0
    %2970 = vmatprep.subr.mxu0 0.0
    %2971 = vmatpush1.msra.mxu0 0.0
    %2972 = vmatprep.subr.mxu0 0.0
    %2973 = vmatpush1.msra.mxu0 0.0
    %2974 = vmatprep.subr.mxu0 0.0
    %2975 = vmatpush1.msra.mxu0 0.0
    %2976 = vmatprep.subr.mxu0 0.0
    %2977 = vmatpush1.msra.mxu0 0.0
    %2978 = vmatprep.subr.mxu0 0.0
    %2979 = vmatpush1.msra.mxu0 0.0
    %2980 = vmatprep.subr.mxu0 0.0
    %2981 = vmatpush1.msra.mxu0 0.0
    %2982 = vmatprep.subr.mxu0 0.0
    %2983 = vmatpush1.msra.mxu0 0.0
    %2984 = vmatprep.subr.mxu0 0.0
    %2985 = vmatpush1.msra.mxu0 0.0
    %2986 = vmatprep.mubr.f32.mxu0 0.0
    %2987 = vmatmul.mubr.f32.gmra.mrb[0].mxu0 %v2849
    %v2988 = vpop.f32.mrb[0].mxu0
    %v2989 = vadd.f32 0.0, %v2988
    %v2990 = vpop.f32.mrb[0].mxu0
    %v2991 = vadd.f32 0.0, %v2990
    %2992 = vdwg.mxu0
    %v2993 = vadd.f32 %v2032, %v2918
    %v2994 = vadd.f32 %v2034, %v2920
    %v2995 = vadd.f32 %v2109, %v2989
    %v2996 = vadd.f32 %v2111, %v2991
    %v2997 = vxor.u32 %v2993, 2147483648
    %v2998 = vmul.f32 %v2997, 1.442695
    %v2999 = vpow.pop %v2998
    %v3000 = vadd.f32 %v2999, 1.0
    %v3001 = vrcp.pop %v3000
    %v3002 = vmul.f32 1.0, %v3001
    %v3003 = vxor.u32 %v2994, 2147483648
    %v3004 = vmul.f32 %v3003, 1.442695
    %v3005 = vpow.pop %v3004
    %v3006 = vadd.f32 %v3005, 1.0
    %v3007 = vrcp.pop %v3006
    %v3008 = vmul.f32 1.0, %v3007
    %v3009 = vtanh.pop %v2995
    %v3010 = vxor.u32 %v2996, 2147483648
    %v3011 = vmul.f32 %v3010, 1.442695
    %v3012 = vpow.pop %v3011
    %v3013 = vadd.f32 %v3012, 1.0
    %v3014 = vrcp.pop %v3013
    %v3015 = vmul.f32 1.0, %v3014
    %v3017 = vrot.slane %v2844, 6
    %v3019 = vmul.f32 %v3008, %v3017
    %v3020 = vmul.f32 %v3002, %v3009
    %v3021 = vadd.f32 %v3019, %v3020
    %v3022 = vtanh.pop %v3021
    %v3023 = vmul.f32 %v3015, %v3022
    %3024 = vst [vmem:[#allocation3 + $0x8] sm:$0x3] %v3023
    %3025 = vmatprep.subr.mxu0 %v1874
    %3026 = vmatpush1.msra.mxu0 %v1873
    %3027 = vmatprep.subr.mxu0 %v1878
    %3028 = vmatpush1.msra.mxu0 %v1877
    %3029 = vmatprep.subr.mxu0 %v1882
    %3030 = vmatpush1.msra.mxu0 %v1881
    %3031 = vmatprep.subr.mxu0 %v1886
    %3032 = vmatpush1.msra.mxu0 %v1885
    %3033 = vmatprep.subr.mxu0 %v1890
    %3034 = vmatpush1.msra.mxu0 %v1889
    %3035 = vmatprep.subr.mxu0 %v1894
    %3036 = vmatpush1.msra.mxu0 %v1893
    %3037 = vmatprep.subr.mxu0 %v1898
    %3038 = vmatpush1.msra.mxu0 %v1897
    %3039 = vmatprep.subr.mxu0 %v1902
    %3040 = vmatpush1.msra.mxu0 %v1901
    %3041 = vmatprep.subr.mxu0 %v1906
    %3042 = vmatpush1.msra.mxu0 %v1905
    %3043 = vmatprep.subr.mxu0 %v1910
    %3044 = vmatpush1.msra.mxu0 %v1909
    %3045 = vmatprep.subr.mxu0 %v1914
    %3046 = vmatpush1.msra.mxu0 %v1913
    %3047 = vmatprep.subr.mxu0 %v1918
    %3048 = vmatpush1.msra.mxu0 %v1917
    %3049 = vmatprep.subr.mxu0 %v1922
    %3050 = vmatpush1.msra.mxu0 %v1921
    %3051 = vmatprep.subr.mxu0 %v1926
    %3052 = vmatpush1.msra.mxu0 %v1925
    %3053 = vmatprep.subr.mxu0 %v1930
    %3054 = vmatpush1.msra.mxu0 %v1929
    %3055 = vmatprep.subr.mxu0 %v1934
    %3056 = vmatpush1.msra.mxu0 %v1933
    %3057 = vmatprep.subr.mxu0 0.0
    %3058 = vmatpush1.msra.mxu0 0.0
    %3059 = vmatprep.subr.mxu0 0.0
    %3060 = vmatpush1.msra.mxu0 0.0
    %3061 = vmatprep.subr.mxu0 0.0
    %3062 = vmatpush1.msra.mxu0 0.0
    %3063 = vmatprep.subr.mxu0 0.0
    %3064 = vmatpush1.msra.mxu0 0.0
    %3065 = vmatprep.subr.mxu0 0.0
    %3066 = vmatpush1.msra.mxu0 0.0
    %3067 = vmatprep.subr.mxu0 0.0
    %3068 = vmatpush1.msra.mxu0 0.0
    %3069 = vmatprep.subr.mxu0 0.0
    %3070 = vmatpush1.msra.mxu0 0.0
    %3071 = vmatprep.subr.mxu0 0.0
    %3072 = vmatpush1.msra.mxu0 0.0
    %3073 = vmatprep.subr.mxu0 0.0
    %3074 = vmatpush1.msra.mxu0 0.0
    %3075 = vmatprep.subr.mxu0 0.0
    %3076 = vmatpush1.msra.mxu0 0.0
    %3077 = vmatprep.subr.mxu0 0.0
    %3078 = vmatpush1.msra.mxu0 0.0
    %3079 = vmatprep.subr.mxu0 0.0
    %3080 = vmatpush1.msra.mxu0 0.0
    %3081 = vmatprep.subr.mxu0 0.0
    %3082 = vmatpush1.msra.mxu0 0.0
    %3083 = vmatprep.subr.mxu0 0.0
    %3084 = vmatpush1.msra.mxu0 0.0
    %3085 = vmatprep.subr.mxu0 0.0
    %3086 = vmatpush1.msra.mxu0 0.0
    %3087 = vmatprep.subr.mxu0 0.0
    %3088 = vmatpush1.msra.mxu0 0.0
    %3089 = vmatprep.mubr.f32.mxu0 0.0
    %3090 = vmatmul.mubr.f32.gmra.mrb[0].mxu0 %v3023
    %v3091 = vpop.f32.mrb[0].mxu0
    %v3092 = vadd.f32 0.0, %v3091
    %v3093 = vpop.f32.mrb[0].mxu0
    %v3094 = vadd.f32 0.0, %v3093
    %3095 = vdwg.mxu0
    %3096 = vmatprep.subr.mxu0 %v1876
    %3097 = vmatpush1.msra.mxu0 %v1875
    %3098 = vmatprep.subr.mxu0 %v1880
    %3099 = vmatpush1.msra.mxu0 %v1879
    %3100 = vmatprep.subr.mxu0 %v1884
    %3101 = vmatpush1.msra.mxu0 %v1883
    %3102 = vmatprep.subr.mxu0 %v1888
    %3103 = vmatpush1.msra.mxu0 %v1887
    %3104 = vmatprep.subr.mxu0 %v1892
    %3105 = vmatpush1.msra.mxu0 %v1891
    %3106 = vmatprep.subr.mxu0 %v1896
    %3107 = vmatpush1.msra.mxu0 %v1895
    %3108 = vmatprep.subr.mxu0 %v1900
    %3109 = vmatpush1.msra.mxu0 %v1899
    %3110 = vmatprep.subr.mxu0 %v1904
    %3111 = vmatpush1.msra.mxu0 %v1903
    %3112 = vmatprep.subr.mxu0 %v1908
    %3113 = vmatpush1.msra.mxu0 %v1907
    %3114 = vmatprep.subr.mxu0 %v1912
    %3115 = vmatpush1.msra.mxu0 %v1911
    %3116 = vmatprep.subr.mxu0 %v1916
    %3117 = vmatpush1.msra.mxu0 %v1915
    %3118 = vmatprep.subr.mxu0 %v1920
    %3119 = vmatpush1.msra.mxu0 %v1919
    %3120 = vmatprep.subr.mxu0 %v1924
    %3121 = vmatpush1.msra.mxu0 %v1923
    %3122 = vmatprep.subr.mxu0 %v1928
    %3123 = vmatpush1.msra.mxu0 %v1927
    %3124 = vmatprep.subr.mxu0 %v1932
    %3125 = vmatpush1.msra.mxu0 %v1931
    %3126 = vmatprep.subr.mxu0 %v1936
    %3127 = vmatpush1.msra.mxu0 %v1935
    %3128 = vmatprep.subr.mxu0 0.0
    %3129 = vmatpush1.msra.mxu0 0.0
    %3130 = vmatprep.subr.mxu0 0.0
    %3131 = vmatpush1.msra.mxu0 0.0
    %3132 = vmatprep.subr.mxu0 0.0
    %3133 = vmatpush1.msra.mxu0 0.0
    %3134 = vmatprep.subr.mxu0 0.0
    %3135 = vmatpush1.msra.mxu0 0.0
    %3136 = vmatprep.subr.mxu0 0.0
    %3137 = vmatpush1.msra.mxu0 0.0
    %3138 = vmatprep.subr.mxu0 0.0
    %3139 = vmatpush1.msra.mxu0 0.0
    %3140 = vmatprep.subr.mxu0 0.0
    %3141 = vmatpush1.msra.mxu0 0.0
    %3142 = vmatprep.subr.mxu0 0.0
    %3143 = vmatpush1.msra.mxu0 0.0
    %3144 = vmatprep.subr.mxu0 0.0
    %3145 = vmatpush1.msra.mxu0 0.0
    %3146 = vmatprep.subr.mxu0 0.0
    %3147 = vmatpush1.msra.mxu0 0.0
    %3148 = vmatprep.subr.mxu0 0.0
    %3149 = vmatpush1.msra.mxu0 0.0
    %3150 = vmatprep.subr.mxu0 0.0
    %3151 = vmatpush1.msra.mxu0 0.0
    %3152 = vmatprep.subr.mxu0 0.0
    %3153 = vmatpush1.msra.mxu0 0.0
    %3154 = vmatprep.subr.mxu0 0.0
    %3155 = vmatpush1.msra.mxu0 0.0
    %3156 = vmatprep.subr.mxu0 0.0
    %3157 = vmatpush1.msra.mxu0 0.0
    %3158 = vmatprep.subr.mxu0 0.0
    %3159 = vmatpush1.msra.mxu0 0.0
    %3160 = vmatprep.mubr.f32.mxu0 0.0
    %3161 = vmatmul.mubr.f32.gmra.mrb[0].mxu0 %v3023
    %v3162 = vpop.f32.mrb[0].mxu0
    %v3163 = vadd.f32 0.0, %v3162
    %v3164 = vpop.f32.mrb[0].mxu0
    %v3165 = vadd.f32 0.0, %v3164
    %3166 = vdwg.mxu0
    %v3171 = vrot.slane %v3092, 6
    %v3172 = vrot.slane %v3094, 6
    %v3173 = vrot.slane %v3163, 6
    %v3174 = vrot.slane %v3165, 6
    %v3179 = vadd.f32 %v2032, %v3171
    %v3180 = vadd.f32 %v2034, %v3172
    %v3181 = vadd.f32 %v2109, %v3173
    %v3182 = vadd.f32 %v2111, %v3174
    %v3183 = vxor.u32 %v3179, 2147483648
    %v3184 = vmul.f32 %v3183, 1.442695
    %v3185 = vpow.pop %v3184
    %v3186 = vadd.f32 %v3185, 1.0
    %v3187 = vrcp.pop %v3186
    %v3188 = vmul.f32 1.0, %v3187
    %v3189 = vxor.u32 %v3180, 2147483648
    %v3190 = vmul.f32 %v3189, 1.442695
    %v3191 = vpow.pop %v3190
    %v3192 = vadd.f32 %v3191, 1.0
    %v3193 = vrcp.pop %v3192
    %v3194 = vmul.f32 1.0, %v3193
    %v3195 = vtanh.pop %v3181
    %v3196 = vxor.u32 %v3182, 2147483648
    %v3197 = vmul.f32 %v3196, 1.442695
    %v3198 = vpow.pop %v3197
    %v3199 = vadd.f32 %v3198, 1.0
    %v3200 = vrcp.pop %v3199
    %v3201 = vmul.f32 1.0, %v3200
    %v3203 = vrot.slane %v3021, 6
    %v3205 = vmul.f32 %v3194, %v3203
    %v3206 = vmul.f32 %v3188, %v3195
    %v3207 = vadd.f32 %v3205, %v3206
    %v3208 = vtanh.pop %v3207
    %v3209 = vmul.f32 %v3201, %v3208
    %3210 = vst [vmem:[#allocation3 + $0x8] sm:$0xc] %v3209
    %v3212 = vrot.slane %v3209, 2
    %3214 = vmatprep.subr.mxu0 %v1874
    %3215 = vmatpush1.msra.mxu0 %v1873
    %3216 = vmatprep.subr.mxu0 %v1878
    %3217 = vmatpush1.msra.mxu0 %v1877
    %3218 = vmatprep.subr.mxu0 %v1882
    %3219 = vmatpush1.msra.mxu0 %v1881
    %3220 = vmatprep.subr.mxu0 %v1886
    %3221 = vmatpush1.msra.mxu0 %v1885
    %3222 = vmatprep.subr.mxu0 %v1890
    %3223 = vmatpush1.msra.mxu0 %v1889
    %3224 = vmatprep.subr.mxu0 %v1894
    %3225 = vmatpush1.msra.mxu0 %v1893
    %3226 = vmatprep.subr.mxu0 %v1898
    %3227 = vmatpush1.msra.mxu0 %v1897
    %3228 = vmatprep.subr.mxu0 %v1902
    %3229 = vmatpush1.msra.mxu0 %v1901
    %3230 = vmatprep.subr.mxu0 %v1906
    %3231 = vmatpush1.msra.mxu0 %v1905
    %3232 = vmatprep.subr.mxu0 %v1910
    %3233 = vmatpush1.msra.mxu0 %v1909
    %3234 = vmatprep.subr.mxu0 %v1914
    %3235 = vmatpush1.msra.mxu0 %v1913
    %3236 = vmatprep.subr.mxu0 %v1918
    %3237 = vmatpush1.msra.mxu0 %v1917
    %3238 = vmatprep.subr.mxu0 %v1922
    %3239 = vmatpush1.msra.mxu0 %v1921
    %3240 = vmatprep.subr.mxu0 %v1926
    %3241 = vmatpush1.msra.mxu0 %v1925
    %3242 = vmatprep.subr.mxu0 %v1930
    %3243 = vmatpush1.msra.mxu0 %v1929
    %3244 = vmatprep.subr.mxu0 %v1934
    %3245 = vmatpush1.msra.mxu0 %v1933
    %3246 = vmatprep.subr.mxu0 0.0
    %3247 = vmatpush1.msra.mxu0 0.0
    %3248 = vmatprep.subr.mxu0 0.0
    %3249 = vmatpush1.msra.mxu0 0.0
    %3250 = vmatprep.subr.mxu0 0.0
    %3251 = vmatpush1.msra.mxu0 0.0
    %3252 = vmatprep.subr.mxu0 0.0
    %3253 = vmatpush1.msra.mxu0 0.0
    %3254 = vmatprep.subr.mxu0 0.0
    %3255 = vmatpush1.msra.mxu0 0.0
    %3256 = vmatprep.subr.mxu0 0.0
    %3257 = vmatpush1.msra.mxu0 0.0
    %3258 = vmatprep.subr.mxu0 0.0
    %3259 = vmatpush1.msra.mxu0 0.0
    %3260 = vmatprep.subr.mxu0 0.0
    %3261 = vmatpush1.msra.mxu0 0.0
    %3262 = vmatprep.subr.mxu0 0.0
    %3263 = vmatpush1.msra.mxu0 0.0
    %3264 = vmatprep.subr.mxu0 0.0
    %3265 = vmatpush1.msra.mxu0 0.0
    %3266 = vmatprep.subr.mxu0 0.0
    %3267 = vmatpush1.msra.mxu0 0.0
    %3268 = vmatprep.subr.mxu0 0.0
    %3269 = vmatpush1.msra.mxu0 0.0
    %3270 = vmatprep.subr.mxu0 0.0
    %3271 = vmatpush1.msra.mxu0 0.0
    %3272 = vmatprep.subr.mxu0 0.0
    %3273 = vmatpush1.msra.mxu0 0.0
    %3274 = vmatprep.subr.mxu0 0.0
    %3275 = vmatpush1.msra.mxu0 0.0
    %3276 = vmatprep.subr.mxu0 0.0
    %3277 = vmatpush1.msra.mxu0 0.0
    %3278 = vmatprep.mubr.f32.mxu0 0.0
    %3279 = vmatmul.mubr.f32.gmra.mrb[0].mxu0 %v3212
    %v3280 = vpop.f32.mrb[0].mxu0
    %v3281 = vadd.f32 0.0, %v3280
    %v3282 = vpop.f32.mrb[0].mxu0
    %v3283 = vadd.f32 0.0, %v3282
    %3284 = vdwg.mxu0
    %3285 = vmatprep.subr.mxu0 %v1876
    %3286 = vmatpush1.msra.mxu0 %v1875
    %3287 = vmatprep.subr.mxu0 %v1880
    %3288 = vmatpush1.msra.mxu0 %v1879
    %3289 = vmatprep.subr.mxu0 %v1884
    %3290 = vmatpush1.msra.mxu0 %v1883
    %3291 = vmatprep.subr.mxu0 %v1888
    %3292 = vmatpush1.msra.mxu0 %v1887
    %3293 = vmatprep.subr.mxu0 %v1892
    %3294 = vmatpush1.msra.mxu0 %v1891
    %3295 = vmatprep.subr.mxu0 %v1896
    %3296 = vmatpush1.msra.mxu0 %v1895
    %3297 = vmatprep.subr.mxu0 %v1900
    %3298 = vmatpush1.msra.mxu0 %v1899
    %3299 = vmatprep.subr.mxu0 %v1904
    %3300 = vmatpush1.msra.mxu0 %v1903
    %3301 = vmatprep.subr.mxu0 %v1908
    %3302 = vmatpush1.msra.mxu0 %v1907
    %3303 = vmatprep.subr.mxu0 %v1912
    %3304 = vmatpush1.msra.mxu0 %v1911
    %3305 = vmatprep.subr.mxu0 %v1916
    %3306 = vmatpush1.msra.mxu0 %v1915
    %3307 = vmatprep.subr.mxu0 %v1920
    %3308 = vmatpush1.msra.mxu0 %v1919
    %3309 = vmatprep.subr.mxu0 %v1924
    %3310 = vmatpush1.msra.mxu0 %v1923
    %3311 = vmatprep.subr.mxu0 %v1928
    %3312 = vmatpush1.msra.mxu0 %v1927
    %3313 = vmatprep.subr.mxu0 %v1932
    %3314 = vmatpush1.msra.mxu0 %v1931
    %3315 = vmatprep.subr.mxu0 %v1936
    %3316 = vmatpush1.msra.mxu0 %v1935
    %3317 = vmatprep.subr.mxu0 0.0
    %3318 = vmatpush1.msra.mxu0 0.0
    %3319 = vmatprep.subr.mxu0 0.0
    %3320 = vmatpush1.msra.mxu0 0.0
    %3321 = vmatprep.subr.mxu0 0.0
    %3322 = vmatpush1.msra.mxu0 0.0
    %3323 = vmatprep.subr.mxu0 0.0
    %3324 = vmatpush1.msra.mxu0 0.0
    %3325 = vmatprep.subr.mxu0 0.0
    %3326 = vmatpush1.msra.mxu0 0.0
    %3327 = vmatprep.subr.mxu0 0.0
    %3328 = vmatpush1.msra.mxu0 0.0
    %3329 = vmatprep.subr.mxu0 0.0
    %3330 = vmatpush1.msra.mxu0 0.0
    %3331 = vmatprep.subr.mxu0 0.0
    %3332 = vmatpush1.msra.mxu0 0.0
    %3333 = vmatprep.subr.mxu0 0.0
    %3334 = vmatpush1.msra.mxu0 0.0
    %3335 = vmatprep.subr.mxu0 0.0
    %3336 = vmatpush1.msra.mxu0 0.0
    %3337 = vmatprep.subr.mxu0 0.0
    %3338 = vmatpush1.msra.mxu0 0.0
    %3339 = vmatprep.subr.mxu0 0.0
    %3340 = vmatpush1.msra.mxu0 0.0
    %3341 = vmatprep.subr.mxu0 0.0
    %3342 = vmatpush1.msra.mxu0 0.0
    %3343 = vmatprep.subr.mxu0 0.0
    %3344 = vmatpush1.msra.mxu0 0.0
    %3345 = vmatprep.subr.mxu0 0.0
    %3346 = vmatpush1.msra.mxu0 0.0
    %3347 = vmatprep.subr.mxu0 0.0
    %3348 = vmatpush1.msra.mxu0 0.0
    %3349 = vmatprep.mubr.f32.mxu0 0.0
    %3350 = vmatmul.mubr.f32.gmra.mrb[0].mxu0 %v3212
    %v3351 = vpop.f32.mrb[0].mxu0
    %v3352 = vadd.f32 0.0, %v3351
    %v3353 = vpop.f32.mrb[0].mxu0
    %v3354 = vadd.f32 0.0, %v3353
    %3355 = vdwg.mxu0
    %v3360 = vrot.slane %v3281, 4
    %v3361 = vrot.slane %v3283, 4
    %v3362 = vrot.slane %v3352, 4
    %v3363 = vrot.slane %v3354, 4
    %v3368 = vadd.f32 %v2032, %v3360
    %v3369 = vadd.f32 %v2034, %v3361
    %v3370 = vadd.f32 %v2109, %v3362
    %v3371 = vadd.f32 %v2111, %v3363
    %v3372 = vxor.u32 %v3368, 2147483648
    %v3373 = vmul.f32 %v3372, 1.442695
    %v3374 = vpow.pop %v3373
    %v3375 = vadd.f32 %v3374, 1.0
    %v3376 = vrcp.pop %v3375
    %v3377 = vmul.f32 1.0, %v3376
    %v3378 = vxor.u32 %v3369, 2147483648
    %v3379 = vmul.f32 %v3378, 1.442695
    %v3380 = vpow.pop %v3379
    %v3381 = vadd.f32 %v3380, 1.0
    %v3382 = vrcp.pop %v3381
    %v3383 = vmul.f32 1.0, %v3382
    %v3384 = vtanh.pop %v3370
    %v3385 = vxor.u32 %v3371, 2147483648
    %v3386 = vmul.f32 %v3385, 1.442695
    %v3387 = vpow.pop %v3386
    %v3388 = vadd.f32 %v3387, 1.0
    %v3389 = vrcp.pop %v3388
    %v3390 = vmul.f32 1.0, %v3389
    %v3392 = vrot.slane %v3207, 6
    %v3394 = vmul.f32 %v3383, %v3392
    %v3395 = vmul.f32 %v3377, %v3384
    %v3396 = vadd.f32 %v3394, %v3395
    %v3397 = vtanh.pop %v3396
    %v3398 = vmul.f32 %v3390, %v3397
    %3399 = vst [vmem:[#allocation3 + $0x8] sm:$0x30] %v3398
    %v3401 = vrot.slane %v3398, 4
    %3403 = vmatprep.subr.mxu0 %v1874
    %3404 = vmatpush1.msra.mxu0 %v1873
    %3405 = vmatprep.subr.mxu0 %v1878
    %3406 = vmatpush1.msra.mxu0 %v1877
    %3407 = vmatprep.subr.mxu0 %v1882
    %3408 = vmatpush1.msra.mxu0 %v1881
    %3409 = vmatprep.subr.mxu0 %v1886
    %3410 = vmatpush1.msra.mxu0 %v1885
    %3411 = vmatprep.subr.mxu0 %v1890
    %3412 = vmatpush1.msra.mxu0 %v1889
    %3413 = vmatprep.subr.mxu0 %v1894
    %3414 = vmatpush1.msra.mxu0 %v1893
    %3415 = vmatprep.subr.mxu0 %v1898
    %3416 = vmatpush1.msra.mxu0 %v1897
    %3417 = vmatprep.subr.mxu0 %v1902
    %3418 = vmatpush1.msra.mxu0 %v1901
    %3419 = vmatprep.subr.mxu0 %v1906
    %3420 = vmatpush1.msra.mxu0 %v1905
    %3421 = vmatprep.subr.mxu0 %v1910
    %3422 = vmatpush1.msra.mxu0 %v1909
    %3423 = vmatprep.subr.mxu0 %v1914
    %3424 = vmatpush1.msra.mxu0 %v1913
    %3425 = vmatprep.subr.mxu0 %v1918
    %3426 = vmatpush1.msra.mxu0 %v1917
    %3427 = vmatprep.subr.mxu0 %v1922
    %3428 = vmatpush1.msra.mxu0 %v1921
    %3429 = vmatprep.subr.mxu0 %v1926
    %3430 = vmatpush1.msra.mxu0 %v1925
    %3431 = vmatprep.subr.mxu0 %v1930
    %3432 = vmatpush1.msra.mxu0 %v1929
    %3433 = vmatprep.subr.mxu0 %v1934
    %3434 = vmatpush1.msra.mxu0 %v1933
    %3435 = vmatprep.subr.mxu0 0.0
    %3436 = vmatpush1.msra.mxu0 0.0
    %3437 = vmatprep.subr.mxu0 0.0
    %3438 = vmatpush1.msra.mxu0 0.0
    %3439 = vmatprep.subr.mxu0 0.0
    %3440 = vmatpush1.msra.mxu0 0.0
    %3441 = vmatprep.subr.mxu0 0.0
    %3442 = vmatpush1.msra.mxu0 0.0
    %3443 = vmatprep.subr.mxu0 0.0
    %3444 = vmatpush1.msra.mxu0 0.0
    %3445 = vmatprep.subr.mxu0 0.0
    %3446 = vmatpush1.msra.mxu0 0.0
    %3447 = vmatprep.subr.mxu0 0.0
    %3448 = vmatpush1.msra.mxu0 0.0
    %3449 = vmatprep.subr.mxu0 0.0
    %3450 = vmatpush1.msra.mxu0 0.0
    %3451 = vmatprep.subr.mxu0 0.0
    %3452 = vmatpush1.msra.mxu0 0.0
    %3453 = vmatprep.subr.mxu0 0.0
    %3454 = vmatpush1.msra.mxu0 0.0
    %3455 = vmatprep.subr.mxu0 0.0
    %3456 = vmatpush1.msra.mxu0 0.0
    %3457 = vmatprep.subr.mxu0 0.0
    %3458 = vmatpush1.msra.mxu0 0.0
    %3459 = vmatprep.subr.mxu0 0.0
    %3460 = vmatpush1.msra.mxu0 0.0
    %3461 = vmatprep.subr.mxu0 0.0
    %3462 = vmatpush1.msra.mxu0 0.0
    %3463 = vmatprep.subr.mxu0 0.0
    %3464 = vmatpush1.msra.mxu0 0.0
    %3465 = vmatprep.subr.mxu0 0.0
    %3466 = vmatpush1.msra.mxu0 0.0
    %3467 = vmatprep.mubr.f32.mxu0 0.0
    %3468 = vmatmul.mubr.f32.gmra.mrb[0].mxu0 %v3401
    %v3469 = vpop.f32.mrb[0].mxu0
    %v3470 = vadd.f32 0.0, %v3469
    %v3471 = vpop.f32.mrb[0].mxu0
    %v3472 = vadd.f32 0.0, %v3471
    %3473 = vdwg.mxu0
    %3474 = vmatprep.subr.mxu0 %v1876
    %3475 = vmatpush1.msra.mxu0 %v1875
    %3476 = vmatprep.subr.mxu0 %v1880
    %3477 = vmatpush1.msra.mxu0 %v1879
    %3478 = vmatprep.subr.mxu0 %v1884
    %3479 = vmatpush1.msra.mxu0 %v1883
    %3480 = vmatprep.subr.mxu0 %v1888
    %3481 = vmatpush1.msra.mxu0 %v1887
    %3482 = vmatprep.subr.mxu0 %v1892
    %3483 = vmatpush1.msra.mxu0 %v1891
    %3484 = vmatprep.subr.mxu0 %v1896
    %3485 = vmatpush1.msra.mxu0 %v1895
    %3486 = vmatprep.subr.mxu0 %v1900
    %3487 = vmatpush1.msra.mxu0 %v1899
    %3488 = vmatprep.subr.mxu0 %v1904
    %3489 = vmatpush1.msra.mxu0 %v1903
    %3490 = vmatprep.subr.mxu0 %v1908
    %3491 = vmatpush1.msra.mxu0 %v1907
    %3492 = vmatprep.subr.mxu0 %v1912
    %3493 = vmatpush1.msra.mxu0 %v1911
    %3494 = vmatprep.subr.mxu0 %v1916
    %3495 = vmatpush1.msra.mxu0 %v1915
    %3496 = vmatprep.subr.mxu0 %v1920
    %3497 = vmatpush1.msra.mxu0 %v1919
    %3498 = vmatprep.subr.mxu0 %v1924
    %3499 = vmatpush1.msra.mxu0 %v1923
    %3500 = vmatprep.subr.mxu0 %v1928
    %3501 = vmatpush1.msra.mxu0 %v1927
    %3502 = vmatprep.subr.mxu0 %v1932
    %3503 = vmatpush1.msra.mxu0 %v1931
    %3504 = vmatprep.subr.mxu0 %v1936
    %3505 = vmatpush1.msra.mxu0 %v1935
    %3506 = vmatprep.subr.mxu0 0.0
    %3507 = vmatpush1.msra.mxu0 0.0
    %3508 = vmatprep.subr.mxu0 0.0
    %3509 = vmatpush1.msra.mxu0 0.0
    %3510 = vmatprep.subr.mxu0 0.0
    %3511 = vmatpush1.msra.mxu0 0.0
    %3512 = vmatprep.subr.mxu0 0.0
    %3513 = vmatpush1.msra.mxu0 0.0
    %3514 = vmatprep.subr.mxu0 0.0
    %3515 = vmatpush1.msra.mxu0 0.0
    %3516 = vmatprep.subr.mxu0 0.0
    %3517 = vmatpush1.msra.mxu0 0.0
    %3518 = vmatprep.subr.mxu0 0.0
    %3519 = vmatpush1.msra.mxu0 0.0
    %3520 = vmatprep.subr.mxu0 0.0
    %3521 = vmatpush1.msra.mxu0 0.0
    %3522 = vmatprep.subr.mxu0 0.0
    %3523 = vmatpush1.msra.mxu0 0.0
    %3524 = vmatprep.subr.mxu0 0.0
    %3525 = vmatpush1.msra.mxu0 0.0
    %3526 = vmatprep.subr.mxu0 0.0
    %3527 = vmatpush1.msra.mxu0 0.0
    %3528 = vmatprep.subr.mxu0 0.0
    %3529 = vmatpush1.msra.mxu0 0.0
    %3530 = vmatprep.subr.mxu0 0.0
    %3531 = vmatpush1.msra.mxu0 0.0
    %3532 = vmatprep.subr.mxu0 0.0
    %3533 = vmatpush1.msra.mxu0 0.0
    %3534 = vmatprep.subr.mxu0 0.0
    %3535 = vmatpush1.msra.mxu0 0.0
    %3536 = vmatprep.subr.mxu0 0.0
    %3537 = vmatpush1.msra.mxu0 0.0
    %3538 = vmatprep.mubr.f32.mxu0 0.0
    %3539 = vmatmul.mubr.f32.gmra.mrb[0].mxu0 %v3401
    %v3540 = vpop.f32.mrb[0].mxu0
    %v3541 = vadd.f32 0.0, %v3540
    %v3542 = vpop.f32.mrb[0].mxu0
    %v3543 = vadd.f32 0.0, %v3542
    %3544 = vdwg.mxu0
    %v3549 = vrot.slane %v3470, 2
    %v3550 = vrot.slane %v3472, 2
    %v3551 = vrot.slane %v3541, 2
    %v3552 = vrot.slane %v3543, 2
    %v3557 = vadd.f32 %v2032, %v3549
    %v3558 = vadd.f32 %v2034, %v3550
    %v3559 = vadd.f32 %v2109, %v3551
    %v3560 = vadd.f32 %v2111, %v3552
    %v3561 = vxor.u32 %v3557, 2147483648
    %v3562 = vmul.f32 %v3561, 1.442695
    %v3563 = vpow.pop %v3562
    %v3564 = vadd.f32 %v3563, 1.0
    %v3565 = vrcp.pop %v3564
    %v3566 = vmul.f32 1.0, %v3565
    %v3567 = vxor.u32 %v3558, 2147483648
    %v3568 = vmul.f32 %v3567, 1.442695
    %v3569 = vpow.pop %v3568
    %v3570 = vadd.f32 %v3569, 1.0
    %v3571 = vrcp.pop %v3570
    %v3572 = vmul.f32 1.0, %v3571
    %v3573 = vtanh.pop %v3559
    %v3574 = vxor.u32 %v3560, 2147483648
    %v3575 = vmul.f32 %v3574, 1.442695
    %v3576 = vpow.pop %v3575
    %v3577 = vadd.f32 %v3576, 1.0
    %v3578 = vrcp.pop %v3577
    %v3579 = vmul.f32 1.0, %v3578
    %v3581 = vrot.slane %v3396, 6
    %v3583 = vmul.f32 %v3572, %v3581
    %v3584 = vmul.f32 %v3566, %v3573
    %v3585 = vadd.f32 %v3583, %v3584
    %v3586 = vtanh.pop %v3585
    %v3587 = vmul.f32 %v3579, %v3586
    %3588 = vst [vmem:[#allocation3 + $0x8] sm:$0xc0] %v3587
    %v3589 = vld [vmem:[#allocation3] sm:$0xff]
    %v3590 = vld [vmem:[#allocation3 + $0x8] sm:$0xff]
    %v3591 = vld [vmem:[%s7] sm:$0xff]
    %v3592 = vld [vmem:[%s7 + $0x8] sm:$0xff]
    %v3593 = vld [vmem:[%s7 + $0x10] sm:$0xff]
    %v3594 = vld [vmem:[%s7 + $0x18] sm:$0xff]
    %v3595 = vld [vmem:[%s7 + $0x20] sm:$0xff]
    %v3596 = vld [vmem:[%s7 + $0x28] sm:$0xff]
    %v3597 = vld [vmem:[%s7 + $0x30] sm:$0xff]
    %v3598 = vld [vmem:[%s7 + $0x38] sm:$0xff]
    %v3599 = vld [vmem:[%s7 + $0x40] sm:$0xff]
    %v3600 = vld [vmem:[%s7 + $0x48] sm:$0xff]
    %v3601 = vld [vmem:[%s7 + $0x50] sm:$0xff]
    %v3602 = vld [vmem:[%s7 + $0x58] sm:$0xff]
    %v3603 = vld [vmem:[%s7 + $0x60] sm:$0xff]
    %v3604 = vld [vmem:[%s7 + $0x68] sm:$0xff]
    %v3605 = vld [vmem:[%s7 + $0x70] sm:$0xff]
    %v3606 = vld [vmem:[%s7 + $0x78] sm:$0xff]
    %v3607 = vld [vmem:[%s8] sm:$0x1]
    %v3609 = vlaneseq
    %v3610 = vshrl.u32 %v3609, 7
    %v3611 = vsub.s32 0, %v3610
    %v3612 = vrot.slane %v3607, %v3611
    %3614 = vmatprep.subr.mxu0 0.0
    %3615 = vmatpush1.msra.mxu0 %v3591
    %3616 = vmatprep.subr.mxu0 0.0
    %3617 = vmatpush1.msra.mxu0 %v3592
    %3618 = vmatprep.subr.mxu0 0.0
    %3619 = vmatpush1.msra.mxu0 %v3593
    %3620 = vmatprep.subr.mxu0 0.0
    %3621 = vmatpush1.msra.mxu0 %v3594
    %3622 = vmatprep.subr.mxu0 0.0
    %3623 = vmatpush1.msra.mxu0 %v3595
    %3624 = vmatprep.subr.mxu0 0.0
    %3625 = vmatpush1.msra.mxu0 %v3596
    %3626 = vmatprep.subr.mxu0 0.0
    %3627 = vmatpush1.msra.mxu0 %v3597
    %3628 = vmatprep.subr.mxu0 0.0
    %3629 = vmatpush1.msra.mxu0 %v3598
    %3630 = vmatprep.subr.mxu0 0.0
    %3631 = vmatpush1.msra.mxu0 %v3599
    %3632 = vmatprep.subr.mxu0 0.0
    %3633 = vmatpush1.msra.mxu0 %v3600
    %3634 = vmatprep.subr.mxu0 0.0
    %3635 = vmatpush1.msra.mxu0 %v3601
    %3636 = vmatprep.subr.mxu0 0.0
    %3637 = vmatpush1.msra.mxu0 %v3602
    %3638 = vmatprep.subr.mxu0 0.0
    %3639 = vmatpush1.msra.mxu0 %v3603
    %3640 = vmatprep.subr.mxu0 0.0
    %3641 = vmatpush1.msra.mxu0 %v3604
    %3642 = vmatprep.subr.mxu0 0.0
    %3643 = vmatpush1.msra.mxu0 %v3605
    %3644 = vmatprep.subr.mxu0 0.0
    %3645 = vmatpush1.msra.mxu0 %v3606
    %3646 = vmatprep.subr.mxu0 0.0
    %3647 = vmatpush1.msra.mxu0 0.0
    %3648 = vmatprep.subr.mxu0 0.0
    %3649 = vmatpush1.msra.mxu0 0.0
    %3650 = vmatprep.subr.mxu0 0.0
    %3651 = vmatpush1.msra.mxu0 0.0
    %3652 = vmatprep.subr.mxu0 0.0
    %3653 = vmatpush1.msra.mxu0 0.0
    %3654 = vmatprep.subr.mxu0 0.0
    %3655 = vmatpush1.msra.mxu0 0.0
    %3656 = vmatprep.subr.mxu0 0.0
    %3657 = vmatpush1.msra.mxu0 0.0
    %3658 = vmatprep.subr.mxu0 0.0
    %3659 = vmatpush1.msra.mxu0 0.0
    %3660 = vmatprep.subr.mxu0 0.0
    %3661 = vmatpush1.msra.mxu0 0.0
    %3662 = vmatprep.subr.mxu0 0.0
    %3663 = vmatpush1.msra.mxu0 0.0
    %3664 = vmatprep.subr.mxu0 0.0
    %3665 = vmatpush1.msra.mxu0 0.0
    %3666 = vmatprep.subr.mxu0 0.0
    %3667 = vmatpush1.msra.mxu0 0.0
    %3668 = vmatprep.subr.mxu0 0.0
    %3669 = vmatpush1.msra.mxu0 0.0
    %3670 = vmatprep.subr.mxu0 0.0
    %3671 = vmatpush1.msra.mxu0 0.0
    %3672 = vmatprep.subr.mxu0 0.0
    %3673 = vmatpush1.msra.mxu0 0.0
    %3674 = vmatprep.subr.mxu0 0.0
    %3675 = vmatpush1.msra.mxu0 0.0
    %3676 = vmatprep.subr.mxu0 0.0
    %3677 = vmatpush1.msra.mxu0 0.0
    %3678 = vmatprep.mubr.f32.mxu0 0.0
    %3679 = vmatmul.mubr.f32.gmra.mrb[0].mxu0 %v3589
    %v3680 = vpop.f32.mrb[0].mxu0
    %v3681 = vadd.f32 %v3612, %v3680
    %v3682 = vpop.f32.mrb[0].mxu0
    %3683 = vmatprep.mubr.f32.mxu0 0.0
    %3684 = vmatmul.mubr.f32.gmra.mrb[0].mxu0 %v3590
    %v3685 = vpop.f32.mrb[0].mxu0
    %v3686 = vadd.f32 %v3612, %v3685
    %v3687 = vpop.f32.mrb[0].mxu0
    %3688 = vdwg.mxu0
    %vm3689 = vcmask 64512
    %3690 = vst.msk [vmem:[#allocation10] sm:$0xff] %vm3689, %v3681
    %3691 = vst.msk [vmem:[#allocation10 + $0x8] sm:$0xff] %vm3689, %v3686
    // Predicated region
    $region50: #{lstm_forward.1} parent=1 // pred_check
      _
    $region51: #{lstm_forward.1} parent=1 // pred_check_branch
      %3693 = sbr.rel (0) target = $region53
    $region52: #{lstm_forward.1} parent=1 // pred_region
      %s3695 = ssub.s32 256, 256
      %3696 = vsyncadd [#allocation6], %s3695
      %s3697 = sshll.u32 [#allocation10], 4
      %s3698 = int_to_ptr.vmem [resolvable:$true] %s3697
      %3703 = dma.vmem_to_hbm [thread:$0]  %s3698, 256, %s9, [#allocation6], 128, 128, 8
    $region53: #{lstm_forward.1} parent=1 // pred_fallthru
      _
    // Predicated region
    $region54: #{lstm_forward.1} parent=1 // pred_check
      _
    $region55: #{lstm_forward.1} parent=1 // pred_check_branch
      %3705 = sbr.rel (0) target = $region57
    $region56: #{lstm_forward.1} parent=1 // pred_region
      %3706 = dma.done [#allocation6], 256
    $region57: #{lstm_forward.1} parent=1 // pred_fallthru
      _
    %3707 = vsyncpa [#allocation5], 1
    %3708 = vsyncpa [#allocation8], 1
    %3709 = vsyncpa [#allocation6], 1

</llo_original>
